<compile_context>
chip_gen: v6e
topology: v6e:2x2x1
jax: 0.10.0
libtpu: 0.0.40
codegen_flags: <defaults>
</compile_context>

<pallas_src>
import functools
import math

import jax
import jax.numpy as jnp
from jax.experimental import pallas as pl
from jax.experimental.pallas import tpu as pltpu

BN_EPS = 1e-5
LANE = 128
SUBLANE = 8
KSIZE = 3


def _round_up(x, m):
    return (x + m - 1) // m * m


# ----------------------------------------------------------------------------
# Fused BasicBlock kernel (one grid step = B_blk images)
# ----------------------------------------------------------------------------
def _basic_block_kernel(*refs, stride, Ho, Wo, B, has_sc_conv):
    if has_sc_conv:
        (xr_ref, w1_ref, b1_ref, w2_ref, b2_ref, wsc_ref, bsc_ref,
         o_ref, hpad_ref, cols1_ref, cols2_ref) = refs
    else:
        (xr_ref, xid_ref, w1_ref, b1_ref, w2_ref, b2_ref,
         o_ref, hpad_ref, cols1_ref, cols2_ref) = refs

    s = stride
    rows = B * Ho * Wo                      # matmul row count (batch folded in)
    cin = xr_ref.shape[-1]                  # lane-padded
    cmid = hpad_ref.shape[-1]
    cout = o_ref.shape[-1]

    # ---- conv1 (3x3, stride s, pad 1) + folded-BN bias + ReLU --------------
    # Tap (kh, kw) of a stride-s conv reads phase (kh%s, kw%s) of the
    # space-to-depth input at unit-stride block offset (kh//s, kw//s).
    # Taps are concatenated along lanes -> one long-K matmul (K = 9*cin).
    for kh in range(KSIZE):
        for kw in range(KSIZE):
            t = kh * KSIZE + kw
            phase = (kh % s) * s + (kw % s)
            dh, dw = kh // s, kw // s
            cols1_ref[:, :, :, t * cin:(t + 1) * cin] = (
                xr_ref[:, phase, dh:dh + Ho, dw:dw + Wo, :])
    acc1 = jnp.dot(cols1_ref[...].reshape(rows, KSIZE * KSIZE * cin),
                   w1_ref[...], preferred_element_type=jnp.float32)
    h = jnp.maximum(acc1 + b1_ref[...], 0.0)

    # ---- stage h (+1-pixel zero halo) in VMEM scratch -----------------------
    # Only the halo strips are zeroed; the interior is fully overwritten.
    # Columns beyond Wo+1 (sublane padding) are never read, so left untouched.
    wpad = hpad_ref.shape[2]
    zrow = jnp.zeros((B, 1, wpad, cmid), hpad_ref.dtype)
    zcol = jnp.zeros((B, Ho + 2, 1, cmid), hpad_ref.dtype)
    hpad_ref[:, 0:1, :, :] = zrow
    hpad_ref[:, Ho + 1:Ho + 2, :, :] = zrow
    hpad_ref[:, :, 0:1, :] = zcol
    hpad_ref[:, :, Wo + 1:Wo + 2, :] = zcol
    hpad_ref[:, 1:1 + Ho, 1:1 + Wo, :] = (
        h.reshape(B, Ho, Wo, cmid).astype(hpad_ref.dtype))

    # ---- conv2 (3x3, stride 1, pad 1) + folded-BN bias -----------------------
    for kh in range(KSIZE):
        for kw in range(KSIZE):
            t = kh * KSIZE + kw
            cols2_ref[:, :, :, t * cmid:(t + 1) * cmid] = (
                hpad_ref[:, kh:kh + Ho, kw:kw + Wo, :])
    acc2 = jnp.dot(cols2_ref[...].reshape(rows, KSIZE * KSIZE * cmid),
                   w2_ref[...], preferred_element_type=jnp.float32)
    acc2 = acc2 + b2_ref[...]

    # ---- shortcut ------------------------------------------------------------
    if has_sc_conv:
        # Original-image pixel x[s*ho, s*wo, :] sits (inside the pad=1 phase
        # decomposition) at phase (1%s, 1%s), block offset (1//s, 1//s).
        p_sc = (1 % s) * s + (1 % s)
        d_sc = 1 // s
        x_sc = xr_ref[:, p_sc, d_sc:d_sc + Ho, d_sc:d_sc + Wo, :].reshape(rows, cin)
        sc = (jnp.dot(x_sc, wsc_ref[...], preferred_element_type=jnp.float32)
              + bsc_ref[...])
    else:
        sc = xid_ref[...].reshape(rows, cout)          # f32 identity, no bf16 loss

    out = jnp.maximum(acc2 + sc, 0.0)
    o_ref[...] = out.reshape(B, Ho, Wo, cout).astype(o_ref.dtype)


# ----------------------------------------------------------------------------
# Wrapper-side glue (pure layout plumbing, no data expansion)
# ----------------------------------------------------------------------------
def _phase_decompose(x_nhwc, *, ksize, stride, pad, c_pad, dtype):
    """Zero-pad + space-to-depth so strided conv taps become unit-stride slices.

    Returns xr of shape [N, stride*stride, Hph, Wph, c_pad] with
    xr[n, ph*stride + pw, j, i, c] == x_padded[n, stride*j + ph, stride*i + pw, c].
    Wph is rounded up to a multiple of 8 (sublane alignment)."""
    N, H, W, C = x_nhwc.shape
    s = stride
    Ho = (H + 2 * pad - ksize) // s + 1
    Wo = (W + 2 * pad - ksize) // s + 1
    Hph = Ho + (ksize - 1) // s
    Wph = _round_up(Wo + (ksize - 1) // s, SUBLANE)
    pad_h_hi = s * Hph - (H + pad)
    pad_w_hi = s * Wph - (W + pad)
    assert pad_h_hi >= 0 and pad_w_hi >= 0
    xp = jnp.pad(x_nhwc, ((0, 0), (pad, pad_h_hi), (pad, pad_w_hi),
                          (0, c_pad - C)))
    xr = xp.reshape(N, Hph, s, Wph, s, c_pad)
    xr = xr.transpose(0, 2, 4, 1, 3, 5).reshape(N, s * s, Hph, Wph, c_pad)
    return xr.astype(dtype), Ho, Wo, Hph, Wph


def _fold_bn(w_hwio, bn, cin_p, cout_p):
    """Fold eval-mode BN into the conv weight.

    Returns (w[K*K*cin_p, cout_p] bf16 with BN scale folded in — row index is
    tap-major then input channel, matching the im2col lane layout —
    and bias[1, cout_p] f32 = beta - mean*scale)."""
    scale = bn["gamma"] / jnp.sqrt(bn["var"] + BN_EPS)
    bias = bn["beta"] - bn["mean"] * scale
    kh, kw, ci, co = w_hwio.shape
    wf = w_hwio * scale[None, None, None, :]
    wf = jnp.pad(wf, ((0, 0), (0, 0), (0, cin_p - ci), (0, cout_p - co)))
    wf = wf.reshape(kh * kw * cin_p, cout_p).astype(jnp.bfloat16)
    bf = jnp.pad(bias, (0, cout_p - co)).reshape(1, cout_p).astype(jnp.float32)
    return wf, bf


def _pick_batch_block(N, rows_per_image):
    """Images per grid step: fill MXU rows (target >=256) without starving the
    second v7x TensorCore (keep >=2 grid steps once one step already has >=128
    rows) and without blowing up VMEM (cap ~2048 rows)."""
    best = 1
    for d in range(2, N + 1):
        if N % d:
            continue
        if d * rows_per_image > 2048:
            break
        if best * rows_per_image >= 256:
            break
        if N // d < 2 and best * rows_per_image >= 128:
            break
        best = d
    return best


def basic_block_forward(x_nchw, params, *, stride):
    """BasicBlock forward.  `stride` MUST be a static Python int (not traced)."""
    x = jnp.transpose(x_nchw, (0, 2, 3, 1)).astype(jnp.float32)    # NCHW -> NHWC
    N, H, W, cin = x.shape
    cout = params["w1"].shape[-1]
    has_sc_conv = "wsc" in params
    if not has_sc_conv:
        assert stride == 1 and cin == cout

    # Lane-dense channel padding (full MXU columns, unmasked stores).
    cin_p = _round_up(max(cin, LANE), LANE)
    cout_p = _round_up(max(cout, LANE), LANE)
    cmid_p = cout_p

    xr, Ho, Wo, Hph, Wph = _phase_decompose(
        x, ksize=KSIZE, stride=stride, pad=1, c_pad=cin_p, dtype=jnp.bfloat16)

    w1, b1 = _fold_bn(params["w1"], params["bn1"], cin_p, cmid_p)
    w2, b2 = _fold_bn(params["w2"], params["bn2"], cmid_p, cout_p)

    B_blk = _pick_batch_block(N, Ho * Wo)
    assert N % B_blk == 0
    grid = (N // B_blk,)

    # Constant-index weights/biases: single-buffered (no wasted 2x VMEM).
    wspec = functools.partial(pl.BlockSpec, pipeline_mode=pl.Buffered(1))

    args = [xr]
    in_specs = [pl.BlockSpec((B_blk, stride * stride, Hph, Wph, cin_p),
                             lambda n: (n, 0, 0, 0, 0))]
    if not has_sc_conv:
        # f32 identity skip path (avoids bf16 quantization of the residual).
        x_id = jnp.pad(x, ((0, 0), (0, 0), (0, 0), (0, cout_p - cin)))
        args.append(x_id)
        in_specs.append(pl.BlockSpec((B_blk, Ho, Wo, cout_p),
                                     lambda n: (n, 0, 0, 0)))
    args += [w1, b1, w2, b2]
    in_specs += [
        wspec((KSIZE * KSIZE * cin_p, cmid_p), lambda n: (0, 0)),
        wspec((1, cmid_p), lambda n: (0, 0)),
        wspec((KSIZE * KSIZE * cmid_p, cout_p), lambda n: (0, 0)),
        wspec((1, cout_p), lambda n: (0, 0)),
    ]
    if has_sc_conv:
        wsc, bsc = _fold_bn(params["wsc"], params["bnsc"], cin_p, cout_p)
        args += [wsc, bsc]
        in_specs += [wspec((cin_p, cout_p), lambda n: (0, 0)),
                     wspec((1, cout_p), lambda n: (0, 0))]

    # Generation-aware VMEM cap: estimate per-step working set, clamp to
    # [16 MiB, 48 MiB] (48 MiB is safe on v7x's 64 MiB physical VMEM).
    rows = B_blk * Ho * Wo
    wpad = _round_up(Wo + 2, SUBLANE)
    step_bytes = (
        2 * 2 * B_blk * stride * stride * Hph * Wph * cin_p            # xr bf16 x2 bufs
        + (0 if has_sc_conv else 2 * 4 * rows * cout_p)                # f32 identity x2
        + 2 * KSIZE * KSIZE * (cin_p * cmid_p + cmid_p * cout_p)       # w1/w2 (1 buf)
        + (2 * cin_p * cout_p if has_sc_conv else 0)                   # wsc
        + 2 * 4 * rows * cout_p                                        # out f32 x2 bufs
        + 2 * (B_blk * (Ho + 2) * wpad * cmid_p
               + rows * KSIZE * KSIZE * (cin_p + cmid_p))              # VMEM scratch
        + 4 * rows * (cmid_p + 2 * cout_p))                            # f32 temporaries
    vmem_limit = int(min(48 << 20, max(16 << 20, 2 * step_bytes)))

    kernel = functools.partial(_basic_block_kernel, stride=stride,
                               Ho=Ho, Wo=Wo, B=B_blk, has_sc_conv=has_sc_conv)

    out = pl.pallas_call(
        kernel,
        out_shape=jax.ShapeDtypeStruct((N, Ho, Wo, cout_p), jnp.float32),
        grid=grid,
        in_specs=in_specs,
        out_specs=pl.BlockSpec((B_blk, Ho, Wo, cout_p), lambda n: (n, 0, 0, 0)),
        scratch_shapes=[
            pltpu.VMEM((B_blk, Ho + 2, wpad, cmid_p), jnp.bfloat16),           # hpad
            pltpu.VMEM((B_blk, Ho, Wo, KSIZE * KSIZE * cin_p), jnp.bfloat16),  # im2col 1
            pltpu.VMEM((B_blk, Ho, Wo, KSIZE * KSIZE * cmid_p), jnp.bfloat16), # im2col 2
        ],
        compiler_params=pltpu.CompilerParams(
            dimension_semantics=("parallel",),       # shard batch over v7x's 2 TCs
            vmem_limit_bytes=vmem_limit),
    )(*args)

    out = out[..., :cout]                               # drop lane padding
    return jnp.transpose(out, (0, 3, 1, 2))             # NHWC -> NCHW


# ----------------------------------------------------------------------------
# Parameter init (eval-mode BN stats; kaiming-normal conv weights)
# ----------------------------------------------------------------------------
def init_basic_block_params(key, in_channels, channels, stride):
    def kaiming(k, kh, kw, ci, co):
        fan_out = co * kh * kw
        std = math.sqrt(2.0 / fan_out)
        return jax.random.normal(k, (kh, kw, ci, co), jnp.float32) * std

    def bn_stats(c):
        return {"gamma": jnp.ones((c,), jnp.float32),
                "beta": jnp.zeros((c,), jnp.float32),
                "mean": jnp.zeros((c,), jnp.float32),
                "var": jnp.ones((c,), jnp.float32)}

    k1, k2, k3 = jax.random.split(key, 3)
    params = {
        "w1": kaiming(k1, 3, 3, in_channels, channels),
        "bn1": bn_stats(channels),
        "w2": kaiming(k2, 3, 3, channels, channels),
        "bn2": bn_stats(channels),
    }
    if stride != 1 or in_channels != channels:
        params["wsc"] = kaiming(k3, 1, 1, in_channels, channels)
        params["bnsc"] = bn_stats(channels)
    return params


# ----------------------------------------------------------------------------
# Pure-JAX f32 reference (for correctness check)
# ----------------------------------------------------------------------------
def _reference_forward(x_nchw, params, *, stride):
    x = jnp.transpose(x_nchw, (0, 2, 3, 1)).astype(jnp.float32)

    def conv(v, w, s, pad):
        return jax.lax.conv_general_dilated(
            v, w, window_strides=(s, s), padding=[(pad, pad), (pad, pad)],
            dimension_numbers=("NHWC", "HWIO", "NHWC"))

    def bn(v, st):
        scale = st["gamma"] / jnp.sqrt(st["var"] + BN_EPS)
        bias = st["beta"] - st["mean"] * scale
        return v * scale + bias

    h = jax.nn.relu(bn(conv(x, params["w1"], stride, 1), params["bn1"]))
    h = bn(conv(h, params["w2"], 1, 1), params["bn2"])
    if "wsc" in params:
        sc = bn(conv(x, params["wsc"], stride, 0), params["bnsc"])
    else:
        sc = x
    out = jax.nn.relu(h + sc)
    return jnp.transpose(out, (0, 3, 1, 2))


if __name__ == "__main__":
    key = jax.random.PRNGKey(0)
    kA_p, kA_x, kB_p, kB_x = jax.random.split(key, 4)

    # Config A: conv-shortcut path — BasicBlock(4 -> 8, stride=2), x: (2,4,16,16)
    xA = jax.random.normal(kA_x, (2, 4, 16, 16), jnp.float32)      # NCHW like PyTorch
    pA = init_basic_block_params(kA_p, 4, 8, 2)
    fwdA = jax.jit(functools.partial(basic_block_forward, stride=2))
    outA = jax.block_until_ready(fwdA(xA, pA))
    assert outA.shape == (2, 8, 8, 8), outA.shape
    assert bool(jnp.all(jnp.isfinite(outA)))
    refA = _reference_forward(xA, pA, stride=2)
    assert bool(jnp.allclose(outA, refA, rtol=5e-2, atol=5e-2)), (
        "conv-shortcut max abs err = %f" % float(jnp.max(jnp.abs(outA - refA))))

    # Config B: identity-shortcut path — BasicBlock(4 -> 4, stride=1)
    xB = jax.random.normal(kB_x, (2, 4, 16, 16), jnp.float32)
    pB = init_basic_block_params(kB_p, 4, 4, 1)
    fwdB = jax.jit(functools.partial(basic_block_forward, stride=1))
    outB = jax.block_until_ready(fwdB(xB, pB))
    assert outB.shape == (2, 4, 16, 16), outB.shape
    assert bool(jnp.all(jnp.isfinite(outB)))
    refB = _reference_forward(xB, pB, stride=1)
    assert bool(jnp.allclose(outB, refB, rtol=5e-2, atol=5e-2)), (
        "identity-shortcut max abs err = %f" % float(jnp.max(jnp.abs(outB - refB))))

    print("KERNEL_OK")
</pallas_src>

<mosaic_0001>
module attributes {stable_mosaic.version = 11 : i64} {
  func.func @_basic_block_kernel(%arg0: i32, %arg1: memref<2x4x9x16x128xbf16, #tpu.memory_space<vmem>>, %arg2: memref<1152x128xbf16, #tpu.memory_space<vmem>>, %arg3: memref<1x128xf32, #tpu.memory_space<vmem>>, %arg4: memref<1152x128xbf16, #tpu.memory_space<vmem>>, %arg5: memref<1x128xf32, #tpu.memory_space<vmem>>, %arg6: memref<128x128xbf16, #tpu.memory_space<vmem>>, %arg7: memref<1x128xf32, #tpu.memory_space<vmem>>, %arg8: memref<2x8x8x128xf32, #tpu.memory_space<vmem>>, %arg9: memref<2x10x16x128xbf16, #tpu.memory_space<vmem>>, %arg10: memref<2x8x8x1152xbf16, #tpu.memory_space<vmem>>, %arg11: memref<2x8x8x1152xbf16, #tpu.memory_space<vmem>>) attributes {dimension_semantics = [#tpu.dimension_semantics<parallel>], iteration_bounds = array<i64: 1>, scalar_prefetch = 0 : i64, scratch_operands = 3 : i64, tpu.core_type = #tpu.core_type<tc>, window_params = [{transform_indices = @transform_0, window_bounds = array<i64: 2, 4, 9, 16, 128>}, {pipeline_mode = #tpu.pipeline_mode<synchronous>, transform_indices = @transform_1, window_bounds = array<i64: 1152, 128>}, {pipeline_mode = #tpu.pipeline_mode<synchronous>, transform_indices = @transform_2, window_bounds = array<i64: 1, 128>}, {pipeline_mode = #tpu.pipeline_mode<synchronous>, transform_indices = @transform_3, window_bounds = array<i64: 1152, 128>}, {pipeline_mode = #tpu.pipeline_mode<synchronous>, transform_indices = @transform_4, window_bounds = array<i64: 1, 128>}, {pipeline_mode = #tpu.pipeline_mode<synchronous>, transform_indices = @transform_5, window_bounds = array<i64: 128, 128>}, {pipeline_mode = #tpu.pipeline_mode<synchronous>, transform_indices = @transform_6, window_bounds = array<i64: 1, 128>}, {transform_indices = @transform_7, window_bounds = array<i64: 2, 8, 8, 128>}]} {
    %c0 = arith.constant 0 : index
    %c0_0 = arith.constant 0 : index
    %c0_1 = arith.constant 0 : index
    %c0_2 = arith.constant 0 : index
    %c0_3 = arith.constant 0 : index
    %0 = vector.load %arg1[%c0, %c0_0, %c0_1, %c0_2, %c0_3] : memref<2x4x9x16x128xbf16, #tpu.memory_space<vmem>>, vector<2x1x8x8x128xbf16>
    %1 = vector.shape_cast %0 : vector<2x1x8x8x128xbf16> to vector<2x8x8x128xbf16>
    %c0_4 = arith.constant 0 : index
    %c0_5 = arith.constant 0 : index
    %c0_6 = arith.constant 0 : index
    %c0_7 = arith.constant 0 : index
    %2 = vector.load %arg10[%c0_4, %c0_5, %c0_6, %c0_7] : memref<2x8x8x1152xbf16, #tpu.memory_space<vmem>>, vector<2x8x8x128xbf16>
    tpu.vector_store %arg10[%c0_4, %c0_5, %c0_6, %c0_7], %1 {strides = array<i32>} : memref<2x8x8x1152xbf16, #tpu.memory_space<vmem>>, vector<2x8x8x128xbf16>,
    %c0_8 = arith.constant 0 : index
    %c1 = arith.constant 1 : index
    %c0_9 = arith.constant 0 : index
    %c0_10 = arith.constant 0 : index
    %c0_11 = arith.constant 0 : index
    %3 = vector.load %arg1[%c0_8, %c1, %c0_9, %c0_10, %c0_11] : memref<2x4x9x16x128xbf16, #tpu.memory_space<vmem>>, vector<2x1x8x8x128xbf16>
    %4 = vector.shape_cast %3 : vector<2x1x8x8x128xbf16> to vector<2x8x8x128xbf16>
    %c0_12 = arith.constant 0 : index
    %c0_13 = arith.constant 0 : index
    %c0_14 = arith.constant 0 : index
    %c128 = arith.constant 128 : index
    %5 = vector.load %arg10[%c0_12, %c0_13, %c0_14, %c128] : memref<2x8x8x1152xbf16, #tpu.memory_space<vmem>>, vector<2x8x8x128xbf16>
    tpu.vector_store %arg10[%c0_12, %c0_13, %c0_14, %c128], %4 {strides = array<i32>} : memref<2x8x8x1152xbf16, #tpu.memory_space<vmem>>, vector<2x8x8x128xbf16>,
    %c0_15 = arith.constant 0 : index
    %c0_16 = arith.constant 0 : index
    %c0_17 = arith.constant 0 : index
    %c1_18 = arith.constant 1 : index
    %c0_19 = arith.constant 0 : index
    %6 = vector.load %arg1[%c0_15, %c0_16, %c0_17, %c1_18, %c0_19] : memref<2x4x9x16x128xbf16, #tpu.memory_space<vmem>>, vector<2x1x8x8x128xbf16>
    %7 = vector.shape_cast %6 : vector<2x1x8x8x128xbf16> to vector<2x8x8x128xbf16>
    %c0_20 = arith.constant 0 : index
    %c0_21 = arith.constant 0 : index
    %c0_22 = arith.constant 0 : index
    %c256 = arith.constant 256 : index
    %8 = vector.load %arg10[%c0_20, %c0_21, %c0_22, %c256] : memref<2x8x8x1152xbf16, #tpu.memory_space<vmem>>, vector<2x8x8x128xbf16>
    tpu.vector_store %arg10[%c0_20, %c0_21, %c0_22, %c256], %7 {strides = array<i32>} : memref<2x8x8x1152xbf16, #tpu.memory_space<vmem>>, vector<2x8x8x128xbf16>,
    %c0_23 = arith.constant 0 : index
    %c2 = arith.constant 2 : index
    %c0_24 = arith.constant 0 : index
    %c0_25 = arith.constant 0 : index
    %c0_26 = arith.constant 0 : index
    %9 = vector.load %arg1[%c0_23, %c2, %c0_24, %c0_25, %c0_26] : memref<2x4x9x16x128xbf16, #tpu.memory_space<vmem>>, vector<2x1x8x8x128xbf16>
    %10 = vector.shape_cast %9 : vector<2x1x8x8x128xbf16> to vector<2x8x8x128xbf16>
    %c0_27 = arith.constant 0 : index
    %c0_28 = arith.constant 0 : index
    %c0_29 = arith.constant 0 : index
    %c384 = arith.constant 384 : index
    %11 = vector.load %arg10[%c0_27, %c0_28, %c0_29, %c384] : memref<2x8x8x1152xbf16, #tpu.memory_space<vmem>>, vector<2x8x8x128xbf16>
    tpu.vector_store %arg10[%c0_27, %c0_28, %c0_29, %c384], %10 {strides = array<i32>} : memref<2x8x8x1152xbf16, #tpu.memory_space<vmem>>, vector<2x8x8x128xbf16>,
    %c0_30 = arith.constant 0 : index
    %c3 = arith.constant 3 : index
    %c0_31 = arith.constant 0 : index
    %c0_32 = arith.constant 0 : index
    %c0_33 = arith.constant 0 : index
    %12 = vector.load %arg1[%c0_30, %c3, %c0_31, %c0_32, %c0_33] : memref<2x4x9x16x128xbf16, #tpu.memory_space<vmem>>, vector<2x1x8x8x128xbf16>
    %13 = vector.shape_cast %12 : vector<2x1x8x8x128xbf16> to vector<2x8x8x128xbf16>
    %c0_34 = arith.constant 0 : index
    %c0_35 = arith.constant 0 : index
    %c0_36 = arith.constant 0 : index
    %c512 = arith.constant 512 : index
    %14 = vector.load %arg10[%c0_34, %c0_35, %c0_36, %c512] : memref<2x8x8x1152xbf16, #tpu.memory_space<vmem>>, vector<2x8x8x128xbf16>
    tpu.vector_store %arg10[%c0_34, %c0_35, %c0_36, %c512], %13 {strides = array<i32>} : memref<2x8x8x1152xbf16, #tpu.memory_space<vmem>>, vector<2x8x8x128xbf16>,
    %c0_37 = arith.constant 0 : index
    %c2_38 = arith.constant 2 : index
    %c0_39 = arith.constant 0 : index
    %c1_40 = arith.constant 1 : index
    %c0_41 = arith.constant 0 : index
    %15 = vector.load %arg1[%c0_37, %c2_38, %c0_39, %c1_40, %c0_41] : memref<2x4x9x16x128xbf16, #tpu.memory_space<vmem>>, vector<2x1x8x8x128xbf16>
    %16 = vector.shape_cast %15 : vector<2x1x8x8x128xbf16> to vector<2x8x8x128xbf16>
    %c0_42 = arith.constant 0 : index
    %c0_43 = arith.constant 0 : index
    %c0_44 = arith.constant 0 : index
    %c640 = arith.constant 640 : index
    %17 = vector.load %arg10[%c0_42, %c0_43, %c0_44, %c640] : memref<2x8x8x1152xbf16, #tpu.memory_space<vmem>>, vector<2x8x8x128xbf16>
    tpu.vector_store %arg10[%c0_42, %c0_43, %c0_44, %c640], %16 {strides = array<i32>} : memref<2x8x8x1152xbf16, #tpu.memory_space<vmem>>, vector<2x8x8x128xbf16>,
    %c0_45 = arith.constant 0 : index
    %c0_46 = arith.constant 0 : index
    %c1_47 = arith.constant 1 : index
    %c0_48 = arith.constant 0 : index
    %c0_49 = arith.constant 0 : index
    %18 = vector.load %arg1[%c0_45, %c0_46, %c1_47, %c0_48, %c0_49] : memref<2x4x9x16x128xbf16, #tpu.memory_space<vmem>>, vector<2x1x8x8x128xbf16>
    %19 = vector.shape_cast %18 : vector<2x1x8x8x128xbf16> to vector<2x8x8x128xbf16>
    %c0_50 = arith.constant 0 : index
    %c0_51 = arith.constant 0 : index
    %c0_52 = arith.constant 0 : index
    %c768 = arith.constant 768 : index
    %20 = vector.load %arg10[%c0_50, %c0_51, %c0_52, %c768] : memref<2x8x8x1152xbf16, #tpu.memory_space<vmem>>, vector<2x8x8x128xbf16>
    tpu.vector_store %arg10[%c0_50, %c0_51, %c0_52, %c768], %19 {strides = array<i32>} : memref<2x8x8x1152xbf16, #tpu.memory_space<vmem>>, vector<2x8x8x128xbf16>,
    %c0_53 = arith.constant 0 : index
    %c1_54 = arith.constant 1 : index
    %c1_55 = arith.constant 1 : index
    %c0_56 = arith.constant 0 : index
    %c0_57 = arith.constant 0 : index
    %21 = vector.load %arg1[%c0_53, %c1_54, %c1_55, %c0_56, %c0_57] : memref<2x4x9x16x128xbf16, #tpu.memory_space<vmem>>, vector<2x1x8x8x128xbf16>
    %22 = vector.shape_cast %21 : vector<2x1x8x8x128xbf16> to vector<2x8x8x128xbf16>
    %c0_58 = arith.constant 0 : index
    %c0_59 = arith.constant 0 : index
    %c0_60 = arith.constant 0 : index
    %c896 = arith.constant 896 : index
    %23 = vector.load %arg10[%c0_58, %c0_59, %c0_60, %c896] : memref<2x8x8x1152xbf16, #tpu.memory_space<vmem>>, vector<2x8x8x128xbf16>
    tpu.vector_store %arg10[%c0_58, %c0_59, %c0_60, %c896], %22 {strides = array<i32>} : memref<2x8x8x1152xbf16, #tpu.memory_space<vmem>>, vector<2x8x8x128xbf16>,
    %c0_61 = arith.constant 0 : index
    %c0_62 = arith.constant 0 : index
    %c1_63 = arith.constant 1 : index
    %c1_64 = arith.constant 1 : index
    %c0_65 = arith.constant 0 : index
    %24 = vector.load %arg1[%c0_61, %c0_62, %c1_63, %c1_64, %c0_65] : memref<2x4x9x16x128xbf16, #tpu.memory_space<vmem>>, vector<2x1x8x8x128xbf16>
    %25 = vector.shape_cast %24 : vector<2x1x8x8x128xbf16> to vector<2x8x8x128xbf16>
    %c0_66 = arith.constant 0 : index
    %c0_67 = arith.constant 0 : index
    %c0_68 = arith.constant 0 : index
    %c1024 = arith.constant 1024 : index
    %26 = vector.load %arg10[%c0_66, %c0_67, %c0_68, %c1024] : memref<2x8x8x1152xbf16, #tpu.memory_space<vmem>>, vector<2x8x8x128xbf16>
    tpu.vector_store %arg10[%c0_66, %c0_67, %c0_68, %c1024], %25 {strides = array<i32>} : memref<2x8x8x1152xbf16, #tpu.memory_space<vmem>>, vector<2x8x8x128xbf16>,
    %c0_69 = arith.constant 0 : index
    %c0_70 = arith.constant 0 : index
    %c0_71 = arith.constant 0 : index
    %c0_72 = arith.constant 0 : index
    %27 = vector.load %arg10[%c0_69, %c0_70, %c0_71, %c0_72] : memref<2x8x8x1152xbf16, #tpu.memory_space<vmem>>, vector<2x8x8x1152xbf16>
    %28 = vector.shape_cast %27 : vector<2x8x8x1152xbf16> to vector<128x1152xbf16>
    %c0_73 = arith.constant 0 : index
    %c0_74 = arith.constant 0 : index
    %29 = vector.load %arg2[%c0_73, %c0_74] : memref<1152x128xbf16, #tpu.memory_space<vmem>>, vector<1152x128xbf16>
    %cst = arith.constant dense<0.000000e+00> : vector<128x128xf32>
    %30 = tpu.matmul %28, %29, %cst {dimension_numbers = #tpu.dot_dimension_numbers<[1], [0], [0], [1], [0, 0, 1, 1], [], []>} : vector<128x1152xbf16>, vector<1152x128xbf16>, vector<128x128xf32> -> vector<128x128xf32>
    %c0_75 = arith.constant 0 : index
    %c0_76 = arith.constant 0 : index
    %31 = vector.load %arg3[%c0_75, %c0_76] : memref<1x128xf32, #tpu.memory_space<vmem>>, vector<1x128xf32>
    %32 = vector.broadcast %31 : vector<1x128xf32> to vector<128x128xf32>
    %33 = arith.addf %30, %32 : vector<128x128xf32>
    %cst_77 = arith.constant 0.000000e+00 : f32
    %34 = vector.broadcast %cst_77 : f32 to vector<128x128xf32>
    %35 = arith.maximumf %33, %34 : vector<128x128xf32>
    %cst_78 = arith.constant 0.000000e+00 : bf16
    %36 = vector.broadcast %cst_78 : bf16 to vector<2x1x16x128xbf16>
    %cst_79 = arith.constant 0.000000e+00 : bf16
    %37 = vector.broadcast %cst_79 : bf16 to vector<2x10x1x128xbf16>
    %c0_80 = arith.constant 0 : index
    %c0_81 = arith.constant 0 : index
    %c0_82 = arith.constant 0 : index
    %c0_83 = arith.constant 0 : index
    %38 = vector.load %arg9[%c0_80, %c0_81, %c0_82, %c0_83] : memref<2x10x16x128xbf16, #tpu.memory_space<vmem>>, vector<2x1x16x128xbf16>
    tpu.vector_store %arg9[%c0_80, %c0_81, %c0_82, %c0_83], %36 {strides = array<i32>} : memref<2x10x16x128xbf16, #tpu.memory_space<vmem>>, vector<2x1x16x128xbf16>,
    %c0_84 = arith.constant 0 : index
    %c9 = arith.constant 9 : index
    %c0_85 = arith.constant 0 : index
    %c0_86 = arith.constant 0 : index
    %39 = vector.load %arg9[%c0_84, %c9, %c0_85, %c0_86] : memref<2x10x16x128xbf16, #tpu.memory_space<vmem>>, vector<2x1x16x128xbf16>
    tpu.vector_store %arg9[%c0_84, %c9, %c0_85, %c0_86], %36 {strides = array<i32>} : memref<2x10x16x128xbf16, #tpu.memory_space<vmem>>, vector<2x1x16x128xbf16>,
    %c0_87 = arith.constant 0 : index
    %c0_88 = arith.constant 0 : index
    %c0_89 = arith.constant 0 : index
    %c0_90 = arith.constant 0 : index
    %40 = vector.load %arg9[%c0_87, %c0_88, %c0_89, %c0_90] : memref<2x10x16x128xbf16, #tpu.memory_space<vmem>>, vector<2x10x1x128xbf16>
    tpu.vector_store %arg9[%c0_87, %c0_88, %c0_89, %c0_90], %37 {strides = array<i32>} : memref<2x10x16x128xbf16, #tpu.memory_space<vmem>>, vector<2x10x1x128xbf16>,
    %c0_91 = arith.constant 0 : index
    %c0_92 = arith.constant 0 : index
    %c9_93 = arith.constant 9 : index
    %c0_94 = arith.constant 0 : index
    %41 = vector.load %arg9[%c0_91, %c0_92, %c9_93, %c0_94] : memref<2x10x16x128xbf16, #tpu.memory_space<vmem>>, vector<2x10x1x128xbf16>
    tpu.vector_store %arg9[%c0_91, %c0_92, %c9_93, %c0_94], %37 {strides = array<i32>} : memref<2x10x16x128xbf16, #tpu.memory_space<vmem>>, vector<2x10x1x128xbf16>,
    %42 = vector.shape_cast %35 : vector<128x128xf32> to vector<2x8x8x128xf32>
    %43 = arith.truncf %42 : vector<2x8x8x128xf32> to vector<2x8x8x128xbf16>
    %c0_95 = arith.constant 0 : index
    %c1_96 = arith.constant 1 : index
    %c1_97 = arith.constant 1 : index
    %c0_98 = arith.constant 0 : index
    %44 = vector.load %arg9[%c0_95, %c1_96, %c1_97, %c0_98] : memref<2x10x16x128xbf16, #tpu.memory_space<vmem>>, vector<2x8x8x128xbf16>
    tpu.vector_store %arg9[%c0_95, %c1_96, %c1_97, %c0_98], %43 {strides = array<i32>} : memref<2x10x16x128xbf16, #tpu.memory_space<vmem>>, vector<2x8x8x128xbf16>,
    %c0_99 = arith.constant 0 : index
    %c0_100 = arith.constant 0 : index
    %c0_101 = arith.constant 0 : index
    %c0_102 = arith.constant 0 : index
    %45 = vector.load %arg9[%c0_99, %c0_100, %c0_101, %c0_102] : memref<2x10x16x128xbf16, #tpu.memory_space<vmem>>, vector<2x8x8x128xbf16>
    %c0_103 = arith.constant 0 : index
    %c0_104 = arith.constant 0 : index
    %c0_105 = arith.constant 0 : index
    %c0_106 = arith.constant 0 : index
    %46 = vector.load %arg11[%c0_103, %c0_104, %c0_105, %c0_106] : memref<2x8x8x1152xbf16, #tpu.memory_space<vmem>>, vector<2x8x8x128xbf16>
    tpu.vector_store %arg11[%c0_103, %c0_104, %c0_105, %c0_106], %45 {strides = array<i32>} : memref<2x8x8x1152xbf16, #tpu.memory_space<vmem>>, vector<2x8x8x128xbf16>,
    %c0_107 = arith.constant 0 : index
    %c0_108 = arith.constant 0 : index
    %c1_109 = arith.constant 1 : index
    %c0_110 = arith.constant 0 : index
    %47 = vector.load %arg9[%c0_107, %c0_108, %c1_109, %c0_110] : memref<2x10x16x128xbf16, #tpu.memory_space<vmem>>, vector<2x8x8x128xbf16>
    %c0_111 = arith.constant 0 : index
    %c0_112 = arith.constant 0 : index
    %c0_113 = arith.constant 0 : index
    %c128_114 = arith.constant 128 : index
    %48 = vector.load %arg11[%c0_111, %c0_112, %c0_113, %c128_114] : memref<2x8x8x1152xbf16, #tpu.memory_space<vmem>>, vector<2x8x8x128xbf16>
    tpu.vector_store %arg11[%c0_111, %c0_112, %c0_113, %c128_114], %47 {strides = array<i32>} : memref<2x8x8x1152xbf16, #tpu.memory_space<vmem>>, vector<2x8x8x128xbf16>,
    %c0_115 = arith.constant 0 : index
    %c0_116 = arith.constant 0 : index
    %c2_117 = arith.constant 2 : index
    %c0_118 = arith.constant 0 : index
    %49 = vector.load %arg9[%c0_115, %c0_116, %c2_117, %c0_118] : memref<2x10x16x128xbf16, #tpu.memory_space<vmem>>, vector<2x8x8x128xbf16>
    %c0_119 = arith.constant 0 : index
    %c0_120 = arith.constant 0 : index
    %c0_121 = arith.constant 0 : index
    %c256_122 = arith.constant 256 : index
    %50 = vector.load %arg11[%c0_119, %c0_120, %c0_121, %c256_122] : memref<2x8x8x1152xbf16, #tpu.memory_space<vmem>>, vector<2x8x8x128xbf16>
    tpu.vector_store %arg11[%c0_119, %c0_120, %c0_121, %c256_122], %49 {strides = array<i32>} : memref<2x8x8x1152xbf16, #tpu.memory_space<vmem>>, vector<2x8x8x128xbf16>,
    %c0_123 = arith.constant 0 : index
    %c1_124 = arith.constant 1 : index
    %c0_125 = arith.constant 0 : index
    %c0_126 = arith.constant 0 : index
    %51 = vector.load %arg9[%c0_123, %c1_124, %c0_125, %c0_126] : memref<2x10x16x128xbf16, #tpu.memory_space<vmem>>, vector<2x8x8x128xbf16>
    %c0_127 = arith.constant 0 : index
    %c0_128 = arith.constant 0 : index
    %c0_129 = arith.constant 0 : index
    %c384_130 = arith.constant 384 : index
    %52 = vector.load %arg11[%c0_127, %c0_128, %c0_129, %c384_130] : memref<2x8x8x1152xbf16, #tpu.memory_space<vmem>>, vector<2x8x8x128xbf16>
    tpu.vector_store %arg11[%c0_127, %c0_128, %c0_129, %c384_130], %51 {strides = array<i32>} : memref<2x8x8x1152xbf16, #tpu.memory_space<vmem>>, vector<2x8x8x128xbf16>,
    %c0_131 = arith.constant 0 : index
    %c1_132 = arith.constant 1 : index
    %c1_133 = arith.constant 1 : index
    %c0_134 = arith.constant 0 : index
    %53 = vector.load %arg9[%c0_131, %c1_132, %c1_133, %c0_134] : memref<2x10x16x128xbf16, #tpu.memory_space<vmem>>, vector<2x8x8x128xbf16>
    %c0_135 = arith.constant 0 : index
    %c0_136 = arith.constant 0 : index
    %c0_137 = arith.constant 0 : index
    %c512_138 = arith.constant 512 : index
    %54 = vector.load %arg11[%c0_135, %c0_136, %c0_137, %c512_138] : memref<2x8x8x1152xbf16, #tpu.memory_space<vmem>>, vector<2x8x8x128xbf16>
    tpu.vector_store %arg11[%c0_135, %c0_136, %c0_137, %c512_138], %53 {strides = array<i32>} : memref<2x8x8x1152xbf16, #tpu.memory_space<vmem>>, vector<2x8x8x128xbf16>,
    %c0_139 = arith.constant 0 : index
    %c1_140 = arith.constant 1 : index
    %c2_141 = arith.constant 2 : index
    %c0_142 = arith.constant 0 : index
    %55 = vector.load %arg9[%c0_139, %c1_140, %c2_141, %c0_142] : memref<2x10x16x128xbf16, #tpu.memory_space<vmem>>, vector<2x8x8x128xbf16>
    %c0_143 = arith.constant 0 : index
    %c0_144 = arith.constant 0 : index
    %c0_145 = arith.constant 0 : index
    %c640_146 = arith.constant 640 : index
    %56 = vector.load %arg11[%c0_143, %c0_144, %c0_145, %c640_146] : memref<2x8x8x1152xbf16, #tpu.memory_space<vmem>>, vector<2x8x8x128xbf16>
    tpu.vector_store %arg11[%c0_143, %c0_144, %c0_145, %c640_146], %55 {strides = array<i32>} : memref<2x8x8x1152xbf16, #tpu.memory_space<vmem>>, vector<2x8x8x128xbf16>,
    %c0_147 = arith.constant 0 : index
    %c2_148 = arith.constant 2 : index
    %c0_149 = arith.constant 0 : index
    %c0_150 = arith.constant 0 : index
    %57 = vector.load %arg9[%c0_147, %c2_148, %c0_149, %c0_150] : memref<2x10x16x128xbf16, #tpu.memory_space<vmem>>, vector<2x8x8x128xbf16>
    %c0_151 = arith.constant 0 : index
    %c0_152 = arith.constant 0 : index
    %c0_153 = arith.constant 0 : index
    %c768_154 = arith.constant 768 : index
    %58 = vector.load %arg11[%c0_151, %c0_152, %c0_153, %c768_154] : memref<2x8x8x1152xbf16, #tpu.memory_space<vmem>>, vector<2x8x8x128xbf16>
    tpu.vector_store %arg11[%c0_151, %c0_152, %c0_153, %c768_154], %57 {strides = array<i32>} : memref<2x8x8x1152xbf16, #tpu.memory_space<vmem>>, vector<2x8x8x128xbf16>,
    %c0_155 = arith.constant 0 : index
    %c2_156 = arith.constant 2 : index
    %c1_157 = arith.constant 1 : index
    %c0_158 = arith.constant 0 : index
    %59 = vector.load %arg9[%c0_155, %c2_156, %c1_157, %c0_158] : memref<2x10x16x128xbf16, #tpu.memory_space<vmem>>, vector<2x8x8x128xbf16>
    %c0_159 = arith.constant 0 : index
    %c0_160 = arith.constant 0 : index
    %c0_161 = arith.constant 0 : index
    %c896_162 = arith.constant 896 : index
    %60 = vector.load %arg11[%c0_159, %c0_160, %c0_161, %c896_162] : memref<2x8x8x1152xbf16, #tpu.memory_space<vmem>>, vector<2x8x8x128xbf16>
    tpu.vector_store %arg11[%c0_159, %c0_160, %c0_161, %c896_162], %59 {strides = array<i32>} : memref<2x8x8x1152xbf16, #tpu.memory_space<vmem>>, vector<2x8x8x128xbf16>,
    %c0_163 = arith.constant 0 : index
    %c2_164 = arith.constant 2 : index
    %c2_165 = arith.constant 2 : index
    %c0_166 = arith.constant 0 : index
    %61 = vector.load %arg9[%c0_163, %c2_164, %c2_165, %c0_166] : memref<2x10x16x128xbf16, #tpu.memory_space<vmem>>, vector<2x8x8x128xbf16>
    %c0_167 = arith.constant 0 : index
    %c0_168 = arith.constant 0 : index
    %c0_169 = arith.constant 0 : index
    %c1024_170 = arith.constant 1024 : index
    %62 = vector.load %arg11[%c0_167, %c0_168, %c0_169, %c1024_170] : memref<2x8x8x1152xbf16, #tpu.memory_space<vmem>>, vector<2x8x8x128xbf16>
    tpu.vector_store %arg11[%c0_167, %c0_168, %c0_169, %c1024_170], %61 {strides = array<i32>} : memref<2x8x8x1152xbf16, #tpu.memory_space<vmem>>, vector<2x8x8x128xbf16>,
    %c0_171 = arith.constant 0 : index
    %c0_172 = arith.constant 0 : index
    %c0_173 = arith.constant 0 : index
    %c0_174 = arith.constant 0 : index
    %63 = vector.load %arg11[%c0_171, %c0_172, %c0_173, %c0_174] : memref<2x8x8x1152xbf16, #tpu.memory_space<vmem>>, vector<2x8x8x1152xbf16>
    %64 = vector.shape_cast %63 : vector<2x8x8x1152xbf16> to vector<128x1152xbf16>
    %c0_175 = arith.constant 0 : index
    %c0_176 = arith.constant 0 : index
    %65 = vector.load %arg4[%c0_175, %c0_176] : memref<1152x128xbf16, #tpu.memory_space<vmem>>, vector<1152x128xbf16>
    %cst_177 = arith.constant dense<0.000000e+00> : vector<128x128xf32>
    %66 = tpu.matmul %64, %65, %cst_177 {dimension_numbers = #tpu.dot_dimension_numbers<[1], [0], [0], [1], [0, 0, 1, 1], [], []>} : vector<128x1152xbf16>, vector<1152x128xbf16>, vector<128x128xf32> -> vector<128x128xf32>
    %c0_178 = arith.constant 0 : index
    %c0_179 = arith.constant 0 : index
    %67 = vector.load %arg5[%c0_178, %c0_179] : memref<1x128xf32, #tpu.memory_space<vmem>>, vector<1x128xf32>
    %68 = vector.broadcast %67 : vector<1x128xf32> to vector<128x128xf32>
    %69 = arith.addf %66, %68 : vector<128x128xf32>
    %c0_180 = arith.constant 0 : index
    %c3_181 = arith.constant 3 : index
    %c0_182 = arith.constant 0 : index
    %c0_183 = arith.constant 0 : index
    %c0_184 = arith.constant 0 : index
    %70 = vector.load %arg1[%c0_180, %c3_181, %c0_182, %c0_183, %c0_184] : memref<2x4x9x16x128xbf16, #tpu.memory_space<vmem>>, vector<2x1x8x8x128xbf16>
    %71 = vector.shape_cast %70 : vector<2x1x8x8x128xbf16> to vector<2x8x8x128xbf16>
    %72 = vector.shape_cast %71 : vector<2x8x8x128xbf16> to vector<128x128xbf16>
    %c0_185 = arith.constant 0 : index
    %c0_186 = arith.constant 0 : index
    %73 = vector.load %arg6[%c0_185, %c0_186] : memref<128x128xbf16, #tpu.memory_space<vmem>>, vector<128x128xbf16>
    %cst_187 = arith.constant dense<0.000000e+00> : vector<128x128xf32>
    %74 = tpu.matmul %72, %73, %cst_187 {dimension_numbers = #tpu.dot_dimension_numbers<[1], [0], [0], [1], [0, 0, 1, 1], [], []>} : vector<128x128xbf16>, vector<128x128xbf16>, vector<128x128xf32> -> vector<128x128xf32>
    %c0_188 = arith.constant 0 : index
    %c0_189 = arith.constant 0 : index
    %75 = vector.load %arg7[%c0_188, %c0_189] : memref<1x128xf32, #tpu.memory_space<vmem>>, vector<1x128xf32>
    %76 = vector.broadcast %75 : vector<1x128xf32> to vector<128x128xf32>
    %77 = arith.addf %74, %76 : vector<128x128xf32>
    %78 = arith.addf %69, %77 : vector<128x128xf32>
    %cst_190 = arith.constant 0.000000e+00 : f32
    %79 = vector.broadcast %cst_190 : f32 to vector<128x128xf32>
    %80 = arith.maximumf %78, %79 : vector<128x128xf32>
    %81 = vector.shape_cast %80 : vector<128x128xf32> to vector<2x8x8x128xf32>
    %c0_191 = arith.constant 0 : index
    %c0_192 = arith.constant 0 : index
    %c0_193 = arith.constant 0 : index
    %c0_194 = arith.constant 0 : index
    %82 = vector.load %arg8[%c0_191, %c0_192, %c0_193, %c0_194] : memref<2x8x8x128xf32, #tpu.memory_space<vmem>>, vector<2x8x8x128xf32>
    tpu.vector_store %arg8[%c0_191, %c0_192, %c0_193, %c0_194], %81 {strides = array<i32>} : memref<2x8x8x128xf32, #tpu.memory_space<vmem>>, vector<2x8x8x128xf32>,
    return
  }
  func.func @transform_0(%arg0: i32) -> (i32, i32, i32, i32, i32) {
    %c0_i32 = arith.constant 0 : i32
    %c0_i32_0 = arith.constant 0 : i32
    %c0_i32_1 = arith.constant 0 : i32
    %c0_i32_2 = arith.constant 0 : i32
    %c0_i32_3 = arith.constant 0 : i32
    return %arg0, %c0_i32, %c0_i32_0, %c0_i32_1, %c0_i32_2 : i32, i32, i32, i32, i32
  }
  func.func @transform_1(%arg0: i32) -> (i32, i32) {
    %c0_i32 = arith.constant 0 : i32
    %c0_i32_0 = arith.constant 0 : i32
    %c0_i32_1 = arith.constant 0 : i32
    return %c0_i32, %c0_i32_0 : i32, i32
  }
  func.func @transform_2(%arg0: i32) -> (i32, i32) {
    %c0_i32 = arith.constant 0 : i32
    %c0_i32_0 = arith.constant 0 : i32
    %c0_i32_1 = arith.constant 0 : i32
    return %c0_i32, %c0_i32_0 : i32, i32
  }
  func.func @transform_3(%arg0: i32) -> (i32, i32) {
    %c0_i32 = arith.constant 0 : i32
    %c0_i32_0 = arith.constant 0 : i32
    %c0_i32_1 = arith.constant 0 : i32
    return %c0_i32, %c0_i32_0 : i32, i32
  }
  func.func @transform_4(%arg0: i32) -> (i32, i32) {
    %c0_i32 = arith.constant 0 : i32
    %c0_i32_0 = arith.constant 0 : i32
    %c0_i32_1 = arith.constant 0 : i32
    return %c0_i32, %c0_i32_0 : i32, i32
  }
  func.func @transform_5(%arg0: i32) -> (i32, i32) {
    %c0_i32 = arith.constant 0 : i32
    %c0_i32_0 = arith.constant 0 : i32
    %c0_i32_1 = arith.constant 0 : i32
    return %c0_i32, %c0_i32_0 : i32, i32
  }
  func.func @transform_6(%arg0: i32) -> (i32, i32) {
    %c0_i32 = arith.constant 0 : i32
    %c0_i32_0 = arith.constant 0 : i32
    %c0_i32_1 = arith.constant 0 : i32
    return %c0_i32, %c0_i32_0 : i32, i32
  }
  func.func @transform_7(%arg0: i32) -> (i32, i32, i32, i32) {
    %c0_i32 = arith.constant 0 : i32
    %c0_i32_0 = arith.constant 0 : i32
    %c0_i32_1 = arith.constant 0 : i32
    %c0_i32_2 = arith.constant 0 : i32
    return %arg0, %c0_i32, %c0_i32_0, %c0_i32_1 : i32, i32, i32, i32
  }
}

</mosaic_0001>

<llo_original>
// kernel: basic_block_forward.1
$region0: #{basic_block_forward.1}
  #allocation0 [shape = 'u32[]', space=smem, size = 0x4, offset = 0x4, fixed_abs, tag = 'smem constant byte address 0x4 - core index']
  #allocation1 [shape = 'u32[144,128]{1,0:T(1,128)}', space=vmem, size = 0x12000, scoped, tag = 'internal scratch']
  #allocation2 [shape = 'bf16[2,10,16,128]{3,2,1,0:T(8,128)(2,1)}', space=vmem, size = 0x14000, scoped, tag = 'scratch operand']
  #allocation3 [shape = 'bf16[2,8,8,1152]{3,2,1,0:T(8,128)(2,1)}', space=vmem, size = 0x48000, scoped, tag = 'scratch operand']
  #allocation4 [shape = 'bf16[2,8,8,1152]{3,2,1,0:T(8,128)(2,1)}', space=vmem, size = 0x48000, scoped, tag = 'scratch operand']
  %s0 = inlined_call_operand.vmem [shape: bf16[2,4,9,16,128], index: 0, kind: input, shape index: {}]
  %s1 = inlined_call_operand.vmem [shape: bf16[1152,128], index: 1, kind: input, shape index: {}]
  %s2 = inlined_call_operand.vmem [shape: f32[1,128], index: 2, kind: input, shape index: {}]
  %s3 = inlined_call_operand.vmem [shape: bf16[1152,128], index: 3, kind: input, shape index: {}]
  %s4 = inlined_call_operand.vmem [shape: f32[1,128], index: 4, kind: input, shape index: {}]
  %s5 = inlined_call_operand.vmem [shape: bf16[128,128], index: 5, kind: input, shape index: {}]
  %s6 = inlined_call_operand.vmem [shape: f32[1,128], index: 6, kind: input, shape index: {}]
  %s7 = inlined_call_operand.vmem [shape: f32[2,8,8,128], index: 7, kind: output, shape index: {}]
  %s8 = sld [smem:[#allocation0]]
  $region38: #{basic_block_forward.1} parent=0
    _
  %s10 = ssub.s32 1, %s8
  %s11 = scalar_select 0, %s10, %s8
  // Predicated region
  $region2: #{basic_block_forward.1} parent=0 // pred_check
    _
  $region3: #{basic_block_forward.1} parent=0 // pred_check_branch
    %13 = sbr.rel (0) target = $region5
  $region4: #{basic_block_forward.1} parent=0 // pred_region
    _
  $region5: #{basic_block_forward.1} parent=0 // pred_fallthru
    _
  // Predicated region
  $region6: #{basic_block_forward.1} parent=0 // pred_check
    _
  $region7: #{basic_block_forward.1} parent=0 // pred_check_branch
    %15 = sbr.rel (0) target = $region9
  $region8: #{basic_block_forward.1} parent=0 // pred_region
    _
  $region9: #{basic_block_forward.1} parent=0 // pred_fallthru
    _
  // Predicated region
  $region10: #{basic_block_forward.1} parent=0 // pred_check
    _
  $region11: #{basic_block_forward.1} parent=0 // pred_check_branch
    %17 = sbr.rel (0) target = $region13
  $region12: #{basic_block_forward.1} parent=0 // pred_region
    _
  $region13: #{basic_block_forward.1} parent=0 // pred_fallthru
    _
  // Predicated region
  $region14: #{basic_block_forward.1} parent=0 // pred_check
    _
  $region15: #{basic_block_forward.1} parent=0 // pred_check_branch
    %19 = sbr.rel (0) target = $region17
  $region16: #{basic_block_forward.1} parent=0 // pred_region
    _
  $region17: #{basic_block_forward.1} parent=0 // pred_fallthru
    _
  // Predicated region
  $region18: #{basic_block_forward.1} parent=0 // pred_check
    _
  $region19: #{basic_block_forward.1} parent=0 // pred_check_branch
    %21 = sbr.rel (0) target = $region21
  $region20: #{basic_block_forward.1} parent=0 // pred_region
    _
  $region21: #{basic_block_forward.1} parent=0 // pred_fallthru
    _
  // Predicated region
  $region22: #{basic_block_forward.1} parent=0 // pred_check
    _
  $region23: #{basic_block_forward.1} parent=0 // pred_check_branch
    %23 = sbr.rel (0) target = $region25
  $region24: #{basic_block_forward.1} parent=0 // pred_region
    _
  $region25: #{basic_block_forward.1} parent=0 // pred_fallthru
    _
  // Predicated region
  $region26: #{basic_block_forward.1} parent=0 // pred_check
    _
  $region27: #{basic_block_forward.1} parent=0 // pred_check_branch
    %25 = sbr.rel (0) target = $region29
  $region28: #{basic_block_forward.1} parent=0 // pred_region
    _
  $region29: #{basic_block_forward.1} parent=0 // pred_fallthru
    _
  %v27 = vld [vmem:[%s0] sm:$0xf]
  %v28 = vld [vmem:[%s0 + $0x8] sm:$0xf]
  %v29 = vld [vmem:[%s0 + $0x10] sm:$0xf]
  %v30 = vld [vmem:[%s0 + $0x18] sm:$0xf]
  %v31 = vld [vmem:[%s0 + $0x20] sm:$0xf]
  %v32 = vld [vmem:[%s0 + $0x28] sm:$0xf]
  %v33 = vld [vmem:[%s0 + $0x30] sm:$0xf]
  %v34 = vld [vmem:[%s0 + $0x38] sm:$0xf]
  %v35 = vld [vmem:[%s0 + $0x120] sm:$0xf]
  %v36 = vld [vmem:[%s0 + $0x128] sm:$0xf]
  %v37 = vld [vmem:[%s0 + $0x130] sm:$0xf]
  %v38 = vld [vmem:[%s0 + $0x138] sm:$0xf]
  %v39 = vld [vmem:[%s0 + $0x140] sm:$0xf]
  %v40 = vld [vmem:[%s0 + $0x148] sm:$0xf]
  %v41 = vld [vmem:[%s0 + $0x150] sm:$0xf]
  %v42 = vld [vmem:[%s0 + $0x158] sm:$0xf]
  %43 = vst [vmem:[#allocation3] sm:$0xf] %v27
  %44 = vst [vmem:[#allocation3 + $0x24] sm:$0xf] %v28
  %45 = vst [vmem:[#allocation3 + $0x48] sm:$0xf] %v29
  %46 = vst [vmem:[#allocation3 + $0x6c] sm:$0xf] %v30
  %47 = vst [vmem:[#allocation3 + $0x90] sm:$0xf] %v31
  %48 = vst [vmem:[#allocation3 + $0xb4] sm:$0xf] %v32
  %49 = vst [vmem:[#allocation3 + $0xd8] sm:$0xf] %v33
  %50 = vst [vmem:[#allocation3 + $0xfc] sm:$0xf] %v34
  %51 = vst [vmem:[#allocation3 + $0x120] sm:$0xf] %v35
  %52 = vst [vmem:[#allocation3 + $0x144] sm:$0xf] %v36
  %53 = vst [vmem:[#allocation3 + $0x168] sm:$0xf] %v37
  %54 = vst [vmem:[#allocation3 + $0x18c] sm:$0xf] %v38
  %55 = vst [vmem:[#allocation3 + $0x1b0] sm:$0xf] %v39
  %56 = vst [vmem:[#allocation3 + $0x1d4] sm:$0xf] %v40
  %57 = vst [vmem:[#allocation3 + $0x1f8] sm:$0xf] %v41
  %58 = vst [vmem:[#allocation3 + $0x21c] sm:$0xf] %v42
  %s59 = scalar_lea.vmem %s0, 72
  %v60 = vld [vmem:[%s59] sm:$0xf]
  %v61 = vld [vmem:[%s59 + $0x8] sm:$0xf]
  %v62 = vld [vmem:[%s59 + $0x10] sm:$0xf]
  %v63 = vld [vmem:[%s59 + $0x18] sm:$0xf]
  %v64 = vld [vmem:[%s59 + $0x20] sm:$0xf]
  %v65 = vld [vmem:[%s59 + $0x28] sm:$0xf]
  %v66 = vld [vmem:[%s59 + $0x30] sm:$0xf]
  %v67 = vld [vmem:[%s59 + $0x38] sm:$0xf]
  %v68 = vld [vmem:[%s59 + $0x120] sm:$0xf]
  %v69 = vld [vmem:[%s59 + $0x128] sm:$0xf]
  %v70 = vld [vmem:[%s59 + $0x130] sm:$0xf]
  %v71 = vld [vmem:[%s59 + $0x138] sm:$0xf]
  %v72 = vld [vmem:[%s59 + $0x140] sm:$0xf]
  %v73 = vld [vmem:[%s59 + $0x148] sm:$0xf]
  %v74 = vld [vmem:[%s59 + $0x150] sm:$0xf]
  %v75 = vld [vmem:[%s59 + $0x158] sm:$0xf]
  %76 = vst [vmem:[#allocation3 + $0x4] sm:$0xf] %v60
  %77 = vst [vmem:[#allocation3 + $0x28] sm:$0xf] %v61
  %78 = vst [vmem:[#allocation3 + $0x4c] sm:$0xf] %v62
  %79 = vst [vmem:[#allocation3 + $0x70] sm:$0xf] %v63
  %80 = vst [vmem:[#allocation3 + $0x94] sm:$0xf] %v64
  %81 = vst [vmem:[#allocation3 + $0xb8] sm:$0xf] %v65
  %82 = vst [vmem:[#allocation3 + $0xdc] sm:$0xf] %v66
  %83 = vst [vmem:[#allocation3 + $0x100] sm:$0xf] %v67
  %84 = vst [vmem:[#allocation3 + $0x124] sm:$0xf] %v68
  %85 = vst [vmem:[#allocation3 + $0x148] sm:$0xf] %v69
  %86 = vst [vmem:[#allocation3 + $0x16c] sm:$0xf] %v70
  %87 = vst [vmem:[#allocation3 + $0x190] sm:$0xf] %v71
  %88 = vst [vmem:[#allocation3 + $0x1b4] sm:$0xf] %v72
  %89 = vst [vmem:[#allocation3 + $0x1d8] sm:$0xf] %v73
  %90 = vst [vmem:[#allocation3 + $0x1fc] sm:$0xf] %v74
  %91 = vst [vmem:[#allocation3 + $0x220] sm:$0xf] %v75
  %v92 = vld [vmem:[%s0] sm:$0xf]
  %v93 = vld [vmem:[%s0 + $0x4] sm:$0x1]
  %v94 = vld [vmem:[%s0 + $0x8] sm:$0xf]
  %v95 = vld [vmem:[%s0 + $0xc] sm:$0x1]
  %v96 = vld [vmem:[%s0 + $0x10] sm:$0xf]
  %v97 = vld [vmem:[%s0 + $0x14] sm:$0x1]
  %v98 = vld [vmem:[%s0 + $0x18] sm:$0xf]
  %v99 = vld [vmem:[%s0 + $0x1c] sm:$0x1]
  %v100 = vld [vmem:[%s0 + $0x20] sm:$0xf]
  %v101 = vld [vmem:[%s0 + $0x24] sm:$0x1]
  %v102 = vld [vmem:[%s0 + $0x28] sm:$0xf]
  %v103 = vld [vmem:[%s0 + $0x2c] sm:$0x1]
  %v104 = vld [vmem:[%s0 + $0x30] sm:$0xf]
  %v105 = vld [vmem:[%s0 + $0x34] sm:$0x1]
  %v106 = vld [vmem:[%s0 + $0x38] sm:$0xf]
  %v107 = vld [vmem:[%s0 + $0x3c] sm:$0x1]
  %v108 = vld [vmem:[%s0 + $0x120] sm:$0xf]
  %v109 = vld [vmem:[%s0 + $0x124] sm:$0x1]
  %v110 = vld [vmem:[%s0 + $0x128] sm:$0xf]
  %v111 = vld [vmem:[%s0 + $0x12c] sm:$0x1]
  %v112 = vld [vmem:[%s0 + $0x130] sm:$0xf]
  %v113 = vld [vmem:[%s0 + $0x134] sm:$0x1]
  %v114 = vld [vmem:[%s0 + $0x138] sm:$0xf]
  %v115 = vld [vmem:[%s0 + $0x13c] sm:$0x1]
  %v116 = vld [vmem:[%s0 + $0x140] sm:$0xf]
  %v117 = vld [vmem:[%s0 + $0x144] sm:$0x1]
  %v118 = vld [vmem:[%s0 + $0x148] sm:$0xf]
  %v119 = vld [vmem:[%s0 + $0x14c] sm:$0x1]
  %v120 = vld [vmem:[%s0 + $0x150] sm:$0xf]
  %v121 = vld [vmem:[%s0 + $0x154] sm:$0x1]
  %v122 = vld [vmem:[%s0 + $0x158] sm:$0xf]
  %v123 = vld [vmem:[%s0 + $0x15c] sm:$0x1]
  %vm124 = vsmask.f32 3328
  %vm125 = vsmask.f32 7440
  %vm126 = vmor %vm124, %vm125
  %v128 = vshrl.u32 %v92, 16
  %v130 = vrot.slane %v128, 4
  %v131 = vshll.u32 %v92, 16
  %v133 = vrot.slane %v131, 5
  %v134 = vor.u32 %v130, %v133
  %v135 = vrot.slane %v134, 4
  %v137 = vshll.u32 %v93, 16
  %v139 = vrot.slane %v137, 5
  %v140 = vsel %vm126, %v135, %v139
  %v142 = vshrl.u32 %v94, 16
  %v144 = vrot.slane %v142, 4
  %v145 = vshll.u32 %v94, 16
  %v147 = vrot.slane %v145, 5
  %v148 = vor.u32 %v144, %v147
  %v149 = vrot.slane %v148, 4
  %v151 = vshll.u32 %v95, 16
  %v153 = vrot.slane %v151, 5
  %v154 = vsel %vm126, %v149, %v153
  %v156 = vshrl.u32 %v96, 16
  %v158 = vrot.slane %v156, 4
  %v159 = vshll.u32 %v96, 16
  %v161 = vrot.slane %v159, 5
  %v162 = vor.u32 %v158, %v161
  %v163 = vrot.slane %v162, 4
  %v165 = vshll.u32 %v97, 16
  %v167 = vrot.slane %v165, 5
  %v168 = vsel %vm126, %v163, %v167
  %v170 = vshrl.u32 %v98, 16
  %v172 = vrot.slane %v170, 4
  %v173 = vshll.u32 %v98, 16
  %v175 = vrot.slane %v173, 5
  %v176 = vor.u32 %v172, %v175
  %v177 = vrot.slane %v176, 4
  %v179 = vshll.u32 %v99, 16
  %v181 = vrot.slane %v179, 5
  %v182 = vsel %vm126, %v177, %v181
  %v184 = vshrl.u32 %v100, 16
  %v186 = vrot.slane %v184, 4
  %v187 = vshll.u32 %v100, 16
  %v189 = vrot.slane %v187, 5
  %v190 = vor.u32 %v186, %v189
  %v191 = vrot.slane %v190, 4
  %v193 = vshll.u32 %v101, 16
  %v195 = vrot.slane %v193, 5
  %v196 = vsel %vm126, %v191, %v195
  %v198 = vshrl.u32 %v102, 16
  %v200 = vrot.slane %v198, 4
  %v201 = vshll.u32 %v102, 16
  %v203 = vrot.slane %v201, 5
  %v204 = vor.u32 %v200, %v203
  %v205 = vrot.slane %v204, 4
  %v207 = vshll.u32 %v103, 16
  %v209 = vrot.slane %v207, 5
  %v210 = vsel %vm126, %v205, %v209
  %v212 = vshrl.u32 %v104, 16
  %v214 = vrot.slane %v212, 4
  %v215 = vshll.u32 %v104, 16
  %v217 = vrot.slane %v215, 5
  %v218 = vor.u32 %v214, %v217
  %v219 = vrot.slane %v218, 4
  %v221 = vshll.u32 %v105, 16
  %v223 = vrot.slane %v221, 5
  %v224 = vsel %vm126, %v219, %v223
  %v226 = vshrl.u32 %v106, 16
  %v228 = vrot.slane %v226, 4
  %v229 = vshll.u32 %v106, 16
  %v231 = vrot.slane %v229, 5
  %v232 = vor.u32 %v228, %v231
  %v233 = vrot.slane %v232, 4
  %v235 = vshll.u32 %v107, 16
  %v237 = vrot.slane %v235, 5
  %v238 = vsel %vm126, %v233, %v237
  %v240 = vshrl.u32 %v108, 16
  %v242 = vrot.slane %v240, 4
  %v243 = vshll.u32 %v108, 16
  %v245 = vrot.slane %v243, 5
  %v246 = vor.u32 %v242, %v245
  %v247 = vrot.slane %v246, 4
  %v249 = vshll.u32 %v109, 16
  %v251 = vrot.slane %v249, 5
  %v252 = vsel %vm126, %v247, %v251
  %v254 = vshrl.u32 %v110, 16
  %v256 = vrot.slane %v254, 4
  %v257 = vshll.u32 %v110, 16
  %v259 = vrot.slane %v257, 5
  %v260 = vor.u32 %v256, %v259
  %v261 = vrot.slane %v260, 4
  %v263 = vshll.u32 %v111, 16
  %v265 = vrot.slane %v263, 5
  %v266 = vsel %vm126, %v261, %v265
  %v268 = vshrl.u32 %v112, 16
  %v270 = vrot.slane %v268, 4
  %v271 = vshll.u32 %v112, 16
  %v273 = vrot.slane %v271, 5
  %v274 = vor.u32 %v270, %v273
  %v275 = vrot.slane %v274, 4
  %v277 = vshll.u32 %v113, 16
  %v279 = vrot.slane %v277, 5
  %v280 = vsel %vm126, %v275, %v279
  %v282 = vshrl.u32 %v114, 16
  %v284 = vrot.slane %v282, 4
  %v285 = vshll.u32 %v114, 16
  %v287 = vrot.slane %v285, 5
  %v288 = vor.u32 %v284, %v287
  %v289 = vrot.slane %v288, 4
  %v291 = vshll.u32 %v115, 16
  %v293 = vrot.slane %v291, 5
  %v294 = vsel %vm126, %v289, %v293
  %v296 = vshrl.u32 %v116, 16
  %v298 = vrot.slane %v296, 4
  %v299 = vshll.u32 %v116, 16
  %v301 = vrot.slane %v299, 5
  %v302 = vor.u32 %v298, %v301
  %v303 = vrot.slane %v302, 4
  %v305 = vshll.u32 %v117, 16
  %v307 = vrot.slane %v305, 5
  %v308 = vsel %vm126, %v303, %v307
  %v310 = vshrl.u32 %v118, 16
  %v312 = vrot.slane %v310, 4
  %v313 = vshll.u32 %v118, 16
  %v315 = vrot.slane %v313, 5
  %v316 = vor.u32 %v312, %v315
  %v317 = vrot.slane %v316, 4
  %v319 = vshll.u32 %v119, 16
  %v321 = vrot.slane %v319, 5
  %v322 = vsel %vm126, %v317, %v321
  %v324 = vshrl.u32 %v120, 16
  %v326 = vrot.slane %v324, 4
  %v327 = vshll.u32 %v120, 16
  %v329 = vrot.slane %v327, 5
  %v330 = vor.u32 %v326, %v329
  %v331 = vrot.slane %v330, 4
  %v333 = vshll.u32 %v121, 16
  %v335 = vrot.slane %v333, 5
  %v336 = vsel %vm126, %v331, %v335
  %v338 = vshrl.u32 %v122, 16
  %v340 = vrot.slane %v338, 4
  %v341 = vshll.u32 %v122, 16
  %v343 = vrot.slane %v341, 5
  %v344 = vor.u32 %v340, %v343
  %v345 = vrot.slane %v344, 4
  %v347 = vshll.u32 %v123, 16
  %v349 = vrot.slane %v347, 5
  %v350 = vsel %vm126, %v345, %v349
  %367 = vst [vmem:[#allocation3 + $0x8] sm:$0xf] %v140
  %368 = vst [vmem:[#allocation3 + $0x2c] sm:$0xf] %v154
  %369 = vst [vmem:[#allocation3 + $0x50] sm:$0xf] %v168
  %370 = vst [vmem:[#allocation3 + $0x74] sm:$0xf] %v182
  %371 = vst [vmem:[#allocation3 + $0x98] sm:$0xf] %v196
  %372 = vst [vmem:[#allocation3 + $0xbc] sm:$0xf] %v210
  %373 = vst [vmem:[#allocation3 + $0xe0] sm:$0xf] %v224
  %374 = vst [vmem:[#allocation3 + $0x104] sm:$0xf] %v238
  %375 = vst [vmem:[#allocation3 + $0x128] sm:$0xf] %v252
  %376 = vst [vmem:[#allocation3 + $0x14c] sm:$0xf] %v266
  %377 = vst [vmem:[#allocation3 + $0x170] sm:$0xf] %v280
  %378 = vst [vmem:[#allocation3 + $0x194] sm:$0xf] %v294
  %379 = vst [vmem:[#allocation3 + $0x1b8] sm:$0xf] %v308
  %380 = vst [vmem:[#allocation3 + $0x1dc] sm:$0xf] %v322
  %381 = vst [vmem:[#allocation3 + $0x200] sm:$0xf] %v336
  %382 = vst [vmem:[#allocation3 + $0x224] sm:$0xf] %v350
  %s383 = scalar_lea.vmem %s0, 144
  %v384 = vld [vmem:[%s383] sm:$0xf]
  %v385 = vld [vmem:[%s383 + $0x8] sm:$0xf]
  %v386 = vld [vmem:[%s383 + $0x10] sm:$0xf]
  %v387 = vld [vmem:[%s383 + $0x18] sm:$0xf]
  %v388 = vld [vmem:[%s383 + $0x20] sm:$0xf]
  %v389 = vld [vmem:[%s383 + $0x28] sm:$0xf]
  %v390 = vld [vmem:[%s383 + $0x30] sm:$0xf]
  %v391 = vld [vmem:[%s383 + $0x38] sm:$0xf]
  %v392 = vld [vmem:[%s383 + $0x120] sm:$0xf]
  %v393 = vld [vmem:[%s383 + $0x128] sm:$0xf]
  %v394 = vld [vmem:[%s383 + $0x130] sm:$0xf]
  %v395 = vld [vmem:[%s383 + $0x138] sm:$0xf]
  %v396 = vld [vmem:[%s383 + $0x140] sm:$0xf]
  %v397 = vld [vmem:[%s383 + $0x148] sm:$0xf]
  %v398 = vld [vmem:[%s383 + $0x150] sm:$0xf]
  %v399 = vld [vmem:[%s383 + $0x158] sm:$0xf]
  %400 = vst [vmem:[#allocation3 + $0xc] sm:$0xf] %v384
  %401 = vst [vmem:[#allocation3 + $0x30] sm:$0xf] %v385
  %402 = vst [vmem:[#allocation3 + $0x54] sm:$0xf] %v386
  %403 = vst [vmem:[#allocation3 + $0x78] sm:$0xf] %v387
  %404 = vst [vmem:[#allocation3 + $0x9c] sm:$0xf] %v388
  %405 = vst [vmem:[#allocation3 + $0xc0] sm:$0xf] %v389
  %406 = vst [vmem:[#allocation3 + $0xe4] sm:$0xf] %v390
  %407 = vst [vmem:[#allocation3 + $0x108] sm:$0xf] %v391
  %408 = vst [vmem:[#allocation3 + $0x12c] sm:$0xf] %v392
  %409 = vst [vmem:[#allocation3 + $0x150] sm:$0xf] %v393
  %410 = vst [vmem:[#allocation3 + $0x174] sm:$0xf] %v394
  %411 = vst [vmem:[#allocation3 + $0x198] sm:$0xf] %v395
  %412 = vst [vmem:[#allocation3 + $0x1bc] sm:$0xf] %v396
  %413 = vst [vmem:[#allocation3 + $0x1e0] sm:$0xf] %v397
  %414 = vst [vmem:[#allocation3 + $0x204] sm:$0xf] %v398
  %415 = vst [vmem:[#allocation3 + $0x228] sm:$0xf] %v399
  %s416 = scalar_lea.vmem %s0, 216
  %v417 = vld [vmem:[%s416] sm:$0xf]
  %v418 = vld [vmem:[%s416 + $0x8] sm:$0xf]
  %v419 = vld [vmem:[%s416 + $0x10] sm:$0xf]
  %v420 = vld [vmem:[%s416 + $0x18] sm:$0xf]
  %v421 = vld [vmem:[%s416 + $0x20] sm:$0xf]
  %v422 = vld [vmem:[%s416 + $0x28] sm:$0xf]
  %v423 = vld [vmem:[%s416 + $0x30] sm:$0xf]
  %v424 = vld [vmem:[%s416 + $0x38] sm:$0xf]
  %v425 = vld [vmem:[%s416 + $0x120] sm:$0xf]
  %v426 = vld [vmem:[%s416 + $0x128] sm:$0xf]
  %v427 = vld [vmem:[%s416 + $0x130] sm:$0xf]
  %v428 = vld [vmem:[%s416 + $0x138] sm:$0xf]
  %v429 = vld [vmem:[%s416 + $0x140] sm:$0xf]
  %v430 = vld [vmem:[%s416 + $0x148] sm:$0xf]
  %v431 = vld [vmem:[%s416 + $0x150] sm:$0xf]
  %v432 = vld [vmem:[%s416 + $0x158] sm:$0xf]
  %433 = vst [vmem:[#allocation3 + $0x10] sm:$0xf] %v417
  %434 = vst [vmem:[#allocation3 + $0x34] sm:$0xf] %v418
  %435 = vst [vmem:[#allocation3 + $0x58] sm:$0xf] %v419
  %436 = vst [vmem:[#allocation3 + $0x7c] sm:$0xf] %v420
  %437 = vst [vmem:[#allocation3 + $0xa0] sm:$0xf] %v421
  %438 = vst [vmem:[#allocation3 + $0xc4] sm:$0xf] %v422
  %439 = vst [vmem:[#allocation3 + $0xe8] sm:$0xf] %v423
  %440 = vst [vmem:[#allocation3 + $0x10c] sm:$0xf] %v424
  %441 = vst [vmem:[#allocation3 + $0x130] sm:$0xf] %v425
  %442 = vst [vmem:[#allocation3 + $0x154] sm:$0xf] %v426
  %443 = vst [vmem:[#allocation3 + $0x178] sm:$0xf] %v427
  %444 = vst [vmem:[#allocation3 + $0x19c] sm:$0xf] %v428
  %445 = vst [vmem:[#allocation3 + $0x1c0] sm:$0xf] %v429
  %446 = vst [vmem:[#allocation3 + $0x1e4] sm:$0xf] %v430
  %447 = vst [vmem:[#allocation3 + $0x208] sm:$0xf] %v431
  %448 = vst [vmem:[#allocation3 + $0x22c] sm:$0xf] %v432
  %v449 = vld [vmem:[%s383] sm:$0xf]
  %v450 = vld [vmem:[%s383 + $0x4] sm:$0x1]
  %v451 = vld [vmem:[%s383 + $0x8] sm:$0xf]
  %v452 = vld [vmem:[%s383 + $0xc] sm:$0x1]
  %v453 = vld [vmem:[%s383 + $0x10] sm:$0xf]
  %v454 = vld [vmem:[%s383 + $0x14] sm:$0x1]
  %v455 = vld [vmem:[%s383 + $0x18] sm:$0xf]
  %v456 = vld [vmem:[%s383 + $0x1c] sm:$0x1]
  %v457 = vld [vmem:[%s383 + $0x20] sm:$0xf]
  %v458 = vld [vmem:[%s383 + $0x24] sm:$0x1]
  %v459 = vld [vmem:[%s383 + $0x28] sm:$0xf]
  %v460 = vld [vmem:[%s383 + $0x2c] sm:$0x1]
  %v461 = vld [vmem:[%s383 + $0x30] sm:$0xf]
  %v462 = vld [vmem:[%s383 + $0x34] sm:$0x1]
  %v463 = vld [vmem:[%s383 + $0x38] sm:$0xf]
  %v464 = vld [vmem:[%s383 + $0x3c] sm:$0x1]
  %v465 = vld [vmem:[%s383 + $0x120] sm:$0xf]
  %v466 = vld [vmem:[%s383 + $0x124] sm:$0x1]
  %v467 = vld [vmem:[%s383 + $0x128] sm:$0xf]
  %v468 = vld [vmem:[%s383 + $0x12c] sm:$0x1]
  %v469 = vld [vmem:[%s383 + $0x130] sm:$0xf]
  %v470 = vld [vmem:[%s383 + $0x134] sm:$0x1]
  %v471 = vld [vmem:[%s383 + $0x138] sm:$0xf]
  %v472 = vld [vmem:[%s383 + $0x13c] sm:$0x1]
  %v473 = vld [vmem:[%s383 + $0x140] sm:$0xf]
  %v474 = vld [vmem:[%s383 + $0x144] sm:$0x1]
  %v475 = vld [vmem:[%s383 + $0x148] sm:$0xf]
  %v476 = vld [vmem:[%s383 + $0x14c] sm:$0x1]
  %v477 = vld [vmem:[%s383 + $0x150] sm:$0xf]
  %v478 = vld [vmem:[%s383 + $0x154] sm:$0x1]
  %v479 = vld [vmem:[%s383 + $0x158] sm:$0xf]
  %v480 = vld [vmem:[%s383 + $0x15c] sm:$0x1]
  %v482 = vshrl.u32 %v449, 16
  %v484 = vrot.slane %v482, 4
  %v485 = vshll.u32 %v449, 16
  %v487 = vrot.slane %v485, 5
  %v488 = vor.u32 %v484, %v487
  %v489 = vrot.slane %v488, 4
  %v491 = vshll.u32 %v450, 16
  %v493 = vrot.slane %v491, 5
  %v494 = vsel %vm126, %v489, %v493
  %v496 = vshrl.u32 %v451, 16
  %v498 = vrot.slane %v496, 4
  %v499 = vshll.u32 %v451, 16
  %v501 = vrot.slane %v499, 5
  %v502 = vor.u32 %v498, %v501
  %v503 = vrot.slane %v502, 4
  %v505 = vshll.u32 %v452, 16
  %v507 = vrot.slane %v505, 5
  %v508 = vsel %vm126, %v503, %v507
  %v510 = vshrl.u32 %v453, 16
  %v512 = vrot.slane %v510, 4
  %v513 = vshll.u32 %v453, 16
  %v515 = vrot.slane %v513, 5
  %v516 = vor.u32 %v512, %v515
  %v517 = vrot.slane %v516, 4
  %v519 = vshll.u32 %v454, 16
  %v521 = vrot.slane %v519, 5
  %v522 = vsel %vm126, %v517, %v521
  %v524 = vshrl.u32 %v455, 16
  %v526 = vrot.slane %v524, 4
  %v527 = vshll.u32 %v455, 16
  %v529 = vrot.slane %v527, 5
  %v530 = vor.u32 %v526, %v529
  %v531 = vrot.slane %v530, 4
  %v533 = vshll.u32 %v456, 16
  %v535 = vrot.slane %v533, 5
  %v536 = vsel %vm126, %v531, %v535
  %v538 = vshrl.u32 %v457, 16
  %v540 = vrot.slane %v538, 4
  %v541 = vshll.u32 %v457, 16
  %v543 = vrot.slane %v541, 5
  %v544 = vor.u32 %v540, %v543
  %v545 = vrot.slane %v544, 4
  %v547 = vshll.u32 %v458, 16
  %v549 = vrot.slane %v547, 5
  %v550 = vsel %vm126, %v545, %v549
  %v552 = vshrl.u32 %v459, 16
  %v554 = vrot.slane %v552, 4
  %v555 = vshll.u32 %v459, 16
  %v557 = vrot.slane %v555, 5
  %v558 = vor.u32 %v554, %v557
  %v559 = vrot.slane %v558, 4
  %v561 = vshll.u32 %v460, 16
  %v563 = vrot.slane %v561, 5
  %v564 = vsel %vm126, %v559, %v563
  %v566 = vshrl.u32 %v461, 16
  %v568 = vrot.slane %v566, 4
  %v569 = vshll.u32 %v461, 16
  %v571 = vrot.slane %v569, 5
  %v572 = vor.u32 %v568, %v571
  %v573 = vrot.slane %v572, 4
  %v575 = vshll.u32 %v462, 16
  %v577 = vrot.slane %v575, 5
  %v578 = vsel %vm126, %v573, %v577
  %v580 = vshrl.u32 %v463, 16
  %v582 = vrot.slane %v580, 4
  %v583 = vshll.u32 %v463, 16
  %v585 = vrot.slane %v583, 5
  %v586 = vor.u32 %v582, %v585
  %v587 = vrot.slane %v586, 4
  %v589 = vshll.u32 %v464, 16
  %v591 = vrot.slane %v589, 5
  %v592 = vsel %vm126, %v587, %v591
  %v594 = vshrl.u32 %v465, 16
  %v596 = vrot.slane %v594, 4
  %v597 = vshll.u32 %v465, 16
  %v599 = vrot.slane %v597, 5
  %v600 = vor.u32 %v596, %v599
  %v601 = vrot.slane %v600, 4
  %v603 = vshll.u32 %v466, 16
  %v605 = vrot.slane %v603, 5
  %v606 = vsel %vm126, %v601, %v605
  %v608 = vshrl.u32 %v467, 16
  %v610 = vrot.slane %v608, 4
  %v611 = vshll.u32 %v467, 16
  %v613 = vrot.slane %v611, 5
  %v614 = vor.u32 %v610, %v613
  %v615 = vrot.slane %v614, 4
  %v617 = vshll.u32 %v468, 16
  %v619 = vrot.slane %v617, 5
  %v620 = vsel %vm126, %v615, %v619
  %v622 = vshrl.u32 %v469, 16
  %v624 = vrot.slane %v622, 4
  %v625 = vshll.u32 %v469, 16
  %v627 = vrot.slane %v625, 5
  %v628 = vor.u32 %v624, %v627
  %v629 = vrot.slane %v628, 4
  %v631 = vshll.u32 %v470, 16
  %v633 = vrot.slane %v631, 5
  %v634 = vsel %vm126, %v629, %v633
  %v636 = vshrl.u32 %v471, 16
  %v638 = vrot.slane %v636, 4
  %v639 = vshll.u32 %v471, 16
  %v641 = vrot.slane %v639, 5
  %v642 = vor.u32 %v638, %v641
  %v643 = vrot.slane %v642, 4
  %v645 = vshll.u32 %v472, 16
  %v647 = vrot.slane %v645, 5
  %v648 = vsel %vm126, %v643, %v647
  %v650 = vshrl.u32 %v473, 16
  %v652 = vrot.slane %v650, 4
  %v653 = vshll.u32 %v473, 16
  %v655 = vrot.slane %v653, 5
  %v656 = vor.u32 %v652, %v655
  %v657 = vrot.slane %v656, 4
  %v659 = vshll.u32 %v474, 16
  %v661 = vrot.slane %v659, 5
  %v662 = vsel %vm126, %v657, %v661
  %v664 = vshrl.u32 %v475, 16
  %v666 = vrot.slane %v664, 4
  %v667 = vshll.u32 %v475, 16
  %v669 = vrot.slane %v667, 5
  %v670 = vor.u32 %v666, %v669
  %v671 = vrot.slane %v670, 4
  %v673 = vshll.u32 %v476, 16
  %v675 = vrot.slane %v673, 5
  %v676 = vsel %vm126, %v671, %v675
  %v678 = vshrl.u32 %v477, 16
  %v680 = vrot.slane %v678, 4
  %v681 = vshll.u32 %v477, 16
  %v683 = vrot.slane %v681, 5
  %v684 = vor.u32 %v680, %v683
  %v685 = vrot.slane %v684, 4
  %v687 = vshll.u32 %v478, 16
  %v689 = vrot.slane %v687, 5
  %v690 = vsel %vm126, %v685, %v689
  %v692 = vshrl.u32 %v479, 16
  %v694 = vrot.slane %v692, 4
  %v695 = vshll.u32 %v479, 16
  %v697 = vrot.slane %v695, 5
  %v698 = vor.u32 %v694, %v697
  %v699 = vrot.slane %v698, 4
  %v701 = vshll.u32 %v480, 16
  %v703 = vrot.slane %v701, 5
  %v704 = vsel %vm126, %v699, %v703
  %721 = vst [vmem:[#allocation3 + $0x14] sm:$0xf] %v494
  %722 = vst [vmem:[#allocation3 + $0x38] sm:$0xf] %v508
  %723 = vst [vmem:[#allocation3 + $0x5c] sm:$0xf] %v522
  %724 = vst [vmem:[#allocation3 + $0x80] sm:$0xf] %v536
  %725 = vst [vmem:[#allocation3 + $0xa4] sm:$0xf] %v550
  %726 = vst [vmem:[#allocation3 + $0xc8] sm:$0xf] %v564
  %727 = vst [vmem:[#allocation3 + $0xec] sm:$0xf] %v578
  %728 = vst [vmem:[#allocation3 + $0x110] sm:$0xf] %v592
  %729 = vst [vmem:[#allocation3 + $0x134] sm:$0xf] %v606
  %730 = vst [vmem:[#allocation3 + $0x158] sm:$0xf] %v620
  %731 = vst [vmem:[#allocation3 + $0x17c] sm:$0xf] %v634
  %732 = vst [vmem:[#allocation3 + $0x1a0] sm:$0xf] %v648
  %733 = vst [vmem:[#allocation3 + $0x1c4] sm:$0xf] %v662
  %734 = vst [vmem:[#allocation3 + $0x1e8] sm:$0xf] %v676
  %735 = vst [vmem:[#allocation3 + $0x20c] sm:$0xf] %v690
  %736 = vst [vmem:[#allocation3 + $0x230] sm:$0xf] %v704
  %s737 = scalar_lea.vmem %s0, 8
  %v738 = vld [vmem:[%s737] sm:$0xf]
  %v739 = vld [vmem:[%s737 + $0x8] sm:$0xf]
  %v740 = vld [vmem:[%s737 + $0x10] sm:$0xf]
  %v741 = vld [vmem:[%s737 + $0x18] sm:$0xf]
  %v742 = vld [vmem:[%s737 + $0x20] sm:$0xf]
  %v743 = vld [vmem:[%s737 + $0x28] sm:$0xf]
  %v744 = vld [vmem:[%s737 + $0x30] sm:$0xf]
  %v745 = vld [vmem:[%s737 + $0x38] sm:$0xf]
  %v746 = vld [vmem:[%s737 + $0x120] sm:$0xf]
  %v747 = vld [vmem:[%s737 + $0x128] sm:$0xf]
  %v748 = vld [vmem:[%s737 + $0x130] sm:$0xf]
  %v749 = vld [vmem:[%s737 + $0x138] sm:$0xf]
  %v750 = vld [vmem:[%s737 + $0x140] sm:$0xf]
  %v751 = vld [vmem:[%s737 + $0x148] sm:$0xf]
  %v752 = vld [vmem:[%s737 + $0x150] sm:$0xf]
  %v753 = vld [vmem:[%s737 + $0x158] sm:$0xf]
  %754 = vst [vmem:[#allocation3 + $0x18] sm:$0xf] %v738
  %755 = vst [vmem:[#allocation3 + $0x3c] sm:$0xf] %v739
  %756 = vst [vmem:[#allocation3 + $0x60] sm:$0xf] %v740
  %757 = vst [vmem:[#allocation3 + $0x84] sm:$0xf] %v741
  %758 = vst [vmem:[#allocation3 + $0xa8] sm:$0xf] %v742
  %759 = vst [vmem:[#allocation3 + $0xcc] sm:$0xf] %v743
  %760 = vst [vmem:[#allocation3 + $0xf0] sm:$0xf] %v744
  %761 = vst [vmem:[#allocation3 + $0x114] sm:$0xf] %v745
  %762 = vst [vmem:[#allocation3 + $0x138] sm:$0xf] %v746
  %763 = vst [vmem:[#allocation3 + $0x15c] sm:$0xf] %v747
  %764 = vst [vmem:[#allocation3 + $0x180] sm:$0xf] %v748
  %765 = vst [vmem:[#allocation3 + $0x1a4] sm:$0xf] %v749
  %766 = vst [vmem:[#allocation3 + $0x1c8] sm:$0xf] %v750
  %767 = vst [vmem:[#allocation3 + $0x1ec] sm:$0xf] %v751
  %768 = vst [vmem:[#allocation3 + $0x210] sm:$0xf] %v752
  %769 = vst [vmem:[#allocation3 + $0x234] sm:$0xf] %v753
  %s770 = scalar_lea.vmem %s0, 80
  %v771 = vld [vmem:[%s770] sm:$0xf]
  %v772 = vld [vmem:[%s770 + $0x8] sm:$0xf]
  %v773 = vld [vmem:[%s770 + $0x10] sm:$0xf]
  %v774 = vld [vmem:[%s770 + $0x18] sm:$0xf]
  %v775 = vld [vmem:[%s770 + $0x20] sm:$0xf]
  %v776 = vld [vmem:[%s770 + $0x28] sm:$0xf]
  %v777 = vld [vmem:[%s770 + $0x30] sm:$0xf]
  %v778 = vld [vmem:[%s770 + $0x38] sm:$0xf]
  %v779 = vld [vmem:[%s770 + $0x120] sm:$0xf]
  %v780 = vld [vmem:[%s770 + $0x128] sm:$0xf]
  %v781 = vld [vmem:[%s770 + $0x130] sm:$0xf]
  %v782 = vld [vmem:[%s770 + $0x138] sm:$0xf]
  %v783 = vld [vmem:[%s770 + $0x140] sm:$0xf]
  %v784 = vld [vmem:[%s770 + $0x148] sm:$0xf]
  %v785 = vld [vmem:[%s770 + $0x150] sm:$0xf]
  %v786 = vld [vmem:[%s770 + $0x158] sm:$0xf]
  %787 = vst [vmem:[#allocation3 + $0x1c] sm:$0xf] %v771
  %788 = vst [vmem:[#allocation3 + $0x40] sm:$0xf] %v772
  %789 = vst [vmem:[#allocation3 + $0x64] sm:$0xf] %v773
  %790 = vst [vmem:[#allocation3 + $0x88] sm:$0xf] %v774
  %791 = vst [vmem:[#allocation3 + $0xac] sm:$0xf] %v775
  %792 = vst [vmem:[#allocation3 + $0xd0] sm:$0xf] %v776
  %793 = vst [vmem:[#allocation3 + $0xf4] sm:$0xf] %v777
  %794 = vst [vmem:[#allocation3 + $0x118] sm:$0xf] %v778
  %795 = vst [vmem:[#allocation3 + $0x13c] sm:$0xf] %v779
  %796 = vst [vmem:[#allocation3 + $0x160] sm:$0xf] %v780
  %797 = vst [vmem:[#allocation3 + $0x184] sm:$0xf] %v781
  %798 = vst [vmem:[#allocation3 + $0x1a8] sm:$0xf] %v782
  %799 = vst [vmem:[#allocation3 + $0x1cc] sm:$0xf] %v783
  %800 = vst [vmem:[#allocation3 + $0x1f0] sm:$0xf] %v784
  %801 = vst [vmem:[#allocation3 + $0x214] sm:$0xf] %v785
  %802 = vst [vmem:[#allocation3 + $0x238] sm:$0xf] %v786
  %v803 = vld [vmem:[%s737] sm:$0xf]
  %v804 = vld [vmem:[%s737 + $0x4] sm:$0x1]
  %v805 = vld [vmem:[%s737 + $0x8] sm:$0xf]
  %v806 = vld [vmem:[%s737 + $0xc] sm:$0x1]
  %v807 = vld [vmem:[%s737 + $0x10] sm:$0xf]
  %v808 = vld [vmem:[%s737 + $0x14] sm:$0x1]
  %v809 = vld [vmem:[%s737 + $0x18] sm:$0xf]
  %v810 = vld [vmem:[%s737 + $0x1c] sm:$0x1]
  %v811 = vld [vmem:[%s737 + $0x20] sm:$0xf]
  %v812 = vld [vmem:[%s737 + $0x24] sm:$0x1]
  %v813 = vld [vmem:[%s737 + $0x28] sm:$0xf]
  %v814 = vld [vmem:[%s737 + $0x2c] sm:$0x1]
  %v815 = vld [vmem:[%s737 + $0x30] sm:$0xf]
  %v816 = vld [vmem:[%s737 + $0x34] sm:$0x1]
  %v817 = vld [vmem:[%s737 + $0x38] sm:$0xf]
  %v818 = vld [vmem:[%s737 + $0x3c] sm:$0x1]
  %v819 = vld [vmem:[%s737 + $0x120] sm:$0xf]
  %v820 = vld [vmem:[%s737 + $0x124] sm:$0x1]
  %v821 = vld [vmem:[%s737 + $0x128] sm:$0xf]
  %v822 = vld [vmem:[%s737 + $0x12c] sm:$0x1]
  %v823 = vld [vmem:[%s737 + $0x130] sm:$0xf]
  %v824 = vld [vmem:[%s737 + $0x134] sm:$0x1]
  %v825 = vld [vmem:[%s737 + $0x138] sm:$0xf]
  %v826 = vld [vmem:[%s737 + $0x13c] sm:$0x1]
  %v827 = vld [vmem:[%s737 + $0x140] sm:$0xf]
  %v828 = vld [vmem:[%s737 + $0x144] sm:$0x1]
  %v829 = vld [vmem:[%s737 + $0x148] sm:$0xf]
  %v830 = vld [vmem:[%s737 + $0x14c] sm:$0x1]
  %v831 = vld [vmem:[%s737 + $0x150] sm:$0xf]
  %v832 = vld [vmem:[%s737 + $0x154] sm:$0x1]
  %v833 = vld [vmem:[%s737 + $0x158] sm:$0xf]
  %v834 = vld [vmem:[%s737 + $0x15c] sm:$0x1]
  %v836 = vshrl.u32 %v803, 16
  %v838 = vrot.slane %v836, 4
  %v839 = vshll.u32 %v803, 16
  %v841 = vrot.slane %v839, 5
  %v842 = vor.u32 %v838, %v841
  %v843 = vrot.slane %v842, 4
  %v845 = vshll.u32 %v804, 16
  %v847 = vrot.slane %v845, 5
  %v848 = vsel %vm126, %v843, %v847
  %v850 = vshrl.u32 %v805, 16
  %v852 = vrot.slane %v850, 4
  %v853 = vshll.u32 %v805, 16
  %v855 = vrot.slane %v853, 5
  %v856 = vor.u32 %v852, %v855
  %v857 = vrot.slane %v856, 4
  %v859 = vshll.u32 %v806, 16
  %v861 = vrot.slane %v859, 5
  %v862 = vsel %vm126, %v857, %v861
  %v864 = vshrl.u32 %v807, 16
  %v866 = vrot.slane %v864, 4
  %v867 = vshll.u32 %v807, 16
  %v869 = vrot.slane %v867, 5
  %v870 = vor.u32 %v866, %v869
  %v871 = vrot.slane %v870, 4
  %v873 = vshll.u32 %v808, 16
  %v875 = vrot.slane %v873, 5
  %v876 = vsel %vm126, %v871, %v875
  %v878 = vshrl.u32 %v809, 16
  %v880 = vrot.slane %v878, 4
  %v881 = vshll.u32 %v809, 16
  %v883 = vrot.slane %v881, 5
  %v884 = vor.u32 %v880, %v883
  %v885 = vrot.slane %v884, 4
  %v887 = vshll.u32 %v810, 16
  %v889 = vrot.slane %v887, 5
  %v890 = vsel %vm126, %v885, %v889
  %v892 = vshrl.u32 %v811, 16
  %v894 = vrot.slane %v892, 4
  %v895 = vshll.u32 %v811, 16
  %v897 = vrot.slane %v895, 5
  %v898 = vor.u32 %v894, %v897
  %v899 = vrot.slane %v898, 4
  %v901 = vshll.u32 %v812, 16
  %v903 = vrot.slane %v901, 5
  %v904 = vsel %vm126, %v899, %v903
  %v906 = vshrl.u32 %v813, 16
  %v908 = vrot.slane %v906, 4
  %v909 = vshll.u32 %v813, 16
  %v911 = vrot.slane %v909, 5
  %v912 = vor.u32 %v908, %v911
  %v913 = vrot.slane %v912, 4
  %v915 = vshll.u32 %v814, 16
  %v917 = vrot.slane %v915, 5
  %v918 = vsel %vm126, %v913, %v917
  %v920 = vshrl.u32 %v815, 16
  %v922 = vrot.slane %v920, 4
  %v923 = vshll.u32 %v815, 16
  %v925 = vrot.slane %v923, 5
  %v926 = vor.u32 %v922, %v925
  %v927 = vrot.slane %v926, 4
  %v929 = vshll.u32 %v816, 16
  %v931 = vrot.slane %v929, 5
  %v932 = vsel %vm126, %v927, %v931
  %v934 = vshrl.u32 %v817, 16
  %v936 = vrot.slane %v934, 4
  %v937 = vshll.u32 %v817, 16
  %v939 = vrot.slane %v937, 5
  %v940 = vor.u32 %v936, %v939
  %v941 = vrot.slane %v940, 4
  %v943 = vshll.u32 %v818, 16
  %v945 = vrot.slane %v943, 5
  %v946 = vsel %vm126, %v941, %v945
  %v948 = vshrl.u32 %v819, 16
  %v950 = vrot.slane %v948, 4
  %v951 = vshll.u32 %v819, 16
  %v953 = vrot.slane %v951, 5
  %v954 = vor.u32 %v950, %v953
  %v955 = vrot.slane %v954, 4
  %v957 = vshll.u32 %v820, 16
  %v959 = vrot.slane %v957, 5
  %v960 = vsel %vm126, %v955, %v959
  %v962 = vshrl.u32 %v821, 16
  %v964 = vrot.slane %v962, 4
  %v965 = vshll.u32 %v821, 16
  %v967 = vrot.slane %v965, 5
  %v968 = vor.u32 %v964, %v967
  %v969 = vrot.slane %v968, 4
  %v971 = vshll.u32 %v822, 16
  %v973 = vrot.slane %v971, 5
  %v974 = vsel %vm126, %v969, %v973
  %v976 = vshrl.u32 %v823, 16
  %v978 = vrot.slane %v976, 4
  %v979 = vshll.u32 %v823, 16
  %v981 = vrot.slane %v979, 5
  %v982 = vor.u32 %v978, %v981
  %v983 = vrot.slane %v982, 4
  %v985 = vshll.u32 %v824, 16
  %v987 = vrot.slane %v985, 5
  %v988 = vsel %vm126, %v983, %v987
  %v990 = vshrl.u32 %v825, 16
  %v992 = vrot.slane %v990, 4
  %v993 = vshll.u32 %v825, 16
  %v995 = vrot.slane %v993, 5
  %v996 = vor.u32 %v992, %v995
  %v997 = vrot.slane %v996, 4
  %v999 = vshll.u32 %v826, 16
  %v1001 = vrot.slane %v999, 5
  %v1002 = vsel %vm126, %v997, %v1001
  %v1004 = vshrl.u32 %v827, 16
  %v1006 = vrot.slane %v1004, 4
  %v1007 = vshll.u32 %v827, 16
  %v1009 = vrot.slane %v1007, 5
  %v1010 = vor.u32 %v1006, %v1009
  %v1011 = vrot.slane %v1010, 4
  %v1013 = vshll.u32 %v828, 16
  %v1015 = vrot.slane %v1013, 5
  %v1016 = vsel %vm126, %v1011, %v1015
  %v1018 = vshrl.u32 %v829, 16
  %v1020 = vrot.slane %v1018, 4
  %v1021 = vshll.u32 %v829, 16
  %v1023 = vrot.slane %v1021, 5
  %v1024 = vor.u32 %v1020, %v1023
  %v1025 = vrot.slane %v1024, 4
  %v1027 = vshll.u32 %v830, 16
  %v1029 = vrot.slane %v1027, 5
  %v1030 = vsel %vm126, %v1025, %v1029
  %v1032 = vshrl.u32 %v831, 16
  %v1034 = vrot.slane %v1032, 4
  %v1035 = vshll.u32 %v831, 16
  %v1037 = vrot.slane %v1035, 5
  %v1038 = vor.u32 %v1034, %v1037
  %v1039 = vrot.slane %v1038, 4
  %v1041 = vshll.u32 %v832, 16
  %v1043 = vrot.slane %v1041, 5
  %v1044 = vsel %vm126, %v1039, %v1043
  %v1046 = vshrl.u32 %v833, 16
  %v1048 = vrot.slane %v1046, 4
  %v1049 = vshll.u32 %v833, 16
  %v1051 = vrot.slane %v1049, 5
  %v1052 = vor.u32 %v1048, %v1051
  %v1053 = vrot.slane %v1052, 4
  %v1055 = vshll.u32 %v834, 16
  %v1057 = vrot.slane %v1055, 5
  %v1058 = vsel %vm126, %v1053, %v1057
  %1075 = vst [vmem:[#allocation3 + $0x20] sm:$0xf] %v848
  %1076 = vst [vmem:[#allocation3 + $0x44] sm:$0xf] %v862
  %1077 = vst [vmem:[#allocation3 + $0x68] sm:$0xf] %v876
  %1078 = vst [vmem:[#allocation3 + $0x8c] sm:$0xf] %v890
  %1079 = vst [vmem:[#allocation3 + $0xb0] sm:$0xf] %v904
  %1080 = vst [vmem:[#allocation3 + $0xd4] sm:$0xf] %v918
  %1081 = vst [vmem:[#allocation3 + $0xf8] sm:$0xf] %v932
  %1082 = vst [vmem:[#allocation3 + $0x11c] sm:$0xf] %v946
  %1083 = vst [vmem:[#allocation3 + $0x140] sm:$0xf] %v960
  %1084 = vst [vmem:[#allocation3 + $0x164] sm:$0xf] %v974
  %1085 = vst [vmem:[#allocation3 + $0x188] sm:$0xf] %v988
  %1086 = vst [vmem:[#allocation3 + $0x1ac] sm:$0xf] %v1002
  %1087 = vst [vmem:[#allocation3 + $0x1d0] sm:$0xf] %v1016
  %1088 = vst [vmem:[#allocation3 + $0x1f4] sm:$0xf] %v1030
  %1089 = vst [vmem:[#allocation3 + $0x218] sm:$0xf] %v1044
  %1090 = vst [vmem:[#allocation3 + $0x23c] sm:$0xf] %v1058
  %v1091 = vld [vmem:[#allocation3] sm:$0xff]
  %v1092 = vld [vmem:[#allocation3 + $0x8] sm:$0xff]
  %v1093 = vld [vmem:[#allocation3 + $0x10] sm:$0xff]
  %v1094 = vld [vmem:[#allocation3 + $0x18] sm:$0xff]
  %v1095 = vld [vmem:[#allocation3 + $0x20] sm:$0xf]
  %v1096 = vld [vmem:[#allocation3 + $0x24] sm:$0xff]
  %v1097 = vld [vmem:[#allocation3 + $0x2c] sm:$0xff]
  %v1098 = vld [vmem:[#allocation3 + $0x34] sm:$0xff]
  %v1099 = vld [vmem:[#allocation3 + $0x3c] sm:$0xff]
  %v1100 = vld [vmem:[#allocation3 + $0x44] sm:$0xf]
  %v1101 = vld [vmem:[#allocation3 + $0x48] sm:$0xff]
  %v1102 = vld [vmem:[#allocation3 + $0x50] sm:$0xff]
  %v1103 = vld [vmem:[#allocation3 + $0x58] sm:$0xff]
  %v1104 = vld [vmem:[#allocation3 + $0x60] sm:$0xff]
  %v1105 = vld [vmem:[#allocation3 + $0x68] sm:$0xf]
  %v1106 = vld [vmem:[#allocation3 + $0x6c] sm:$0xff]
  %v1107 = vld [vmem:[#allocation3 + $0x74] sm:$0xff]
  %v1108 = vld [vmem:[#allocation3 + $0x7c] sm:$0xff]
  %v1109 = vld [vmem:[#allocation3 + $0x84] sm:$0xff]
  %v1110 = vld [vmem:[#allocation3 + $0x8c] sm:$0xf]
  %v1111 = vld [vmem:[#allocation3 + $0x90] sm:$0xff]
  %v1112 = vld [vmem:[#allocation3 + $0x98] sm:$0xff]
  %v1113 = vld [vmem:[#allocation3 + $0xa0] sm:$0xff]
  %v1114 = vld [vmem:[#allocation3 + $0xa8] sm:$0xff]
  %v1115 = vld [vmem:[#allocation3 + $0xb0] sm:$0xf]
  %v1116 = vld [vmem:[#allocation3 + $0xb4] sm:$0xff]
  %v1117 = vld [vmem:[#allocation3 + $0xbc] sm:$0xff]
  %v1118 = vld [vmem:[#allocation3 + $0xc4] sm:$0xff]
  %v1119 = vld [vmem:[#allocation3 + $0xcc] sm:$0xff]
  %v1120 = vld [vmem:[#allocation3 + $0xd4] sm:$0xf]
  %v1121 = vld [vmem:[#allocation3 + $0xd8] sm:$0xff]
  %v1122 = vld [vmem:[#allocation3 + $0xe0] sm:$0xff]
  %v1123 = vld [vmem:[#allocation3 + $0xe8] sm:$0xff]
  %v1124 = vld [vmem:[#allocation3 + $0xf0] sm:$0xff]
  %v1125 = vld [vmem:[#allocation3 + $0xf8] sm:$0xf]
  %v1126 = vld [vmem:[#allocation3 + $0xfc] sm:$0xff]
  %v1127 = vld [vmem:[#allocation3 + $0x104] sm:$0xff]
  %v1128 = vld [vmem:[#allocation3 + $0x10c] sm:$0xff]
  %v1129 = vld [vmem:[#allocation3 + $0x114] sm:$0xff]
  %v1130 = vld [vmem:[#allocation3 + $0x11c] sm:$0xf]
  %v1131 = vld [vmem:[#allocation3 + $0x120] sm:$0xff]
  %v1132 = vld [vmem:[#allocation3 + $0x128] sm:$0xff]
  %v1133 = vld [vmem:[#allocation3 + $0x130] sm:$0xff]
  %v1134 = vld [vmem:[#allocation3 + $0x138] sm:$0xff]
  %v1135 = vld [vmem:[#allocation3 + $0x140] sm:$0xf]
  %v1136 = vld [vmem:[#allocation3 + $0x144] sm:$0xff]
  %v1137 = vld [vmem:[#allocation3 + $0x14c] sm:$0xff]
  %v1138 = vld [vmem:[#allocation3 + $0x154] sm:$0xff]
  %v1139 = vld [vmem:[#allocation3 + $0x15c] sm:$0xff]
  %v1140 = vld [vmem:[#allocation3 + $0x164] sm:$0xf]
  %v1141 = vld [vmem:[#allocation3 + $0x168] sm:$0xff]
  %v1142 = vld [vmem:[#allocation3 + $0x170] sm:$0xff]
  %v1143 = vld [vmem:[#allocation3 + $0x178] sm:$0xff]
  %v1144 = vld [vmem:[#allocation3 + $0x180] sm:$0xff]
  %v1145 = vld [vmem:[#allocation3 + $0x188] sm:$0xf]
  %v1146 = vld [vmem:[#allocation3 + $0x18c] sm:$0xff]
  %v1147 = vld [vmem:[#allocation3 + $0x194] sm:$0xff]
  %v1148 = vld [vmem:[#allocation3 + $0x19c] sm:$0xff]
  %v1149 = vld [vmem:[#allocation3 + $0x1a4] sm:$0xff]
  %v1150 = vld [vmem:[#allocation3 + $0x1ac] sm:$0xf]
  %v1151 = vld [vmem:[#allocation3 + $0x1b0] sm:$0xff]
  %v1152 = vld [vmem:[#allocation3 + $0x1b8] sm:$0xff]
  %v1153 = vld [vmem:[#allocation3 + $0x1c0] sm:$0xff]
  %v1154 = vld [vmem:[#allocation3 + $0x1c8] sm:$0xff]
  %v1155 = vld [vmem:[#allocation3 + $0x1d0] sm:$0xf]
  %v1156 = vld [vmem:[#allocation3 + $0x1d4] sm:$0xff]
  %v1157 = vld [vmem:[#allocation3 + $0x1dc] sm:$0xff]
  %v1158 = vld [vmem:[#allocation3 + $0x1e4] sm:$0xff]
  %v1159 = vld [vmem:[#allocation3 + $0x1ec] sm:$0xff]
  %v1160 = vld [vmem:[#allocation3 + $0x1f4] sm:$0xf]
  %v1161 = vld [vmem:[#allocation3 + $0x1f8] sm:$0xff]
  %v1162 = vld [vmem:[#allocation3 + $0x200] sm:$0xff]
  %v1163 = vld [vmem:[#allocation3 + $0x208] sm:$0xff]
  %v1164 = vld [vmem:[#allocation3 + $0x210] sm:$0xff]
  %v1165 = vld [vmem:[#allocation3 + $0x218] sm:$0xf]
  %v1166 = vld [vmem:[#allocation3 + $0x21c] sm:$0xff]
  %v1167 = vld [vmem:[#allocation3 + $0x224] sm:$0xff]
  %v1168 = vld [vmem:[#allocation3 + $0x22c] sm:$0xff]
  %v1169 = vld [vmem:[#allocation3 + $0x234] sm:$0xff]
  %v1170 = vld [vmem:[#allocation3 + $0x23c] sm:$0xf]
  %v1171 = vld [vmem:[%s1] sm:$0xf]
  %v1172 = vld [vmem:[%s1 + $0x4] sm:$0xf]
  %v1173 = vld [vmem:[%s1 + $0x8] sm:$0xf]
  %v1174 = vld [vmem:[%s1 + $0xc] sm:$0xf]
  %v1175 = vld [vmem:[%s1 + $0x10] sm:$0xf]
  %v1176 = vld [vmem:[%s1 + $0x14] sm:$0xf]
  %v1177 = vld [vmem:[%s1 + $0x18] sm:$0xf]
  %v1178 = vld [vmem:[%s1 + $0x1c] sm:$0xf]
  %v1179 = vld [vmem:[%s1 + $0x20] sm:$0xf]
  %v1180 = vld [vmem:[%s1 + $0x24] sm:$0xf]
  %v1181 = vld [vmem:[%s1 + $0x28] sm:$0xf]
  %v1182 = vld [vmem:[%s1 + $0x2c] sm:$0xf]
  %v1183 = vld [vmem:[%s1 + $0x30] sm:$0xf]
  %v1184 = vld [vmem:[%s1 + $0x34] sm:$0xf]
  %v1185 = vld [vmem:[%s1 + $0x38] sm:$0xf]
  %v1186 = vld [vmem:[%s1 + $0x3c] sm:$0xf]
  %v1187 = vld [vmem:[%s1 + $0x40] sm:$0xf]
  %v1188 = vld [vmem:[%s1 + $0x44] sm:$0xf]
  %v1189 = vld [vmem:[%s1 + $0x48] sm:$0xf]
  %v1190 = vld [vmem:[%s1 + $0x4c] sm:$0xf]
  %v1191 = vld [vmem:[%s1 + $0x50] sm:$0xf]
  %v1192 = vld [vmem:[%s1 + $0x54] sm:$0xf]
  %v1193 = vld [vmem:[%s1 + $0x58] sm:$0xf]
  %v1194 = vld [vmem:[%s1 + $0x5c] sm:$0xf]
  %v1195 = vld [vmem:[%s1 + $0x60] sm:$0xf]
  %v1196 = vld [vmem:[%s1 + $0x64] sm:$0xf]
  %v1197 = vld [vmem:[%s1 + $0x68] sm:$0xf]
  %v1198 = vld [vmem:[%s1 + $0x6c] sm:$0xf]
  %v1199 = vld [vmem:[%s1 + $0x70] sm:$0xf]
  %v1200 = vld [vmem:[%s1 + $0x74] sm:$0xf]
  %v1201 = vld [vmem:[%s1 + $0x78] sm:$0xf]
  %v1202 = vld [vmem:[%s1 + $0x7c] sm:$0xf]
  %v1203 = vld [vmem:[%s1 + $0x80] sm:$0xf]
  %v1204 = vld [vmem:[%s1 + $0x84] sm:$0xf]
  %v1205 = vld [vmem:[%s1 + $0x88] sm:$0xf]
  %v1206 = vld [vmem:[%s1 + $0x8c] sm:$0xf]
  %v1207 = vld [vmem:[%s1 + $0x90] sm:$0xf]
  %v1208 = vld [vmem:[%s1 + $0x94] sm:$0xf]
  %v1209 = vld [vmem:[%s1 + $0x98] sm:$0xf]
  %v1210 = vld [vmem:[%s1 + $0x9c] sm:$0xf]
  %v1211 = vld [vmem:[%s1 + $0xa0] sm:$0xf]
  %v1212 = vld [vmem:[%s1 + $0xa4] sm:$0xf]
  %v1213 = vld [vmem:[%s1 + $0xa8] sm:$0xf]
  %v1214 = vld [vmem:[%s1 + $0xac] sm:$0xf]
  %v1215 = vld [vmem:[%s1 + $0xb0] sm:$0xf]
  %v1216 = vld [vmem:[%s1 + $0xb4] sm:$0xf]
  %v1217 = vld [vmem:[%s1 + $0xb8] sm:$0xf]
  %v1218 = vld [vmem:[%s1 + $0xbc] sm:$0xf]
  %v1219 = vld [vmem:[%s1 + $0xc0] sm:$0xf]
  %v1220 = vld [vmem:[%s1 + $0xc4] sm:$0xf]
  %v1221 = vld [vmem:[%s1 + $0xc8] sm:$0xf]
  %v1222 = vld [vmem:[%s1 + $0xcc] sm:$0xf]
  %v1223 = vld [vmem:[%s1 + $0xd0] sm:$0xf]
  %v1224 = vld [vmem:[%s1 + $0xd4] sm:$0xf]
  %v1225 = vld [vmem:[%s1 + $0xd8] sm:$0xf]
  %v1226 = vld [vmem:[%s1 + $0xdc] sm:$0xf]
  %v1227 = vld [vmem:[%s1 + $0xe0] sm:$0xf]
  %v1228 = vld [vmem:[%s1 + $0xe4] sm:$0xf]
  %v1229 = vld [vmem:[%s1 + $0xe8] sm:$0xf]
  %v1230 = vld [vmem:[%s1 + $0xec] sm:$0xf]
  %v1231 = vld [vmem:[%s1 + $0xf0] sm:$0xf]
  %v1232 = vld [vmem:[%s1 + $0xf4] sm:$0xf]
  %v1233 = vld [vmem:[%s1 + $0xf8] sm:$0xf]
  %v1234 = vld [vmem:[%s1 + $0xfc] sm:$0xf]
  %v1235 = vld [vmem:[%s1 + $0x100] sm:$0xf]
  %v1236 = vld [vmem:[%s1 + $0x104] sm:$0xf]
  %v1237 = vld [vmem:[%s1 + $0x108] sm:$0xf]
  %v1238 = vld [vmem:[%s1 + $0x10c] sm:$0xf]
  %v1239 = vld [vmem:[%s1 + $0x110] sm:$0xf]
  %v1240 = vld [vmem:[%s1 + $0x114] sm:$0xf]
  %v1241 = vld [vmem:[%s1 + $0x118] sm:$0xf]
  %v1242 = vld [vmem:[%s1 + $0x11c] sm:$0xf]
  %v1243 = vld [vmem:[%s1 + $0x120] sm:$0xf]
  %v1244 = vld [vmem:[%s1 + $0x124] sm:$0xf]
  %v1245 = vld [vmem:[%s1 + $0x128] sm:$0xf]
  %v1246 = vld [vmem:[%s1 + $0x12c] sm:$0xf]
  %v1247 = vld [vmem:[%s1 + $0x130] sm:$0xf]
  %v1248 = vld [vmem:[%s1 + $0x134] sm:$0xf]
  %v1249 = vld [vmem:[%s1 + $0x138] sm:$0xf]
  %v1250 = vld [vmem:[%s1 + $0x13c] sm:$0xf]
  %v1251 = vld [vmem:[%s1 + $0x140] sm:$0xf]
  %v1252 = vld [vmem:[%s1 + $0x144] sm:$0xf]
  %v1253 = vld [vmem:[%s1 + $0x148] sm:$0xf]
  %v1254 = vld [vmem:[%s1 + $0x14c] sm:$0xf]
  %v1255 = vld [vmem:[%s1 + $0x150] sm:$0xf]
  %v1256 = vld [vmem:[%s1 + $0x154] sm:$0xf]
  %v1257 = vld [vmem:[%s1 + $0x158] sm:$0xf]
  %v1258 = vld [vmem:[%s1 + $0x15c] sm:$0xf]
  %v1259 = vld [vmem:[%s1 + $0x160] sm:$0xf]
  %v1260 = vld [vmem:[%s1 + $0x164] sm:$0xf]
  %v1261 = vld [vmem:[%s1 + $0x168] sm:$0xf]
  %v1262 = vld [vmem:[%s1 + $0x16c] sm:$0xf]
  %v1263 = vld [vmem:[%s1 + $0x170] sm:$0xf]
  %v1264 = vld [vmem:[%s1 + $0x174] sm:$0xf]
  %v1265 = vld [vmem:[%s1 + $0x178] sm:$0xf]
  %v1266 = vld [vmem:[%s1 + $0x17c] sm:$0xf]
  %v1267 = vld [vmem:[%s1 + $0x180] sm:$0xf]
  %v1268 = vld [vmem:[%s1 + $0x184] sm:$0xf]
  %v1269 = vld [vmem:[%s1 + $0x188] sm:$0xf]
  %v1270 = vld [vmem:[%s1 + $0x18c] sm:$0xf]
  %v1271 = vld [vmem:[%s1 + $0x190] sm:$0xf]
  %v1272 = vld [vmem:[%s1 + $0x194] sm:$0xf]
  %v1273 = vld [vmem:[%s1 + $0x198] sm:$0xf]
  %v1274 = vld [vmem:[%s1 + $0x19c] sm:$0xf]
  %v1275 = vld [vmem:[%s1 + $0x1a0] sm:$0xf]
  %v1276 = vld [vmem:[%s1 + $0x1a4] sm:$0xf]
  %v1277 = vld [vmem:[%s1 + $0x1a8] sm:$0xf]
  %v1278 = vld [vmem:[%s1 + $0x1ac] sm:$0xf]
  %v1279 = vld [vmem:[%s1 + $0x1b0] sm:$0xf]
  %v1280 = vld [vmem:[%s1 + $0x1b4] sm:$0xf]
  %v1281 = vld [vmem:[%s1 + $0x1b8] sm:$0xf]
  %v1282 = vld [vmem:[%s1 + $0x1bc] sm:$0xf]
  %v1283 = vld [vmem:[%s1 + $0x1c0] sm:$0xf]
  %v1284 = vld [vmem:[%s1 + $0x1c4] sm:$0xf]
  %v1285 = vld [vmem:[%s1 + $0x1c8] sm:$0xf]
  %v1286 = vld [vmem:[%s1 + $0x1cc] sm:$0xf]
  %v1287 = vld [vmem:[%s1 + $0x1d0] sm:$0xf]
  %v1288 = vld [vmem:[%s1 + $0x1d4] sm:$0xf]
  %v1289 = vld [vmem:[%s1 + $0x1d8] sm:$0xf]
  %v1290 = vld [vmem:[%s1 + $0x1dc] sm:$0xf]
  %v1291 = vld [vmem:[%s1 + $0x1e0] sm:$0xf]
  %v1292 = vld [vmem:[%s1 + $0x1e4] sm:$0xf]
  %v1293 = vld [vmem:[%s1 + $0x1e8] sm:$0xf]
  %v1294 = vld [vmem:[%s1 + $0x1ec] sm:$0xf]
  %v1295 = vld [vmem:[%s1 + $0x1f0] sm:$0xf]
  %v1296 = vld [vmem:[%s1 + $0x1f4] sm:$0xf]
  %v1297 = vld [vmem:[%s1 + $0x1f8] sm:$0xf]
  %v1298 = vld [vmem:[%s1 + $0x1fc] sm:$0xf]
  %v1299 = vld [vmem:[%s1 + $0x200] sm:$0xf]
  %v1300 = vld [vmem:[%s1 + $0x204] sm:$0xf]
  %v1301 = vld [vmem:[%s1 + $0x208] sm:$0xf]
  %v1302 = vld [vmem:[%s1 + $0x20c] sm:$0xf]
  %v1303 = vld [vmem:[%s1 + $0x210] sm:$0xf]
  %v1304 = vld [vmem:[%s1 + $0x214] sm:$0xf]
  %v1305 = vld [vmem:[%s1 + $0x218] sm:$0xf]
  %v1306 = vld [vmem:[%s1 + $0x21c] sm:$0xf]
  %v1307 = vld [vmem:[%s1 + $0x220] sm:$0xf]
  %v1308 = vld [vmem:[%s1 + $0x224] sm:$0xf]
  %v1309 = vld [vmem:[%s1 + $0x228] sm:$0xf]
  %v1310 = vld [vmem:[%s1 + $0x22c] sm:$0xf]
  %v1311 = vld [vmem:[%s1 + $0x230] sm:$0xf]
  %v1312 = vld [vmem:[%s1 + $0x234] sm:$0xf]
  %v1313 = vld [vmem:[%s1 + $0x238] sm:$0xf]
  %v1314 = vld [vmem:[%s1 + $0x23c] sm:$0xf]
  %v1315 = vld [vmem:[%s2] sm:$0x1]
  %v1317 = vlaneseq
  %v1318 = vshrl.u32 %v1317, 7
  %v1319 = vsub.s32 0, %v1318
  %v1320 = vrot.slane %v1315, %v1319
  %v1402 = vunpack.c.l.b16 %v1091
  %v1403 = vunpack.c.h.b16 %v1091
  %v1404 = vunpack.c.l.b16 %v1092
  %v1405 = vunpack.c.h.b16 %v1092
  %v1406 = vunpack.c.l.b16 %v1093
  %v1407 = vunpack.c.h.b16 %v1093
  %v1408 = vunpack.c.l.b16 %v1094
  %v1409 = vunpack.c.h.b16 %v1094
  %v1410 = vunpack.c.l.b16 %v1095
  %v1411 = vunpack.c.l.b16 %v1096
  %v1412 = vunpack.c.h.b16 %v1096
  %v1413 = vunpack.c.l.b16 %v1097
  %v1414 = vunpack.c.h.b16 %v1097
  %v1415 = vunpack.c.l.b16 %v1098
  %v1416 = vunpack.c.h.b16 %v1098
  %v1417 = vunpack.c.l.b16 %v1099
  %v1418 = vunpack.c.h.b16 %v1099
  %v1419 = vunpack.c.l.b16 %v1100
  %v1420 = vunpack.c.l.b16 %v1101
  %v1421 = vunpack.c.h.b16 %v1101
  %v1422 = vunpack.c.l.b16 %v1102
  %v1423 = vunpack.c.h.b16 %v1102
  %v1424 = vunpack.c.l.b16 %v1103
  %v1425 = vunpack.c.h.b16 %v1103
  %v1426 = vunpack.c.l.b16 %v1104
  %v1427 = vunpack.c.h.b16 %v1104
  %v1428 = vunpack.c.l.b16 %v1105
  %v1429 = vunpack.c.l.b16 %v1106
  %v1430 = vunpack.c.h.b16 %v1106
  %v1431 = vunpack.c.l.b16 %v1107
  %v1432 = vunpack.c.h.b16 %v1107
  %v1433 = vunpack.c.l.b16 %v1108
  %v1434 = vunpack.c.h.b16 %v1108
  %v1435 = vunpack.c.l.b16 %v1109
  %v1436 = vunpack.c.h.b16 %v1109
  %v1437 = vunpack.c.l.b16 %v1110
  %v1438 = vunpack.c.l.b16 %v1111
  %v1439 = vunpack.c.h.b16 %v1111
  %v1440 = vunpack.c.l.b16 %v1112
  %v1441 = vunpack.c.h.b16 %v1112
  %v1442 = vunpack.c.l.b16 %v1113
  %v1443 = vunpack.c.h.b16 %v1113
  %v1444 = vunpack.c.l.b16 %v1114
  %v1445 = vunpack.c.h.b16 %v1114
  %v1446 = vunpack.c.l.b16 %v1115
  %v1447 = vunpack.c.l.b16 %v1116
  %v1448 = vunpack.c.h.b16 %v1116
  %v1449 = vunpack.c.l.b16 %v1117
  %v1450 = vunpack.c.h.b16 %v1117
  %v1451 = vunpack.c.l.b16 %v1118
  %v1452 = vunpack.c.h.b16 %v1118
  %v1453 = vunpack.c.l.b16 %v1119
  %v1454 = vunpack.c.h.b16 %v1119
  %v1455 = vunpack.c.l.b16 %v1120
  %v1456 = vunpack.c.l.b16 %v1121
  %v1457 = vunpack.c.h.b16 %v1121
  %v1458 = vunpack.c.l.b16 %v1122
  %v1459 = vunpack.c.h.b16 %v1122
  %v1460 = vunpack.c.l.b16 %v1123
  %v1461 = vunpack.c.h.b16 %v1123
  %v1462 = vunpack.c.l.b16 %v1124
  %v1463 = vunpack.c.h.b16 %v1124
  %v1464 = vunpack.c.l.b16 %v1125
  %v1465 = vunpack.c.l.b16 %v1126
  %v1466 = vunpack.c.h.b16 %v1126
  %v1467 = vunpack.c.l.b16 %v1127
  %v1468 = vunpack.c.h.b16 %v1127
  %v1469 = vunpack.c.l.b16 %v1128
  %v1470 = vunpack.c.h.b16 %v1128
  %v1471 = vunpack.c.l.b16 %v1129
  %v1472 = vunpack.c.h.b16 %v1129
  %v1473 = vunpack.c.l.b16 %v1130
  %v1474 = vunpack.c.l.b16 %v1131
  %v1475 = vunpack.c.h.b16 %v1131
  %v1476 = vunpack.c.l.b16 %v1132
  %v1477 = vunpack.c.h.b16 %v1132
  %v1478 = vunpack.c.l.b16 %v1133
  %v1479 = vunpack.c.h.b16 %v1133
  %v1480 = vunpack.c.l.b16 %v1134
  %v1481 = vunpack.c.h.b16 %v1134
  %v1482 = vunpack.c.l.b16 %v1135
  %v1483 = vunpack.c.l.b16 %v1136
  %v1484 = vunpack.c.h.b16 %v1136
  %v1485 = vunpack.c.l.b16 %v1137
  %v1486 = vunpack.c.h.b16 %v1137
  %v1487 = vunpack.c.l.b16 %v1138
  %v1488 = vunpack.c.h.b16 %v1138
  %v1489 = vunpack.c.l.b16 %v1139
  %v1490 = vunpack.c.h.b16 %v1139
  %v1491 = vunpack.c.l.b16 %v1140
  %v1492 = vunpack.c.l.b16 %v1141
  %v1493 = vunpack.c.h.b16 %v1141
  %v1494 = vunpack.c.l.b16 %v1142
  %v1495 = vunpack.c.h.b16 %v1142
  %v1496 = vunpack.c.l.b16 %v1143
  %v1497 = vunpack.c.h.b16 %v1143
  %v1498 = vunpack.c.l.b16 %v1144
  %v1499 = vunpack.c.h.b16 %v1144
  %v1500 = vunpack.c.l.b16 %v1145
  %v1501 = vunpack.c.l.b16 %v1146
  %v1502 = vunpack.c.h.b16 %v1146
  %v1503 = vunpack.c.l.b16 %v1147
  %v1504 = vunpack.c.h.b16 %v1147
  %v1505 = vunpack.c.l.b16 %v1148
  %v1506 = vunpack.c.h.b16 %v1148
  %v1507 = vunpack.c.l.b16 %v1149
  %v1508 = vunpack.c.h.b16 %v1149
  %v1509 = vunpack.c.l.b16 %v1150
  %v1510 = vunpack.c.l.b16 %v1151
  %v1511 = vunpack.c.h.b16 %v1151
  %v1512 = vunpack.c.l.b16 %v1152
  %v1513 = vunpack.c.h.b16 %v1152
  %v1514 = vunpack.c.l.b16 %v1153
  %v1515 = vunpack.c.h.b16 %v1153
  %v1516 = vunpack.c.l.b16 %v1154
  %v1517 = vunpack.c.h.b16 %v1154
  %v1518 = vunpack.c.l.b16 %v1155
  %v1519 = vunpack.c.l.b16 %v1156
  %v1520 = vunpack.c.h.b16 %v1156
  %v1521 = vunpack.c.l.b16 %v1157
  %v1522 = vunpack.c.h.b16 %v1157
  %v1523 = vunpack.c.l.b16 %v1158
  %v1524 = vunpack.c.h.b16 %v1158
  %v1525 = vunpack.c.l.b16 %v1159
  %v1526 = vunpack.c.h.b16 %v1159
  %v1527 = vunpack.c.l.b16 %v1160
  %v1528 = vunpack.c.l.b16 %v1161
  %v1529 = vunpack.c.h.b16 %v1161
  %v1530 = vunpack.c.l.b16 %v1162
  %v1531 = vunpack.c.h.b16 %v1162
  %v1532 = vunpack.c.l.b16 %v1163
  %v1533 = vunpack.c.h.b16 %v1163
  %v1534 = vunpack.c.l.b16 %v1164
  %v1535 = vunpack.c.h.b16 %v1164
  %v1536 = vunpack.c.l.b16 %v1165
  %v1537 = vunpack.c.l.b16 %v1166
  %v1538 = vunpack.c.h.b16 %v1166
  %v1539 = vunpack.c.l.b16 %v1167
  %v1540 = vunpack.c.h.b16 %v1167
  %v1541 = vunpack.c.l.b16 %v1168
  %v1542 = vunpack.c.h.b16 %v1168
  %v1543 = vunpack.c.l.b16 %v1169
  %v1544 = vunpack.c.h.b16 %v1169
  %v1545 = vunpack.c.l.b16 %v1170
  %v1546 = vpack.c.b16 %v1411, %v1402
  %v1547 = vpack.c.b16 %v1412, %v1403
  %v1548 = vpack.c.b16 %v1413, %v1404
  %v1549 = vpack.c.b16 %v1414, %v1405
  %v1550 = vpack.c.b16 %v1415, %v1406
  %v1551 = vpack.c.b16 %v1416, %v1407
  %v1552 = vpack.c.b16 %v1417, %v1408
  %v1553 = vpack.c.b16 %v1418, %v1409
  %v1554 = vpack.c.b16 %v1419, %v1410
  %v1555 = vpack.c.b16 %v1429, %v1420
  %v1556 = vpack.c.b16 %v1430, %v1421
  %v1557 = vpack.c.b16 %v1431, %v1422
  %v1558 = vpack.c.b16 %v1432, %v1423
  %v1559 = vpack.c.b16 %v1433, %v1424
  %v1560 = vpack.c.b16 %v1434, %v1425
  %v1561 = vpack.c.b16 %v1435, %v1426
  %v1562 = vpack.c.b16 %v1436, %v1427
  %v1563 = vpack.c.b16 %v1437, %v1428
  %v1564 = vpack.c.b16 %v1447, %v1438
  %v1565 = vpack.c.b16 %v1448, %v1439
  %v1566 = vpack.c.b16 %v1449, %v1440
  %v1567 = vpack.c.b16 %v1450, %v1441
  %v1568 = vpack.c.b16 %v1451, %v1442
  %v1569 = vpack.c.b16 %v1452, %v1443
  %v1570 = vpack.c.b16 %v1453, %v1444
  %v1571 = vpack.c.b16 %v1454, %v1445
  %v1572 = vpack.c.b16 %v1455, %v1446
  %v1573 = vpack.c.b16 %v1465, %v1456
  %v1574 = vpack.c.b16 %v1466, %v1457
  %v1575 = vpack.c.b16 %v1467, %v1458
  %v1576 = vpack.c.b16 %v1468, %v1459
  %v1577 = vpack.c.b16 %v1469, %v1460
  %v1578 = vpack.c.b16 %v1470, %v1461
  %v1579 = vpack.c.b16 %v1471, %v1462
  %v1580 = vpack.c.b16 %v1472, %v1463
  %v1581 = vpack.c.b16 %v1473, %v1464
  %v1582 = vpack.c.b16 %v1483, %v1474
  %v1583 = vpack.c.b16 %v1484, %v1475
  %v1584 = vpack.c.b16 %v1485, %v1476
  %v1585 = vpack.c.b16 %v1486, %v1477
  %v1586 = vpack.c.b16 %v1487, %v1478
  %v1587 = vpack.c.b16 %v1488, %v1479
  %v1588 = vpack.c.b16 %v1489, %v1480
  %v1589 = vpack.c.b16 %v1490, %v1481
  %v1590 = vpack.c.b16 %v1491, %v1482
  %v1591 = vpack.c.b16 %v1501, %v1492
  %v1592 = vpack.c.b16 %v1502, %v1493
  %v1593 = vpack.c.b16 %v1503, %v1494
  %v1594 = vpack.c.b16 %v1504, %v1495
  %v1595 = vpack.c.b16 %v1505, %v1496
  %v1596 = vpack.c.b16 %v1506, %v1497
  %v1597 = vpack.c.b16 %v1507, %v1498
  %v1598 = vpack.c.b16 %v1508, %v1499
  %v1599 = vpack.c.b16 %v1509, %v1500
  %v1600 = vpack.c.b16 %v1519, %v1510
  %v1601 = vpack.c.b16 %v1520, %v1511
  %v1602 = vpack.c.b16 %v1521, %v1512
  %v1603 = vpack.c.b16 %v1522, %v1513
  %v1604 = vpack.c.b16 %v1523, %v1514
  %v1605 = vpack.c.b16 %v1524, %v1515
  %v1606 = vpack.c.b16 %v1525, %v1516
  %v1607 = vpack.c.b16 %v1526, %v1517
  %v1608 = vpack.c.b16 %v1527, %v1518
  %v1609 = vpack.c.b16 %v1537, %v1528
  %v1610 = vpack.c.b16 %v1538, %v1529
  %v1611 = vpack.c.b16 %v1539, %v1530
  %v1612 = vpack.c.b16 %v1540, %v1531
  %v1613 = vpack.c.b16 %v1541, %v1532
  %v1614 = vpack.c.b16 %v1542, %v1533
  %v1615 = vpack.c.b16 %v1543, %v1534
  %v1616 = vpack.c.b16 %v1544, %v1535
  %v1617 = vpack.c.b16 %v1545, %v1536
  %v1834 = vunpack.c.l.b16 %v1171
  %v1835 = vunpack.c.l.b16 %v1172
  %v1836 = vunpack.c.l.b16 %v1173
  %v1837 = vunpack.c.l.b16 %v1174
  %v1838 = vunpack.c.l.b16 %v1175
  %v1839 = vunpack.c.l.b16 %v1176
  %v1840 = vunpack.c.l.b16 %v1177
  %v1841 = vunpack.c.l.b16 %v1178
  %v1842 = vunpack.c.l.b16 %v1179
  %v1843 = vunpack.c.l.b16 %v1180
  %v1844 = vunpack.c.l.b16 %v1181
  %v1845 = vunpack.c.l.b16 %v1182
  %v1846 = vunpack.c.l.b16 %v1183
  %v1847 = vunpack.c.l.b16 %v1184
  %v1848 = vunpack.c.l.b16 %v1185
  %v1849 = vunpack.c.l.b16 %v1186
  %v1850 = vunpack.c.l.b16 %v1187
  %v1851 = vunpack.c.l.b16 %v1188
  %v1852 = vunpack.c.l.b16 %v1189
  %v1853 = vunpack.c.l.b16 %v1190
  %v1854 = vunpack.c.l.b16 %v1191
  %v1855 = vunpack.c.l.b16 %v1192
  %v1856 = vunpack.c.l.b16 %v1193
  %v1857 = vunpack.c.l.b16 %v1194
  %v1858 = vunpack.c.l.b16 %v1195
  %v1859 = vunpack.c.l.b16 %v1196
  %v1860 = vunpack.c.l.b16 %v1197
  %v1861 = vunpack.c.l.b16 %v1198
  %v1862 = vunpack.c.l.b16 %v1199
  %v1863 = vunpack.c.l.b16 %v1200
  %v1864 = vunpack.c.l.b16 %v1201
  %v1865 = vunpack.c.l.b16 %v1202
  %v1866 = vunpack.c.l.b16 %v1203
  %v1867 = vunpack.c.l.b16 %v1204
  %v1868 = vunpack.c.l.b16 %v1205
  %v1869 = vunpack.c.l.b16 %v1206
  %v1870 = vunpack.c.l.b16 %v1207
  %v1871 = vunpack.c.l.b16 %v1208
  %v1872 = vunpack.c.l.b16 %v1209
  %v1873 = vunpack.c.l.b16 %v1210
  %v1874 = vunpack.c.l.b16 %v1211
  %v1875 = vunpack.c.l.b16 %v1212
  %v1876 = vunpack.c.l.b16 %v1213
  %v1877 = vunpack.c.l.b16 %v1214
  %v1878 = vunpack.c.l.b16 %v1215
  %v1879 = vunpack.c.l.b16 %v1216
  %v1880 = vunpack.c.l.b16 %v1217
  %v1881 = vunpack.c.l.b16 %v1218
  %v1882 = vunpack.c.l.b16 %v1219
  %v1883 = vunpack.c.l.b16 %v1220
  %v1884 = vunpack.c.l.b16 %v1221
  %v1885 = vunpack.c.l.b16 %v1222
  %v1886 = vunpack.c.l.b16 %v1223
  %v1887 = vunpack.c.l.b16 %v1224
  %v1888 = vunpack.c.l.b16 %v1225
  %v1889 = vunpack.c.l.b16 %v1226
  %v1890 = vunpack.c.l.b16 %v1227
  %v1891 = vunpack.c.l.b16 %v1228
  %v1892 = vunpack.c.l.b16 %v1229
  %v1893 = vunpack.c.l.b16 %v1230
  %v1894 = vunpack.c.l.b16 %v1231
  %v1895 = vunpack.c.l.b16 %v1232
  %v1896 = vunpack.c.l.b16 %v1233
  %v1897 = vunpack.c.l.b16 %v1234
  %v1898 = vunpack.c.l.b16 %v1235
  %v1899 = vunpack.c.l.b16 %v1236
  %v1900 = vunpack.c.l.b16 %v1237
  %v1901 = vunpack.c.l.b16 %v1238
  %v1902 = vunpack.c.l.b16 %v1239
  %v1903 = vunpack.c.l.b16 %v1240
  %v1904 = vunpack.c.l.b16 %v1241
  %v1905 = vunpack.c.l.b16 %v1242
  %v1906 = vunpack.c.l.b16 %v1243
  %v1907 = vunpack.c.l.b16 %v1244
  %v1908 = vunpack.c.l.b16 %v1245
  %v1909 = vunpack.c.l.b16 %v1246
  %v1910 = vunpack.c.l.b16 %v1247
  %v1911 = vunpack.c.l.b16 %v1248
  %v1912 = vunpack.c.l.b16 %v1249
  %v1913 = vunpack.c.l.b16 %v1250
  %v1914 = vunpack.c.l.b16 %v1251
  %v1915 = vunpack.c.l.b16 %v1252
  %v1916 = vunpack.c.l.b16 %v1253
  %v1917 = vunpack.c.l.b16 %v1254
  %v1918 = vunpack.c.l.b16 %v1255
  %v1919 = vunpack.c.l.b16 %v1256
  %v1920 = vunpack.c.l.b16 %v1257
  %v1921 = vunpack.c.l.b16 %v1258
  %v1922 = vunpack.c.l.b16 %v1259
  %v1923 = vunpack.c.l.b16 %v1260
  %v1924 = vunpack.c.l.b16 %v1261
  %v1925 = vunpack.c.l.b16 %v1262
  %v1926 = vunpack.c.l.b16 %v1263
  %v1927 = vunpack.c.l.b16 %v1264
  %v1928 = vunpack.c.l.b16 %v1265
  %v1929 = vunpack.c.l.b16 %v1266
  %v1930 = vunpack.c.l.b16 %v1267
  %v1931 = vunpack.c.l.b16 %v1268
  %v1932 = vunpack.c.l.b16 %v1269
  %v1933 = vunpack.c.l.b16 %v1270
  %v1934 = vunpack.c.l.b16 %v1271
  %v1935 = vunpack.c.l.b16 %v1272
  %v1936 = vunpack.c.l.b16 %v1273
  %v1937 = vunpack.c.l.b16 %v1274
  %v1938 = vunpack.c.l.b16 %v1275
  %v1939 = vunpack.c.l.b16 %v1276
  %v1940 = vunpack.c.l.b16 %v1277
  %v1941 = vunpack.c.l.b16 %v1278
  %v1942 = vunpack.c.l.b16 %v1279
  %v1943 = vunpack.c.l.b16 %v1280
  %v1944 = vunpack.c.l.b16 %v1281
  %v1945 = vunpack.c.l.b16 %v1282
  %v1946 = vunpack.c.l.b16 %v1283
  %v1947 = vunpack.c.l.b16 %v1284
  %v1948 = vunpack.c.l.b16 %v1285
  %v1949 = vunpack.c.l.b16 %v1286
  %v1950 = vunpack.c.l.b16 %v1287
  %v1951 = vunpack.c.l.b16 %v1288
  %v1952 = vunpack.c.l.b16 %v1289
  %v1953 = vunpack.c.l.b16 %v1290
  %v1954 = vunpack.c.l.b16 %v1291
  %v1955 = vunpack.c.l.b16 %v1292
  %v1956 = vunpack.c.l.b16 %v1293
  %v1957 = vunpack.c.l.b16 %v1294
  %v1958 = vunpack.c.l.b16 %v1295
  %v1959 = vunpack.c.l.b16 %v1296
  %v1960 = vunpack.c.l.b16 %v1297
  %v1961 = vunpack.c.l.b16 %v1298
  %v1962 = vunpack.c.l.b16 %v1299
  %v1963 = vunpack.c.l.b16 %v1300
  %v1964 = vunpack.c.l.b16 %v1301
  %v1965 = vunpack.c.l.b16 %v1302
  %v1966 = vunpack.c.l.b16 %v1303
  %v1967 = vunpack.c.l.b16 %v1304
  %v1968 = vunpack.c.l.b16 %v1305
  %v1969 = vunpack.c.l.b16 %v1306
  %v1970 = vunpack.c.l.b16 %v1307
  %v1971 = vunpack.c.l.b16 %v1308
  %v1972 = vunpack.c.l.b16 %v1309
  %v1973 = vunpack.c.l.b16 %v1310
  %v1974 = vunpack.c.l.b16 %v1311
  %v1975 = vunpack.c.l.b16 %v1312
  %v1976 = vunpack.c.l.b16 %v1313
  %v1977 = vunpack.c.l.b16 %v1314
  %v1978 = vpack.c.b16 %v1835, %v1834
  %v1979 = vpack.c.b16 %v1837, %v1836
  %v1980 = vpack.c.b16 %v1839, %v1838
  %v1981 = vpack.c.b16 %v1841, %v1840
  %v1982 = vpack.c.b16 %v1843, %v1842
  %v1983 = vpack.c.b16 %v1845, %v1844
  %v1984 = vpack.c.b16 %v1847, %v1846
  %v1985 = vpack.c.b16 %v1849, %v1848
  %v1986 = vpack.c.b16 %v1851, %v1850
  %v1987 = vpack.c.b16 %v1853, %v1852
  %v1988 = vpack.c.b16 %v1855, %v1854
  %v1989 = vpack.c.b16 %v1857, %v1856
  %v1990 = vpack.c.b16 %v1859, %v1858
  %v1991 = vpack.c.b16 %v1861, %v1860
  %v1992 = vpack.c.b16 %v1863, %v1862
  %v1993 = vpack.c.b16 %v1865, %v1864
  %v1994 = vpack.c.b16 %v1867, %v1866
  %v1995 = vpack.c.b16 %v1869, %v1868
  %v1996 = vpack.c.b16 %v1871, %v1870
  %v1997 = vpack.c.b16 %v1873, %v1872
  %v1998 = vpack.c.b16 %v1875, %v1874
  %v1999 = vpack.c.b16 %v1877, %v1876
  %v2000 = vpack.c.b16 %v1879, %v1878
  %v2001 = vpack.c.b16 %v1881, %v1880
  %v2002 = vpack.c.b16 %v1883, %v1882
  %v2003 = vpack.c.b16 %v1885, %v1884
  %v2004 = vpack.c.b16 %v1887, %v1886
  %v2005 = vpack.c.b16 %v1889, %v1888
  %v2006 = vpack.c.b16 %v1891, %v1890
  %v2007 = vpack.c.b16 %v1893, %v1892
  %v2008 = vpack.c.b16 %v1895, %v1894
  %v2009 = vpack.c.b16 %v1897, %v1896
  %v2010 = vpack.c.b16 %v1899, %v1898
  %v2011 = vpack.c.b16 %v1901, %v1900
  %v2012 = vpack.c.b16 %v1903, %v1902
  %v2013 = vpack.c.b16 %v1905, %v1904
  %v2014 = vpack.c.b16 %v1907, %v1906
  %v2015 = vpack.c.b16 %v1909, %v1908
  %v2016 = vpack.c.b16 %v1911, %v1910
  %v2017 = vpack.c.b16 %v1913, %v1912
  %v2018 = vpack.c.b16 %v1915, %v1914
  %v2019 = vpack.c.b16 %v1917, %v1916
  %v2020 = vpack.c.b16 %v1919, %v1918
  %v2021 = vpack.c.b16 %v1921, %v1920
  %v2022 = vpack.c.b16 %v1923, %v1922
  %v2023 = vpack.c.b16 %v1925, %v1924
  %v2024 = vpack.c.b16 %v1927, %v1926
  %v2025 = vpack.c.b16 %v1929, %v1928
  %v2026 = vpack.c.b16 %v1931, %v1930
  %v2027 = vpack.c.b16 %v1933, %v1932
  %v2028 = vpack.c.b16 %v1935, %v1934
  %v2029 = vpack.c.b16 %v1937, %v1936
  %v2030 = vpack.c.b16 %v1939, %v1938
  %v2031 = vpack.c.b16 %v1941, %v1940
  %v2032 = vpack.c.b16 %v1943, %v1942
  %v2033 = vpack.c.b16 %v1945, %v1944
  %v2034 = vpack.c.b16 %v1947, %v1946
  %v2035 = vpack.c.b16 %v1949, %v1948
  %v2036 = vpack.c.b16 %v1951, %v1950
  %v2037 = vpack.c.b16 %v1953, %v1952
  %v2038 = vpack.c.b16 %v1955, %v1954
  %v2039 = vpack.c.b16 %v1957, %v1956
  %v2040 = vpack.c.b16 %v1959, %v1958
  %v2041 = vpack.c.b16 %v1961, %v1960
  %v2042 = vpack.c.b16 %v1963, %v1962
  %v2043 = vpack.c.b16 %v1965, %v1964
  %v2044 = vpack.c.b16 %v1967, %v1966
  %v2045 = vpack.c.b16 %v1969, %v1968
  %v2046 = vpack.c.b16 %v1971, %v1970
  %v2047 = vpack.c.b16 %v1973, %v1972
  %v2048 = vpack.c.b16 %v1975, %v1974
  %v2049 = vpack.c.b16 %v1977, %v1976
  %2122 = vmatprep.subr.bf16.mxu0 0
  %2123 = vmatpush1.bf16.msra.mxu0 %v1985
  %2124 = vmatprep.subr.bf16.mxu0 0
  %2125 = vmatpush1.bf16.msra.mxu0 %v1984
  %2126 = vmatprep.subr.bf16.mxu0 0
  %2127 = vmatpush1.bf16.msra.mxu0 %v1983
  %2128 = vmatprep.subr.bf16.mxu0 0
  %2129 = vmatpush1.bf16.msra.mxu0 %v1982
  %2130 = vmatprep.subr.bf16.mxu0 0
  %2131 = vmatpush1.bf16.msra.mxu0 %v1981
  %2132 = vmatprep.subr.bf16.mxu0 0
  %2133 = vmatpush1.bf16.msra.mxu0 %v1980
  %2134 = vmatprep.subr.bf16.mxu0 0
  %2135 = vmatpush1.bf16.msra.mxu0 %v1979
  %2136 = vmatprep.subr.bf16.mxu0 0
  %2137 = vmatpush1.bf16.msra.mxu0 %v1978
  %2138 = vmatprep.subr.bf16.mxu0 0
  %2139 = vmatpush2.bf16.msra.mxu0 %v1993
  %2140 = vmatprep.subr.bf16.mxu0 0
  %2141 = vmatpush2.bf16.msra.mxu0 %v1992
  %2142 = vmatprep.subr.bf16.mxu0 0
  %2143 = vmatpush2.bf16.msra.mxu0 %v1991
  %2144 = vmatprep.subr.bf16.mxu0 0
  %2145 = vmatpush2.bf16.msra.mxu0 %v1990
  %2146 = vmatprep.subr.bf16.mxu0 0
  %2147 = vmatpush2.bf16.msra.mxu0 %v1989
  %2148 = vmatprep.subr.bf16.mxu0 0
  %2149 = vmatpush2.bf16.msra.mxu0 %v1988
  %2150 = vmatprep.subr.bf16.mxu0 0
  %2151 = vmatpush2.bf16.msra.mxu0 %v1987
  %2152 = vmatprep.subr.bf16.mxu0 0
  %2153 = vmatpush2.bf16.msra.mxu0 %v1986
  %2154 = vmatprep.mubr.bf16.mxu0 %v1547
  %2155 = vmatmul.mubr.bf16.gmra.mxu0 %v1546
  %v2156 = vpop.f32.mrf.mxu0
  %v2157 = vadd.f32 %v1320, %v2156
  %v2158 = vpop.f32.mrf.mxu0
  %v2159 = vpop.f32.mrf.mxu0
  %v2160 = vadd.f32 %v1320, %v2159
  %v2161 = vpop.f32.mrf.mxu0
  %2162 = vmatprep.mubr.bf16.mxu0 %v1556
  %2163 = vmatmul.mubr.bf16.gmra.mxu0 %v1555
  %v2164 = vpop.f32.mrf.mxu0
  %v2165 = vadd.f32 %v1320, %v2164
  %v2166 = vpop.f32.mrf.mxu0
  %v2167 = vpop.f32.mrf.mxu0
  %v2168 = vadd.f32 %v1320, %v2167
  %v2169 = vpop.f32.mrf.mxu0
  %2170 = vmatprep.mubr.bf16.mxu0 %v1565
  %2171 = vmatmul.mubr.bf16.gmra.mxu0 %v1564
  %v2172 = vpop.f32.mrf.mxu0
  %v2173 = vadd.f32 %v1320, %v2172
  %v2174 = vpop.f32.mrf.mxu0
  %v2175 = vpop.f32.mrf.mxu0
  %v2176 = vadd.f32 %v1320, %v2175
  %v2177 = vpop.f32.mrf.mxu0
  %2178 = vmatprep.mubr.bf16.mxu0 %v1574
  %2179 = vmatmul.mubr.bf16.gmra.mxu0 %v1573
  %v2180 = vpop.f32.mrf.mxu0
  %v2181 = vadd.f32 %v1320, %v2180
  %v2182 = vpop.f32.mrf.mxu0
  %v2183 = vpop.f32.mrf.mxu0
  %v2184 = vadd.f32 %v1320, %v2183
  %v2185 = vpop.f32.mrf.mxu0
  %2186 = vmatprep.mubr.bf16.mxu0 %v1583
  %2187 = vmatmul.mubr.bf16.gmra.mxu0 %v1582
  %v2188 = vpop.f32.mrf.mxu0
  %v2189 = vadd.f32 %v1320, %v2188
  %v2190 = vpop.f32.mrf.mxu0
  %v2191 = vpop.f32.mrf.mxu0
  %v2192 = vadd.f32 %v1320, %v2191
  %v2193 = vpop.f32.mrf.mxu0
  %2194 = vmatprep.mubr.bf16.mxu0 %v1592
  %2195 = vmatmul.mubr.bf16.gmra.mxu0 %v1591
  %v2196 = vpop.f32.mrf.mxu0
  %v2197 = vadd.f32 %v1320, %v2196
  %v2198 = vpop.f32.mrf.mxu0
  %v2199 = vpop.f32.mrf.mxu0
  %v2200 = vadd.f32 %v1320, %v2199
  %v2201 = vpop.f32.mrf.mxu0
  %2202 = vmatprep.mubr.bf16.mxu0 %v1601
  %2203 = vmatmul.mubr.bf16.gmra.mxu0 %v1600
  %v2204 = vpop.f32.mrf.mxu0
  %v2205 = vadd.f32 %v1320, %v2204
  %v2206 = vpop.f32.mrf.mxu0
  %v2207 = vpop.f32.mrf.mxu0
  %v2208 = vadd.f32 %v1320, %v2207
  %v2209 = vpop.f32.mrf.mxu0
  %2210 = vmatprep.mubr.bf16.mxu0 %v1610
  %2211 = vmatmul.mubr.bf16.gmra.mxu0 %v1609
  %v2212 = vpop.f32.mrf.mxu0
  %v2213 = vadd.f32 %v1320, %v2212
  %v2214 = vpop.f32.mrf.mxu0
  %v2215 = vpop.f32.mrf.mxu0
  %v2216 = vadd.f32 %v1320, %v2215
  %v2217 = vpop.f32.mrf.mxu0
  %2218 = vdwg.mxu0
  %2219 = vmatprep.subr.bf16.mxu0 0
  %2220 = vmatpush1.bf16.msra.mxu0 %v2001
  %2221 = vmatprep.subr.bf16.mxu0 0
  %2222 = vmatpush1.bf16.msra.mxu0 %v2000
  %2223 = vmatprep.subr.bf16.mxu0 0
  %2224 = vmatpush1.bf16.msra.mxu0 %v1999
  %2225 = vmatprep.subr.bf16.mxu0 0
  %2226 = vmatpush1.bf16.msra.mxu0 %v1998
  %2227 = vmatprep.subr.bf16.mxu0 0
  %2228 = vmatpush1.bf16.msra.mxu0 %v1997
  %2229 = vmatprep.subr.bf16.mxu0 0
  %2230 = vmatpush1.bf16.msra.mxu0 %v1996
  %2231 = vmatprep.subr.bf16.mxu0 0
  %2232 = vmatpush1.bf16.msra.mxu0 %v1995
  %2233 = vmatprep.subr.bf16.mxu0 0
  %2234 = vmatpush1.bf16.msra.mxu0 %v1994
  %2235 = vmatprep.subr.bf16.mxu0 0
  %2236 = vmatpush2.bf16.msra.mxu0 %v2009
  %2237 = vmatprep.subr.bf16.mxu0 0
  %2238 = vmatpush2.bf16.msra.mxu0 %v2008
  %2239 = vmatprep.subr.bf16.mxu0 0
  %2240 = vmatpush2.bf16.msra.mxu0 %v2007
  %2241 = vmatprep.subr.bf16.mxu0 0
  %2242 = vmatpush2.bf16.msra.mxu0 %v2006
  %2243 = vmatprep.subr.bf16.mxu0 0
  %2244 = vmatpush2.bf16.msra.mxu0 %v2005
  %2245 = vmatprep.subr.bf16.mxu0 0
  %2246 = vmatpush2.bf16.msra.mxu0 %v2004
  %2247 = vmatprep.subr.bf16.mxu0 0
  %2248 = vmatpush2.bf16.msra.mxu0 %v2003
  %2249 = vmatprep.subr.bf16.mxu0 0
  %2250 = vmatpush2.bf16.msra.mxu0 %v2002
  %2251 = vmatprep.mubr.bf16.mxu0 %v1549
  %2252 = vmatmul.mubr.bf16.gmra.mxu0 %v1548
  %v2253 = vpop.f32.mrf.mxu0
  %v2254 = vadd.f32 %v2157, %v2253
  %v2255 = vpop.f32.mrf.mxu0
  %v2256 = vpop.f32.mrf.mxu0
  %v2257 = vadd.f32 %v2160, %v2256
  %v2258 = vpop.f32.mrf.mxu0
  %2259 = vmatprep.mubr.bf16.mxu0 %v1558
  %2260 = vmatmul.mubr.bf16.gmra.mxu0 %v1557
  %v2261 = vpop.f32.mrf.mxu0
  %v2262 = vadd.f32 %v2165, %v2261
  %v2263 = vpop.f32.mrf.mxu0
  %v2264 = vpop.f32.mrf.mxu0
  %v2265 = vadd.f32 %v2168, %v2264
  %v2266 = vpop.f32.mrf.mxu0
  %2267 = vmatprep.mubr.bf16.mxu0 %v1567
  %2268 = vmatmul.mubr.bf16.gmra.mxu0 %v1566
  %v2269 = vpop.f32.mrf.mxu0
  %v2270 = vadd.f32 %v2173, %v2269
  %v2271 = vpop.f32.mrf.mxu0
  %v2272 = vpop.f32.mrf.mxu0
  %v2273 = vadd.f32 %v2176, %v2272
  %v2274 = vpop.f32.mrf.mxu0
  %2275 = vmatprep.mubr.bf16.mxu0 %v1576
  %2276 = vmatmul.mubr.bf16.gmra.mxu0 %v1575
  %v2277 = vpop.f32.mrf.mxu0
  %v2278 = vadd.f32 %v2181, %v2277
  %v2279 = vpop.f32.mrf.mxu0
  %v2280 = vpop.f32.mrf.mxu0
  %v2281 = vadd.f32 %v2184, %v2280
  %v2282 = vpop.f32.mrf.mxu0
  %2283 = vmatprep.mubr.bf16.mxu0 %v1585
  %2284 = vmatmul.mubr.bf16.gmra.mxu0 %v1584
  %v2285 = vpop.f32.mrf.mxu0
  %v2286 = vadd.f32 %v2189, %v2285
  %v2287 = vpop.f32.mrf.mxu0
  %v2288 = vpop.f32.mrf.mxu0
  %v2289 = vadd.f32 %v2192, %v2288
  %v2290 = vpop.f32.mrf.mxu0
  %2291 = vmatprep.mubr.bf16.mxu0 %v1594
  %2292 = vmatmul.mubr.bf16.gmra.mxu0 %v1593
  %v2293 = vpop.f32.mrf.mxu0
  %v2294 = vadd.f32 %v2197, %v2293
  %v2295 = vpop.f32.mrf.mxu0
  %v2296 = vpop.f32.mrf.mxu0
  %v2297 = vadd.f32 %v2200, %v2296
  %v2298 = vpop.f32.mrf.mxu0
  %2299 = vmatprep.mubr.bf16.mxu0 %v1603
  %2300 = vmatmul.mubr.bf16.gmra.mxu0 %v1602
  %v2301 = vpop.f32.mrf.mxu0
  %v2302 = vadd.f32 %v2205, %v2301
  %v2303 = vpop.f32.mrf.mxu0
  %v2304 = vpop.f32.mrf.mxu0
  %v2305 = vadd.f32 %v2208, %v2304
  %v2306 = vpop.f32.mrf.mxu0
  %2307 = vmatprep.mubr.bf16.mxu0 %v1612
  %2308 = vmatmul.mubr.bf16.gmra.mxu0 %v1611
  %v2309 = vpop.f32.mrf.mxu0
  %v2310 = vadd.f32 %v2213, %v2309
  %v2311 = vpop.f32.mrf.mxu0
  %v2312 = vpop.f32.mrf.mxu0
  %v2313 = vadd.f32 %v2216, %v2312
  %v2314 = vpop.f32.mrf.mxu0
  %2315 = vdwg.mxu0
  %2316 = vmatprep.subr.bf16.mxu0 0
  %2317 = vmatpush1.bf16.msra.mxu0 %v2017
  %2318 = vmatprep.subr.bf16.mxu0 0
  %2319 = vmatpush1.bf16.msra.mxu0 %v2016
  %2320 = vmatprep.subr.bf16.mxu0 0
  %2321 = vmatpush1.bf16.msra.mxu0 %v2015
  %2322 = vmatprep.subr.bf16.mxu0 0
  %2323 = vmatpush1.bf16.msra.mxu0 %v2014
  %2324 = vmatprep.subr.bf16.mxu0 0
  %2325 = vmatpush1.bf16.msra.mxu0 %v2013
  %2326 = vmatprep.subr.bf16.mxu0 0
  %2327 = vmatpush1.bf16.msra.mxu0 %v2012
  %2328 = vmatprep.subr.bf16.mxu0 0
  %2329 = vmatpush1.bf16.msra.mxu0 %v2011
  %2330 = vmatprep.subr.bf16.mxu0 0
  %2331 = vmatpush1.bf16.msra.mxu0 %v2010
  %2332 = vmatprep.subr.bf16.mxu0 0
  %2333 = vmatpush2.bf16.msra.mxu0 %v2025
  %2334 = vmatprep.subr.bf16.mxu0 0
  %2335 = vmatpush2.bf16.msra.mxu0 %v2024
  %2336 = vmatprep.subr.bf16.mxu0 0
  %2337 = vmatpush2.bf16.msra.mxu0 %v2023
  %2338 = vmatprep.subr.bf16.mxu0 0
  %2339 = vmatpush2.bf16.msra.mxu0 %v2022
  %2340 = vmatprep.subr.bf16.mxu0 0
  %2341 = vmatpush2.bf16.msra.mxu0 %v2021
  %2342 = vmatprep.subr.bf16.mxu0 0
  %2343 = vmatpush2.bf16.msra.mxu0 %v2020
  %2344 = vmatprep.subr.bf16.mxu0 0
  %2345 = vmatpush2.bf16.msra.mxu0 %v2019
  %2346 = vmatprep.subr.bf16.mxu0 0
  %2347 = vmatpush2.bf16.msra.mxu0 %v2018
  %2348 = vmatprep.mubr.bf16.mxu0 %v1551
  %2349 = vmatmul.mubr.bf16.gmra.mxu0 %v1550
  %v2350 = vpop.f32.mrf.mxu0
  %v2351 = vadd.f32 %v2254, %v2350
  %v2352 = vpop.f32.mrf.mxu0
  %v2353 = vpop.f32.mrf.mxu0
  %v2354 = vadd.f32 %v2257, %v2353
  %v2355 = vpop.f32.mrf.mxu0
  %2356 = vmatprep.mubr.bf16.mxu0 %v1560
  %2357 = vmatmul.mubr.bf16.gmra.mxu0 %v1559
  %v2358 = vpop.f32.mrf.mxu0
  %v2359 = vadd.f32 %v2262, %v2358
  %v2360 = vpop.f32.mrf.mxu0
  %v2361 = vpop.f32.mrf.mxu0
  %v2362 = vadd.f32 %v2265, %v2361
  %v2363 = vpop.f32.mrf.mxu0
  %2364 = vmatprep.mubr.bf16.mxu0 %v1569
  %2365 = vmatmul.mubr.bf16.gmra.mxu0 %v1568
  %v2366 = vpop.f32.mrf.mxu0
  %v2367 = vadd.f32 %v2270, %v2366
  %v2368 = vpop.f32.mrf.mxu0
  %v2369 = vpop.f32.mrf.mxu0
  %v2370 = vadd.f32 %v2273, %v2369
  %v2371 = vpop.f32.mrf.mxu0
  %2372 = vmatprep.mubr.bf16.mxu0 %v1578
  %2373 = vmatmul.mubr.bf16.gmra.mxu0 %v1577
  %v2374 = vpop.f32.mrf.mxu0
  %v2375 = vadd.f32 %v2278, %v2374
  %v2376 = vpop.f32.mrf.mxu0
  %v2377 = vpop.f32.mrf.mxu0
  %v2378 = vadd.f32 %v2281, %v2377
  %v2379 = vpop.f32.mrf.mxu0
  %2380 = vmatprep.mubr.bf16.mxu0 %v1587
  %2381 = vmatmul.mubr.bf16.gmra.mxu0 %v1586
  %v2382 = vpop.f32.mrf.mxu0
  %v2383 = vadd.f32 %v2286, %v2382
  %v2384 = vpop.f32.mrf.mxu0
  %v2385 = vpop.f32.mrf.mxu0
  %v2386 = vadd.f32 %v2289, %v2385
  %v2387 = vpop.f32.mrf.mxu0
  %2388 = vmatprep.mubr.bf16.mxu0 %v1596
  %2389 = vmatmul.mubr.bf16.gmra.mxu0 %v1595
  %v2390 = vpop.f32.mrf.mxu0
  %v2391 = vadd.f32 %v2294, %v2390
  %v2392 = vpop.f32.mrf.mxu0
  %v2393 = vpop.f32.mrf.mxu0
  %v2394 = vadd.f32 %v2297, %v2393
  %v2395 = vpop.f32.mrf.mxu0
  %2396 = vmatprep.mubr.bf16.mxu0 %v1605
  %2397 = vmatmul.mubr.bf16.gmra.mxu0 %v1604
  %v2398 = vpop.f32.mrf.mxu0
  %v2399 = vadd.f32 %v2302, %v2398
  %v2400 = vpop.f32.mrf.mxu0
  %v2401 = vpop.f32.mrf.mxu0
  %v2402 = vadd.f32 %v2305, %v2401
  %v2403 = vpop.f32.mrf.mxu0
  %2404 = vmatprep.mubr.bf16.mxu0 %v1614
  %2405 = vmatmul.mubr.bf16.gmra.mxu0 %v1613
  %v2406 = vpop.f32.mrf.mxu0
  %v2407 = vadd.f32 %v2310, %v2406
  %v2408 = vpop.f32.mrf.mxu0
  %v2409 = vpop.f32.mrf.mxu0
  %v2410 = vadd.f32 %v2313, %v2409
  %v2411 = vpop.f32.mrf.mxu0
  %2412 = vdwg.mxu0
  %2413 = vmatprep.subr.bf16.mxu0 0
  %2414 = vmatpush1.bf16.msra.mxu0 %v2033
  %2415 = vmatprep.subr.bf16.mxu0 0
  %2416 = vmatpush1.bf16.msra.mxu0 %v2032
  %2417 = vmatprep.subr.bf16.mxu0 0
  %2418 = vmatpush1.bf16.msra.mxu0 %v2031
  %2419 = vmatprep.subr.bf16.mxu0 0
  %2420 = vmatpush1.bf16.msra.mxu0 %v2030
  %2421 = vmatprep.subr.bf16.mxu0 0
  %2422 = vmatpush1.bf16.msra.mxu0 %v2029
  %2423 = vmatprep.subr.bf16.mxu0 0
  %2424 = vmatpush1.bf16.msra.mxu0 %v2028
  %2425 = vmatprep.subr.bf16.mxu0 0
  %2426 = vmatpush1.bf16.msra.mxu0 %v2027
  %2427 = vmatprep.subr.bf16.mxu0 0
  %2428 = vmatpush1.bf16.msra.mxu0 %v2026
  %2429 = vmatprep.subr.bf16.mxu0 0
  %2430 = vmatpush2.bf16.msra.mxu0 %v2041
  %2431 = vmatprep.subr.bf16.mxu0 0
  %2432 = vmatpush2.bf16.msra.mxu0 %v2040
  %2433 = vmatprep.subr.bf16.mxu0 0
  %2434 = vmatpush2.bf16.msra.mxu0 %v2039
  %2435 = vmatprep.subr.bf16.mxu0 0
  %2436 = vmatpush2.bf16.msra.mxu0 %v2038
  %2437 = vmatprep.subr.bf16.mxu0 0
  %2438 = vmatpush2.bf16.msra.mxu0 %v2037
  %2439 = vmatprep.subr.bf16.mxu0 0
  %2440 = vmatpush2.bf16.msra.mxu0 %v2036
  %2441 = vmatprep.subr.bf16.mxu0 0
  %2442 = vmatpush2.bf16.msra.mxu0 %v2035
  %2443 = vmatprep.subr.bf16.mxu0 0
  %2444 = vmatpush2.bf16.msra.mxu0 %v2034
  %2445 = vmatprep.mubr.bf16.mxu0 %v1553
  %2446 = vmatmul.mubr.bf16.gmra.mxu0 %v1552
  %v2447 = vpop.f32.mrf.mxu0
  %v2448 = vadd.f32 %v2351, %v2447
  %v2449 = vpop.f32.mrf.mxu0
  %v2450 = vpop.f32.mrf.mxu0
  %v2451 = vadd.f32 %v2354, %v2450
  %v2452 = vpop.f32.mrf.mxu0
  %2453 = vmatprep.mubr.bf16.mxu0 %v1562
  %2454 = vmatmul.mubr.bf16.gmra.mxu0 %v1561
  %v2455 = vpop.f32.mrf.mxu0
  %v2456 = vadd.f32 %v2359, %v2455
  %v2457 = vpop.f32.mrf.mxu0
  %v2458 = vpop.f32.mrf.mxu0
  %v2459 = vadd.f32 %v2362, %v2458
  %v2460 = vpop.f32.mrf.mxu0
  %2461 = vmatprep.mubr.bf16.mxu0 %v1571
  %2462 = vmatmul.mubr.bf16.gmra.mxu0 %v1570
  %v2463 = vpop.f32.mrf.mxu0
  %v2464 = vadd.f32 %v2367, %v2463
  %v2465 = vpop.f32.mrf.mxu0
  %v2466 = vpop.f32.mrf.mxu0
  %v2467 = vadd.f32 %v2370, %v2466
  %v2468 = vpop.f32.mrf.mxu0
  %2469 = vmatprep.mubr.bf16.mxu0 %v1580
  %2470 = vmatmul.mubr.bf16.gmra.mxu0 %v1579
  %v2471 = vpop.f32.mrf.mxu0
  %v2472 = vadd.f32 %v2375, %v2471
  %v2473 = vpop.f32.mrf.mxu0
  %v2474 = vpop.f32.mrf.mxu0
  %v2475 = vadd.f32 %v2378, %v2474
  %v2476 = vpop.f32.mrf.mxu0
  %2477 = vmatprep.mubr.bf16.mxu0 %v1589
  %2478 = vmatmul.mubr.bf16.gmra.mxu0 %v1588
  %v2479 = vpop.f32.mrf.mxu0
  %v2480 = vadd.f32 %v2383, %v2479
  %v2481 = vpop.f32.mrf.mxu0
  %v2482 = vpop.f32.mrf.mxu0
  %v2483 = vadd.f32 %v2386, %v2482
  %v2484 = vpop.f32.mrf.mxu0
  %2485 = vmatprep.mubr.bf16.mxu0 %v1598
  %2486 = vmatmul.mubr.bf16.gmra.mxu0 %v1597
  %v2487 = vpop.f32.mrf.mxu0
  %v2488 = vadd.f32 %v2391, %v2487
  %v2489 = vpop.f32.mrf.mxu0
  %v2490 = vpop.f32.mrf.mxu0
  %v2491 = vadd.f32 %v2394, %v2490
  %v2492 = vpop.f32.mrf.mxu0
  %2493 = vmatprep.mubr.bf16.mxu0 %v1607
  %2494 = vmatmul.mubr.bf16.gmra.mxu0 %v1606
  %v2495 = vpop.f32.mrf.mxu0
  %v2496 = vadd.f32 %v2399, %v2495
  %v2497 = vpop.f32.mrf.mxu0
  %v2498 = vpop.f32.mrf.mxu0
  %v2499 = vadd.f32 %v2402, %v2498
  %v2500 = vpop.f32.mrf.mxu0
  %2501 = vmatprep.mubr.bf16.mxu0 %v1616
  %2502 = vmatmul.mubr.bf16.gmra.mxu0 %v1615
  %v2503 = vpop.f32.mrf.mxu0
  %v2504 = vadd.f32 %v2407, %v2503
  %v2505 = vpop.f32.mrf.mxu0
  %v2506 = vpop.f32.mrf.mxu0
  %v2507 = vadd.f32 %v2410, %v2506
  %v2508 = vpop.f32.mrf.mxu0
  %2509 = vdwg.mxu0
  %2510 = vmatprep.subr.bf16.mxu0 0
  %2511 = vmatpush1.bf16.msra.mxu0 %v2049
  %2512 = vmatprep.subr.bf16.mxu0 0
  %2513 = vmatpush1.bf16.msra.mxu0 %v2048
  %2514 = vmatprep.subr.bf16.mxu0 0
  %2515 = vmatpush1.bf16.msra.mxu0 %v2047
  %2516 = vmatprep.subr.bf16.mxu0 0
  %2517 = vmatpush1.bf16.msra.mxu0 %v2046
  %2518 = vmatprep.subr.bf16.mxu0 0
  %2519 = vmatpush1.bf16.msra.mxu0 %v2045
  %2520 = vmatprep.subr.bf16.mxu0 0
  %2521 = vmatpush1.bf16.msra.mxu0 %v2044
  %2522 = vmatprep.subr.bf16.mxu0 0
  %2523 = vmatpush1.bf16.msra.mxu0 %v2043
  %2524 = vmatprep.subr.bf16.mxu0 0
  %2525 = vmatpush1.bf16.msra.mxu0 %v2042
  %2526 = vmatprep.subr.bf16.mxu0 0
  %2527 = vmatpush2.bf16.msra.mxu0 0
  %2528 = vmatprep.subr.bf16.mxu0 0
  %2529 = vmatpush2.bf16.msra.mxu0 0
  %2530 = vmatprep.subr.bf16.mxu0 0
  %2531 = vmatpush2.bf16.msra.mxu0 0
  %2532 = vmatprep.subr.bf16.mxu0 0
  %2533 = vmatpush2.bf16.msra.mxu0 0
  %2534 = vmatprep.subr.bf16.mxu0 0
  %2535 = vmatpush2.bf16.msra.mxu0 0
  %2536 = vmatprep.subr.bf16.mxu0 0
  %2537 = vmatpush2.bf16.msra.mxu0 0
  %2538 = vmatprep.subr.bf16.mxu0 0
  %2539 = vmatpush2.bf16.msra.mxu0 0
  %2540 = vmatprep.subr.bf16.mxu0 0
  %2541 = vmatpush2.bf16.msra.mxu0 0
  %2542 = vmatprep.mubr.bf16.mxu0 0
  %2543 = vmatmul.mubr.bf16.gmra.mxu0 %v1554
  %v2544 = vpop.f32.mrf.mxu0
  %v2545 = vadd.f32 %v2448, %v2544
  %v2546 = vpop.f32.mrf.mxu0
  %v2547 = vpop.f32.mrf.mxu0
  %v2548 = vadd.f32 %v2451, %v2547
  %v2549 = vpop.f32.mrf.mxu0
  %2550 = vmatprep.mubr.bf16.mxu0 0
  %2551 = vmatmul.mubr.bf16.gmra.mxu0 %v1563
  %v2552 = vpop.f32.mrf.mxu0
  %v2553 = vadd.f32 %v2456, %v2552
  %v2554 = vpop.f32.mrf.mxu0
  %v2555 = vpop.f32.mrf.mxu0
  %v2556 = vadd.f32 %v2459, %v2555
  %v2557 = vpop.f32.mrf.mxu0
  %2558 = vmatprep.mubr.bf16.mxu0 0
  %2559 = vmatmul.mubr.bf16.gmra.mxu0 %v1572
  %v2560 = vpop.f32.mrf.mxu0
  %v2561 = vadd.f32 %v2464, %v2560
  %v2562 = vpop.f32.mrf.mxu0
  %v2563 = vpop.f32.mrf.mxu0
  %v2564 = vadd.f32 %v2467, %v2563
  %v2565 = vpop.f32.mrf.mxu0
  %2566 = vmatprep.mubr.bf16.mxu0 0
  %2567 = vmatmul.mubr.bf16.gmra.mxu0 %v1581
  %v2568 = vpop.f32.mrf.mxu0
  %v2569 = vadd.f32 %v2472, %v2568
  %v2570 = vpop.f32.mrf.mxu0
  %v2571 = vpop.f32.mrf.mxu0
  %v2572 = vadd.f32 %v2475, %v2571
  %v2573 = vpop.f32.mrf.mxu0
  %2574 = vmatprep.mubr.bf16.mxu0 0
  %2575 = vmatmul.mubr.bf16.gmra.mxu0 %v1590
  %v2576 = vpop.f32.mrf.mxu0
  %v2577 = vadd.f32 %v2480, %v2576
  %v2578 = vpop.f32.mrf.mxu0
  %v2579 = vpop.f32.mrf.mxu0
  %v2580 = vadd.f32 %v2483, %v2579
  %v2581 = vpop.f32.mrf.mxu0
  %2582 = vmatprep.mubr.bf16.mxu0 0
  %2583 = vmatmul.mubr.bf16.gmra.mxu0 %v1599
  %v2584 = vpop.f32.mrf.mxu0
  %v2585 = vadd.f32 %v2488, %v2584
  %v2586 = vpop.f32.mrf.mxu0
  %v2587 = vpop.f32.mrf.mxu0
  %v2588 = vadd.f32 %v2491, %v2587
  %v2589 = vpop.f32.mrf.mxu0
  %2590 = vmatprep.mubr.bf16.mxu0 0
  %2591 = vmatmul.mubr.bf16.gmra.mxu0 %v1608
  %v2592 = vpop.f32.mrf.mxu0
  %v2593 = vadd.f32 %v2496, %v2592
  %v2594 = vpop.f32.mrf.mxu0
  %v2595 = vpop.f32.mrf.mxu0
  %v2596 = vadd.f32 %v2499, %v2595
  %v2597 = vpop.f32.mrf.mxu0
  %2598 = vmatprep.mubr.bf16.mxu0 0
  %2599 = vmatmul.mubr.bf16.gmra.mxu0 %v1617
  %v2600 = vpop.f32.mrf.mxu0
  %v2601 = vadd.f32 %v2504, %v2600
  %v2602 = vpop.f32.mrf.mxu0
  %v2603 = vpop.f32.mrf.mxu0
  %v2604 = vadd.f32 %v2507, %v2603
  %v2605 = vpop.f32.mrf.mxu0
  %2606 = vdwg.mxu0
  %v2607 = vmax.f32 %v2545, 0.0
  %v2608 = vmax.f32 %v2548, 0.0
  %v2609 = vmax.f32 %v2553, 0.0
  %v2610 = vmax.f32 %v2556, 0.0
  %v2611 = vmax.f32 %v2561, 0.0
  %v2612 = vmax.f32 %v2564, 0.0
  %v2613 = vmax.f32 %v2569, 0.0
  %v2614 = vmax.f32 %v2572, 0.0
  %v2615 = vmax.f32 %v2577, 0.0
  %v2616 = vmax.f32 %v2580, 0.0
  %v2617 = vmax.f32 %v2585, 0.0
  %v2618 = vmax.f32 %v2588, 0.0
  %v2619 = vmax.f32 %v2593, 0.0
  %v2620 = vmax.f32 %v2596, 0.0
  %v2621 = vmax.f32 %v2601, 0.0
  %v2622 = vmax.f32 %v2604, 0.0
  %2623 = vst [vmem:[#allocation2] sm:$0xf] 0
  %2624 = vst [vmem:[#allocation2 + $0x4] sm:$0xf] 0
  %2625 = vst [vmem:[#allocation2 + $0x50] sm:$0xf] 0
  %2626 = vst [vmem:[#allocation2 + $0x54] sm:$0xf] 0
  %s2627 = scalar_lea.vmem [#allocation2], 72
  %2628 = vst [vmem:[%s2627] sm:$0xf] 0
  %2629 = vst [vmem:[%s2627 + $0x4] sm:$0xf] 0
  %2630 = vst [vmem:[%s2627 + $0x50] sm:$0xf] 0
  %2631 = vst [vmem:[%s2627 + $0x54] sm:$0xf] 0
  %vm2632 = vcmask 1040384
  %vm2633 = vsmask.f32 256
  %vm2634 = vmand %vm2632, %vm2633
  %v2635 = vld [vmem:[#allocation2] sm:$0x1]
  %v2636 = vsel %vm2634, 0, %v2635
  %2637 = vst [vmem:[#allocation2] sm:$0x1] %v2636
  %v2638 = vld [vmem:[#allocation2 + $0x8] sm:$0x1]
  %v2639 = vsel %vm2634, 0, %v2638
  %2640 = vst [vmem:[#allocation2 + $0x8] sm:$0x1] %v2639
  %v2641 = vld [vmem:[#allocation2 + $0x10] sm:$0x1]
  %v2642 = vsel %vm2634, 0, %v2641
  %2643 = vst [vmem:[#allocation2 + $0x10] sm:$0x1] %v2642
  %v2644 = vld [vmem:[#allocation2 + $0x18] sm:$0x1]
  %v2645 = vsel %vm2634, 0, %v2644
  %2646 = vst [vmem:[#allocation2 + $0x18] sm:$0x1] %v2645
  %v2647 = vld [vmem:[#allocation2 + $0x20] sm:$0x1]
  %v2648 = vsel %vm2634, 0, %v2647
  %2649 = vst [vmem:[#allocation2 + $0x20] sm:$0x1] %v2648
  %v2650 = vld [vmem:[#allocation2 + $0x28] sm:$0x1]
  %v2651 = vsel %vm2634, 0, %v2650
  %2652 = vst [vmem:[#allocation2 + $0x28] sm:$0x1] %v2651
  %v2653 = vld [vmem:[#allocation2 + $0x30] sm:$0x1]
  %v2654 = vsel %vm2634, 0, %v2653
  %2655 = vst [vmem:[#allocation2 + $0x30] sm:$0x1] %v2654
  %v2656 = vld [vmem:[#allocation2 + $0x38] sm:$0x1]
  %v2657 = vsel %vm2634, 0, %v2656
  %2658 = vst [vmem:[#allocation2 + $0x38] sm:$0x1] %v2657
  %v2659 = vld [vmem:[#allocation2 + $0x40] sm:$0x1]
  %v2660 = vsel %vm2634, 0, %v2659
  %2661 = vst [vmem:[#allocation2 + $0x40] sm:$0x1] %v2660
  %v2662 = vld [vmem:[#allocation2 + $0x48] sm:$0x1]
  %v2663 = vsel %vm2634, 0, %v2662
  %2664 = vst [vmem:[#allocation2 + $0x48] sm:$0x1] %v2663
  %v2665 = vld [vmem:[#allocation2 + $0x50] sm:$0x1]
  %v2666 = vsel %vm2634, 0, %v2665
  %2667 = vst [vmem:[#allocation2 + $0x50] sm:$0x1] %v2666
  %v2668 = vld [vmem:[#allocation2 + $0x58] sm:$0x1]
  %v2669 = vsel %vm2634, 0, %v2668
  %2670 = vst [vmem:[#allocation2 + $0x58] sm:$0x1] %v2669
  %v2671 = vld [vmem:[#allocation2 + $0x60] sm:$0x1]
  %v2672 = vsel %vm2634, 0, %v2671
  %2673 = vst [vmem:[#allocation2 + $0x60] sm:$0x1] %v2672
  %v2674 = vld [vmem:[#allocation2 + $0x68] sm:$0x1]
  %v2675 = vsel %vm2634, 0, %v2674
  %2676 = vst [vmem:[#allocation2 + $0x68] sm:$0x1] %v2675
  %v2677 = vld [vmem:[#allocation2 + $0x70] sm:$0x1]
  %v2678 = vsel %vm2634, 0, %v2677
  %2679 = vst [vmem:[#allocation2 + $0x70] sm:$0x1] %v2678
  %v2680 = vld [vmem:[#allocation2 + $0x78] sm:$0x1]
  %v2681 = vsel %vm2634, 0, %v2680
  %2682 = vst [vmem:[#allocation2 + $0x78] sm:$0x1] %v2681
  %v2683 = vld [vmem:[#allocation2 + $0x80] sm:$0x1]
  %v2684 = vsel %vm2634, 0, %v2683
  %2685 = vst [vmem:[#allocation2 + $0x80] sm:$0x1] %v2684
  %v2686 = vld [vmem:[#allocation2 + $0x88] sm:$0x1]
  %v2687 = vsel %vm2634, 0, %v2686
  %2688 = vst [vmem:[#allocation2 + $0x88] sm:$0x1] %v2687
  %v2689 = vld [vmem:[#allocation2 + $0x90] sm:$0x1]
  %v2690 = vsel %vm2634, 0, %v2689
  %2691 = vst [vmem:[#allocation2 + $0x90] sm:$0x1] %v2690
  %v2692 = vld [vmem:[#allocation2 + $0x98] sm:$0x1]
  %v2693 = vsel %vm2634, 0, %v2692
  %2694 = vst [vmem:[#allocation2 + $0x98] sm:$0x1] %v2693
  %vm2695 = vsmask.f32 7938
  %vm2696 = vmand %vm2632, %vm2695
  %v2697 = vld [vmem:[#allocation2 + $0x4] sm:$0x1]
  %v2698 = vsel %vm2696, 0, %v2697
  %2699 = vst [vmem:[#allocation2 + $0x4] sm:$0x1] %v2698
  %v2700 = vld [vmem:[#allocation2 + $0xc] sm:$0x1]
  %v2701 = vsel %vm2696, 0, %v2700
  %2702 = vst [vmem:[#allocation2 + $0xc] sm:$0x1] %v2701
  %v2703 = vld [vmem:[#allocation2 + $0x14] sm:$0x1]
  %v2704 = vsel %vm2696, 0, %v2703
  %2705 = vst [vmem:[#allocation2 + $0x14] sm:$0x1] %v2704
  %v2706 = vld [vmem:[#allocation2 + $0x1c] sm:$0x1]
  %v2707 = vsel %vm2696, 0, %v2706
  %2708 = vst [vmem:[#allocation2 + $0x1c] sm:$0x1] %v2707
  %v2709 = vld [vmem:[#allocation2 + $0x24] sm:$0x1]
  %v2710 = vsel %vm2696, 0, %v2709
  %2711 = vst [vmem:[#allocation2 + $0x24] sm:$0x1] %v2710
  %v2712 = vld [vmem:[#allocation2 + $0x2c] sm:$0x1]
  %v2713 = vsel %vm2696, 0, %v2712
  %2714 = vst [vmem:[#allocation2 + $0x2c] sm:$0x1] %v2713
  %v2715 = vld [vmem:[#allocation2 + $0x34] sm:$0x1]
  %v2716 = vsel %vm2696, 0, %v2715
  %2717 = vst [vmem:[#allocation2 + $0x34] sm:$0x1] %v2716
  %v2718 = vld [vmem:[#allocation2 + $0x3c] sm:$0x1]
  %v2719 = vsel %vm2696, 0, %v2718
  %2720 = vst [vmem:[#allocation2 + $0x3c] sm:$0x1] %v2719
  %v2721 = vld [vmem:[#allocation2 + $0x44] sm:$0x1]
  %v2722 = vsel %vm2696, 0, %v2721
  %2723 = vst [vmem:[#allocation2 + $0x44] sm:$0x1] %v2722
  %v2724 = vld [vmem:[#allocation2 + $0x4c] sm:$0x1]
  %v2725 = vsel %vm2696, 0, %v2724
  %2726 = vst [vmem:[#allocation2 + $0x4c] sm:$0x1] %v2725
  %v2727 = vld [vmem:[#allocation2 + $0x54] sm:$0x1]
  %v2728 = vsel %vm2696, 0, %v2727
  %2729 = vst [vmem:[#allocation2 + $0x54] sm:$0x1] %v2728
  %v2730 = vld [vmem:[#allocation2 + $0x5c] sm:$0x1]
  %v2731 = vsel %vm2696, 0, %v2730
  %2732 = vst [vmem:[#allocation2 + $0x5c] sm:$0x1] %v2731
  %v2733 = vld [vmem:[#allocation2 + $0x64] sm:$0x1]
  %v2734 = vsel %vm2696, 0, %v2733
  %2735 = vst [vmem:[#allocation2 + $0x64] sm:$0x1] %v2734
  %v2736 = vld [vmem:[#allocation2 + $0x6c] sm:$0x1]
  %v2737 = vsel %vm2696, 0, %v2736
  %2738 = vst [vmem:[#allocation2 + $0x6c] sm:$0x1] %v2737
  %v2739 = vld [vmem:[#allocation2 + $0x74] sm:$0x1]
  %v2740 = vsel %vm2696, 0, %v2739
  %2741 = vst [vmem:[#allocation2 + $0x74] sm:$0x1] %v2740
  %v2742 = vld [vmem:[#allocation2 + $0x7c] sm:$0x1]
  %v2743 = vsel %vm2696, 0, %v2742
  %2744 = vst [vmem:[#allocation2 + $0x7c] sm:$0x1] %v2743
  %v2745 = vld [vmem:[#allocation2 + $0x84] sm:$0x1]
  %v2746 = vsel %vm2696, 0, %v2745
  %2747 = vst [vmem:[#allocation2 + $0x84] sm:$0x1] %v2746
  %v2748 = vld [vmem:[#allocation2 + $0x8c] sm:$0x1]
  %v2749 = vsel %vm2696, 0, %v2748
  %2750 = vst [vmem:[#allocation2 + $0x8c] sm:$0x1] %v2749
  %v2751 = vld [vmem:[#allocation2 + $0x94] sm:$0x1]
  %v2752 = vsel %vm2696, 0, %v2751
  %2753 = vst [vmem:[#allocation2 + $0x94] sm:$0x1] %v2752
  %v2754 = vld [vmem:[#allocation2 + $0x9c] sm:$0x1]
  %v2755 = vsel %vm2696, 0, %v2754
  %2756 = vst [vmem:[#allocation2 + $0x9c] sm:$0x1] %v2755
  %v2757 = vpack.c.bf16 %v2607, %v2607
  %v2758 = vpack.c.bf16 %v2608, %v2608
  %v2759 = vpack.c.bf16 %v2609, %v2609
  %v2760 = vpack.c.bf16 %v2610, %v2610
  %v2761 = vpack.c.bf16 %v2611, %v2611
  %v2762 = vpack.c.bf16 %v2612, %v2612
  %v2763 = vpack.c.bf16 %v2613, %v2613
  %v2764 = vpack.c.bf16 %v2614, %v2614
  %v2765 = vpack.c.bf16 %v2615, %v2615
  %v2766 = vpack.c.bf16 %v2616, %v2616
  %v2767 = vpack.c.bf16 %v2617, %v2617
  %v2768 = vpack.c.bf16 %v2618, %v2618
  %v2769 = vpack.c.bf16 %v2619, %v2619
  %v2770 = vpack.c.bf16 %v2620, %v2620
  %v2771 = vpack.c.bf16 %v2621, %v2621
  %v2772 = vpack.c.bf16 %v2622, %v2622
  %v2789 = vunpack.c.l.b16 %v2757
  %v2790 = vunpack.c.l.b16 %v2758
  %v2791 = vunpack.c.l.b16 %v2759
  %v2792 = vunpack.c.l.b16 %v2760
  %v2793 = vunpack.c.l.b16 %v2761
  %v2794 = vunpack.c.l.b16 %v2762
  %v2795 = vunpack.c.l.b16 %v2763
  %v2796 = vunpack.c.l.b16 %v2764
  %v2797 = vunpack.c.l.b16 %v2765
  %v2798 = vunpack.c.l.b16 %v2766
  %v2799 = vunpack.c.l.b16 %v2767
  %v2800 = vunpack.c.l.b16 %v2768
  %v2801 = vunpack.c.l.b16 %v2769
  %v2802 = vunpack.c.l.b16 %v2770
  %v2803 = vunpack.c.l.b16 %v2771
  %v2804 = vunpack.c.l.b16 %v2772
  %v2805 = vpack.c.b16 %v2789, %v2789
  %v2806 = vpack.c.b16 %v2790, %v2790
  %v2807 = vpack.c.b16 %v2791, %v2791
  %v2808 = vpack.c.b16 %v2792, %v2792
  %v2809 = vpack.c.b16 %v2793, %v2793
  %v2810 = vpack.c.b16 %v2794, %v2794
  %v2811 = vpack.c.b16 %v2795, %v2795
  %v2812 = vpack.c.b16 %v2796, %v2796
  %v2813 = vpack.c.b16 %v2797, %v2797
  %v2814 = vpack.c.b16 %v2798, %v2798
  %v2815 = vpack.c.b16 %v2799, %v2799
  %v2816 = vpack.c.b16 %v2800, %v2800
  %v2817 = vpack.c.b16 %v2801, %v2801
  %v2818 = vpack.c.b16 %v2802, %v2802
  %v2819 = vpack.c.b16 %v2803, %v2803
  %v2820 = vpack.c.b16 %v2804, %v2804
  %v2822 = vshrl.u32 %v2805, 16
  %v2824 = vrot.slane %v2822, 7
  %v2825 = vshll.u32 %v2805, 16
  %v2827 = vor.u32 %v2824, %v2825
  %v2828 = vrot.slane %v2824, 4
  %v2830 = vshrl.u32 %v2806, 16
  %v2832 = vrot.slane %v2830, 7
  %v2833 = vshll.u32 %v2806, 16
  %v2835 = vor.u32 %v2832, %v2833
  %v2836 = vrot.slane %v2832, 4
  %v2838 = vshrl.u32 %v2807, 16
  %v2840 = vrot.slane %v2838, 7
  %v2841 = vshll.u32 %v2807, 16
  %v2843 = vor.u32 %v2840, %v2841
  %v2844 = vrot.slane %v2840, 4
  %v2846 = vshrl.u32 %v2808, 16
  %v2848 = vrot.slane %v2846, 7
  %v2849 = vshll.u32 %v2808, 16
  %v2851 = vor.u32 %v2848, %v2849
  %v2852 = vrot.slane %v2848, 4
  %v2854 = vshrl.u32 %v2809, 16
  %v2856 = vrot.slane %v2854, 7
  %v2857 = vshll.u32 %v2809, 16
  %v2859 = vor.u32 %v2856, %v2857
  %v2860 = vrot.slane %v2856, 4
  %v2862 = vshrl.u32 %v2810, 16
  %v2864 = vrot.slane %v2862, 7
  %v2865 = vshll.u32 %v2810, 16
  %v2867 = vor.u32 %v2864, %v2865
  %v2868 = vrot.slane %v2864, 4
  %v2870 = vshrl.u32 %v2811, 16
  %v2872 = vrot.slane %v2870, 7
  %v2873 = vshll.u32 %v2811, 16
  %v2875 = vor.u32 %v2872, %v2873
  %v2876 = vrot.slane %v2872, 4
  %v2878 = vshrl.u32 %v2812, 16
  %v2880 = vrot.slane %v2878, 7
  %v2881 = vshll.u32 %v2812, 16
  %v2883 = vor.u32 %v2880, %v2881
  %v2884 = vrot.slane %v2880, 4
  %v2886 = vshrl.u32 %v2813, 16
  %v2888 = vrot.slane %v2886, 7
  %v2889 = vshll.u32 %v2813, 16
  %v2891 = vor.u32 %v2888, %v2889
  %v2892 = vrot.slane %v2888, 4
  %v2894 = vshrl.u32 %v2814, 16
  %v2896 = vrot.slane %v2894, 7
  %v2897 = vshll.u32 %v2814, 16
  %v2899 = vor.u32 %v2896, %v2897
  %v2900 = vrot.slane %v2896, 4
  %v2902 = vshrl.u32 %v2815, 16
  %v2904 = vrot.slane %v2902, 7
  %v2905 = vshll.u32 %v2815, 16
  %v2907 = vor.u32 %v2904, %v2905
  %v2908 = vrot.slane %v2904, 4
  %v2910 = vshrl.u32 %v2816, 16
  %v2912 = vrot.slane %v2910, 7
  %v2913 = vshll.u32 %v2816, 16
  %v2915 = vor.u32 %v2912, %v2913
  %v2916 = vrot.slane %v2912, 4
  %v2918 = vshrl.u32 %v2817, 16
  %v2920 = vrot.slane %v2918, 7
  %v2921 = vshll.u32 %v2817, 16
  %v2923 = vor.u32 %v2920, %v2921
  %v2924 = vrot.slane %v2920, 4
  %v2926 = vshrl.u32 %v2818, 16
  %v2928 = vrot.slane %v2926, 7
  %v2929 = vshll.u32 %v2818, 16
  %v2931 = vor.u32 %v2928, %v2929
  %v2932 = vrot.slane %v2928, 4
  %v2934 = vshrl.u32 %v2819, 16
  %v2936 = vrot.slane %v2934, 7
  %v2937 = vshll.u32 %v2819, 16
  %v2939 = vor.u32 %v2936, %v2937
  %v2940 = vrot.slane %v2936, 4
  %v2942 = vshrl.u32 %v2820, 16
  %v2944 = vrot.slane %v2942, 7
  %v2945 = vshll.u32 %v2820, 16
  %v2947 = vor.u32 %v2944, %v2945
  %v2948 = vrot.slane %v2944, 4
  %s2981 = scalar_lea.vmem [#allocation2], 8
  %vm2982 = vcmask 1043456
  %vm2983 = vmand %vm2982, %vm2695
  %v2984 = vld [vmem:[%s2981] sm:$0xf]
  %v2985 = vsel %vm2983, %v2827, %v2984
  %2986 = vst [vmem:[%s2981] sm:$0xf] %v2985
  %v2987 = vld [vmem:[%s2981 + $0x4] sm:$0x1]
  %v2988 = vsel %vm2634, %v2828, %v2987
  %2989 = vst [vmem:[%s2981 + $0x4] sm:$0x1] %v2988
  %v2990 = vld [vmem:[%s2981 + $0x8] sm:$0xf]
  %v2991 = vsel %vm2983, %v2835, %v2990
  %2992 = vst [vmem:[%s2981 + $0x8] sm:$0xf] %v2991
  %v2993 = vld [vmem:[%s2981 + $0xc] sm:$0x1]
  %v2994 = vsel %vm2634, %v2836, %v2993
  %2995 = vst [vmem:[%s2981 + $0xc] sm:$0x1] %v2994
  %v2996 = vld [vmem:[%s2981 + $0x10] sm:$0xf]
  %v2997 = vsel %vm2983, %v2843, %v2996
  %2998 = vst [vmem:[%s2981 + $0x10] sm:$0xf] %v2997
  %v2999 = vld [vmem:[%s2981 + $0x14] sm:$0x1]
  %v3000 = vsel %vm2634, %v2844, %v2999
  %3001 = vst [vmem:[%s2981 + $0x14] sm:$0x1] %v3000
  %v3002 = vld [vmem:[%s2981 + $0x18] sm:$0xf]
  %v3003 = vsel %vm2983, %v2851, %v3002
  %3004 = vst [vmem:[%s2981 + $0x18] sm:$0xf] %v3003
  %v3005 = vld [vmem:[%s2981 + $0x1c] sm:$0x1]
  %v3006 = vsel %vm2634, %v2852, %v3005
  %3007 = vst [vmem:[%s2981 + $0x1c] sm:$0x1] %v3006
  %v3008 = vld [vmem:[%s2981 + $0x20] sm:$0xf]
  %v3009 = vsel %vm2983, %v2859, %v3008
  %3010 = vst [vmem:[%s2981 + $0x20] sm:$0xf] %v3009
  %v3011 = vld [vmem:[%s2981 + $0x24] sm:$0x1]
  %v3012 = vsel %vm2634, %v2860, %v3011
  %3013 = vst [vmem:[%s2981 + $0x24] sm:$0x1] %v3012
  %v3014 = vld [vmem:[%s2981 + $0x28] sm:$0xf]
  %v3015 = vsel %vm2983, %v2867, %v3014
  %3016 = vst [vmem:[%s2981 + $0x28] sm:$0xf] %v3015
  %v3017 = vld [vmem:[%s2981 + $0x2c] sm:$0x1]
  %v3018 = vsel %vm2634, %v2868, %v3017
  %3019 = vst [vmem:[%s2981 + $0x2c] sm:$0x1] %v3018
  %v3020 = vld [vmem:[%s2981 + $0x30] sm:$0xf]
  %v3021 = vsel %vm2983, %v2875, %v3020
  %3022 = vst [vmem:[%s2981 + $0x30] sm:$0xf] %v3021
  %v3023 = vld [vmem:[%s2981 + $0x34] sm:$0x1]
  %v3024 = vsel %vm2634, %v2876, %v3023
  %3025 = vst [vmem:[%s2981 + $0x34] sm:$0x1] %v3024
  %v3026 = vld [vmem:[%s2981 + $0x38] sm:$0xf]
  %v3027 = vsel %vm2983, %v2883, %v3026
  %3028 = vst [vmem:[%s2981 + $0x38] sm:$0xf] %v3027
  %v3029 = vld [vmem:[%s2981 + $0x3c] sm:$0x1]
  %v3030 = vsel %vm2634, %v2884, %v3029
  %3031 = vst [vmem:[%s2981 + $0x3c] sm:$0x1] %v3030
  %v3032 = vld [vmem:[%s2981 + $0x50] sm:$0xf]
  %v3033 = vsel %vm2983, %v2891, %v3032
  %3034 = vst [vmem:[%s2981 + $0x50] sm:$0xf] %v3033
  %v3035 = vld [vmem:[%s2981 + $0x54] sm:$0x1]
  %v3036 = vsel %vm2634, %v2892, %v3035
  %3037 = vst [vmem:[%s2981 + $0x54] sm:$0x1] %v3036
  %v3038 = vld [vmem:[%s2981 + $0x58] sm:$0xf]
  %v3039 = vsel %vm2983, %v2899, %v3038
  %3040 = vst [vmem:[%s2981 + $0x58] sm:$0xf] %v3039
  %v3041 = vld [vmem:[%s2981 + $0x5c] sm:$0x1]
  %v3042 = vsel %vm2634, %v2900, %v3041
  %3043 = vst [vmem:[%s2981 + $0x5c] sm:$0x1] %v3042
  %v3044 = vld [vmem:[%s2981 + $0x60] sm:$0xf]
  %v3045 = vsel %vm2983, %v2907, %v3044
  %3046 = vst [vmem:[%s2981 + $0x60] sm:$0xf] %v3045
  %v3047 = vld [vmem:[%s2981 + $0x64] sm:$0x1]
  %v3048 = vsel %vm2634, %v2908, %v3047
  %3049 = vst [vmem:[%s2981 + $0x64] sm:$0x1] %v3048
  %v3050 = vld [vmem:[%s2981 + $0x68] sm:$0xf]
  %v3051 = vsel %vm2983, %v2915, %v3050
  %3052 = vst [vmem:[%s2981 + $0x68] sm:$0xf] %v3051
  %v3053 = vld [vmem:[%s2981 + $0x6c] sm:$0x1]
  %v3054 = vsel %vm2634, %v2916, %v3053
  %3055 = vst [vmem:[%s2981 + $0x6c] sm:$0x1] %v3054
  %v3056 = vld [vmem:[%s2981 + $0x70] sm:$0xf]
  %v3057 = vsel %vm2983, %v2923, %v3056
  %3058 = vst [vmem:[%s2981 + $0x70] sm:$0xf] %v3057
  %v3059 = vld [vmem:[%s2981 + $0x74] sm:$0x1]
  %v3060 = vsel %vm2634, %v2924, %v3059
  %3061 = vst [vmem:[%s2981 + $0x74] sm:$0x1] %v3060
  %v3062 = vld [vmem:[%s2981 + $0x78] sm:$0xf]
  %v3063 = vsel %vm2983, %v2931, %v3062
  %3064 = vst [vmem:[%s2981 + $0x78] sm:$0xf] %v3063
  %v3065 = vld [vmem:[%s2981 + $0x7c] sm:$0x1]
  %v3066 = vsel %vm2634, %v2932, %v3065
  %3067 = vst [vmem:[%s2981 + $0x7c] sm:$0x1] %v3066
  %v3068 = vld [vmem:[%s2981 + $0x80] sm:$0xf]
  %v3069 = vsel %vm2983, %v2939, %v3068
  %3070 = vst [vmem:[%s2981 + $0x80] sm:$0xf] %v3069
  %v3071 = vld [vmem:[%s2981 + $0x84] sm:$0x1]
  %v3072 = vsel %vm2634, %v2940, %v3071
  %3073 = vst [vmem:[%s2981 + $0x84] sm:$0x1] %v3072
  %v3074 = vld [vmem:[%s2981 + $0x88] sm:$0xf]
  %v3075 = vsel %vm2983, %v2947, %v3074
  %3076 = vst [vmem:[%s2981 + $0x88] sm:$0xf] %v3075
  %v3077 = vld [vmem:[%s2981 + $0x8c] sm:$0x1]
  %v3078 = vsel %vm2634, %v2948, %v3077
  %3079 = vst [vmem:[%s2981 + $0x8c] sm:$0x1] %v3078
  %v3080 = vld [vmem:[#allocation2] sm:$0xf]
  %v3081 = vld [vmem:[#allocation2 + $0x8] sm:$0xf]
  %v3082 = vld [vmem:[#allocation2 + $0x10] sm:$0xf]
  %v3083 = vld [vmem:[#allocation2 + $0x18] sm:$0xf]
  %v3084 = vld [vmem:[#allocation2 + $0x20] sm:$0xf]
  %v3085 = vld [vmem:[#allocation2 + $0x28] sm:$0xf]
  %v3086 = vld [vmem:[#allocation2 + $0x30] sm:$0xf]
  %v3087 = vld [vmem:[#allocation2 + $0x38] sm:$0xf]
  %v3088 = vld [vmem:[#allocation2 + $0x50] sm:$0xf]
  %v3089 = vld [vmem:[#allocation2 + $0x58] sm:$0xf]
  %v3090 = vld [vmem:[#allocation2 + $0x60] sm:$0xf]
  %v3091 = vld [vmem:[#allocation2 + $0x68] sm:$0xf]
  %v3092 = vld [vmem:[#allocation2 + $0x70] sm:$0xf]
  %v3093 = vld [vmem:[#allocation2 + $0x78] sm:$0xf]
  %v3094 = vld [vmem:[#allocation2 + $0x80] sm:$0xf]
  %v3095 = vld [vmem:[#allocation2 + $0x88] sm:$0xf]
  %3096 = vst [vmem:[#allocation4] sm:$0xf] %v3080
  %3097 = vst [vmem:[#allocation4 + $0x24] sm:$0xf] %v3081
  %3098 = vst [vmem:[#allocation4 + $0x48] sm:$0xf] %v3082
  %3099 = vst [vmem:[#allocation4 + $0x6c] sm:$0xf] %v3083
  %3100 = vst [vmem:[#allocation4 + $0x90] sm:$0xf] %v3084
  %3101 = vst [vmem:[#allocation4 + $0xb4] sm:$0xf] %v3085
  %3102 = vst [vmem:[#allocation4 + $0xd8] sm:$0xf] %v3086
  %3103 = vst [vmem:[#allocation4 + $0xfc] sm:$0xf] %v3087
  %3104 = vst [vmem:[#allocation4 + $0x120] sm:$0xf] %v3088
  %3105 = vst [vmem:[#allocation4 + $0x144] sm:$0xf] %v3089
  %3106 = vst [vmem:[#allocation4 + $0x168] sm:$0xf] %v3090
  %3107 = vst [vmem:[#allocation4 + $0x18c] sm:$0xf] %v3091
  %3108 = vst [vmem:[#allocation4 + $0x1b0] sm:$0xf] %v3092
  %3109 = vst [vmem:[#allocation4 + $0x1d4] sm:$0xf] %v3093
  %3110 = vst [vmem:[#allocation4 + $0x1f8] sm:$0xf] %v3094
  %3111 = vst [vmem:[#allocation4 + $0x21c] sm:$0xf] %v3095
  %v3112 = vld [vmem:[#allocation2] sm:$0xf]
  %v3113 = vld [vmem:[#allocation2 + $0x4] sm:$0x1]
  %v3114 = vld [vmem:[#allocation2 + $0x8] sm:$0xf]
  %v3115 = vld [vmem:[#allocation2 + $0xc] sm:$0x1]
  %v3116 = vld [vmem:[#allocation2 + $0x10] sm:$0xf]
  %v3117 = vld [vmem:[#allocation2 + $0x14] sm:$0x1]
  %v3118 = vld [vmem:[#allocation2 + $0x18] sm:$0xf]
  %v3119 = vld [vmem:[#allocation2 + $0x1c] sm:$0x1]
  %v3120 = vld [vmem:[#allocation2 + $0x20] sm:$0xf]
  %v3121 = vld [vmem:[#allocation2 + $0x24] sm:$0x1]
  %v3122 = vld [vmem:[#allocation2 + $0x28] sm:$0xf]
  %v3123 = vld [vmem:[#allocation2 + $0x2c] sm:$0x1]
  %v3124 = vld [vmem:[#allocation2 + $0x30] sm:$0xf]
  %v3125 = vld [vmem:[#allocation2 + $0x34] sm:$0x1]
  %v3126 = vld [vmem:[#allocation2 + $0x38] sm:$0xf]
  %v3127 = vld [vmem:[#allocation2 + $0x3c] sm:$0x1]
  %v3128 = vld [vmem:[#allocation2 + $0x50] sm:$0xf]
  %v3129 = vld [vmem:[#allocation2 + $0x54] sm:$0x1]
  %v3130 = vld [vmem:[#allocation2 + $0x58] sm:$0xf]
  %v3131 = vld [vmem:[#allocation2 + $0x5c] sm:$0x1]
  %v3132 = vld [vmem:[#allocation2 + $0x60] sm:$0xf]
  %v3133 = vld [vmem:[#allocation2 + $0x64] sm:$0x1]
  %v3134 = vld [vmem:[#allocation2 + $0x68] sm:$0xf]
  %v3135 = vld [vmem:[#allocation2 + $0x6c] sm:$0x1]
  %v3136 = vld [vmem:[#allocation2 + $0x70] sm:$0xf]
  %v3137 = vld [vmem:[#allocation2 + $0x74] sm:$0x1]
  %v3138 = vld [vmem:[#allocation2 + $0x78] sm:$0xf]
  %v3139 = vld [vmem:[#allocation2 + $0x7c] sm:$0x1]
  %v3140 = vld [vmem:[#allocation2 + $0x80] sm:$0xf]
  %v3141 = vld [vmem:[#allocation2 + $0x84] sm:$0x1]
  %v3142 = vld [vmem:[#allocation2 + $0x88] sm:$0xf]
  %v3143 = vld [vmem:[#allocation2 + $0x8c] sm:$0x1]
  %v3145 = vshrl.u32 %v3112, 16
  %v3147 = vrot.slane %v3145, 4
  %v3148 = vshll.u32 %v3112, 16
  %v3150 = vrot.slane %v3148, 5
  %v3151 = vor.u32 %v3147, %v3150
  %v3152 = vrot.slane %v3151, 4
  %v3154 = vshll.u32 %v3113, 16
  %v3156 = vrot.slane %v3154, 5
  %v3157 = vsel %vm126, %v3152, %v3156
  %v3159 = vshrl.u32 %v3114, 16
  %v3161 = vrot.slane %v3159, 4
  %v3162 = vshll.u32 %v3114, 16
  %v3164 = vrot.slane %v3162, 5
  %v3165 = vor.u32 %v3161, %v3164
  %v3166 = vrot.slane %v3165, 4
  %v3168 = vshll.u32 %v3115, 16
  %v3170 = vrot.slane %v3168, 5
  %v3171 = vsel %vm126, %v3166, %v3170
  %v3173 = vshrl.u32 %v3116, 16
  %v3175 = vrot.slane %v3173, 4
  %v3176 = vshll.u32 %v3116, 16
  %v3178 = vrot.slane %v3176, 5
  %v3179 = vor.u32 %v3175, %v3178
  %v3180 = vrot.slane %v3179, 4
  %v3182 = vshll.u32 %v3117, 16
  %v3184 = vrot.slane %v3182, 5
  %v3185 = vsel %vm126, %v3180, %v3184
  %v3187 = vshrl.u32 %v3118, 16
  %v3189 = vrot.slane %v3187, 4
  %v3190 = vshll.u32 %v3118, 16
  %v3192 = vrot.slane %v3190, 5
  %v3193 = vor.u32 %v3189, %v3192
  %v3194 = vrot.slane %v3193, 4
  %v3196 = vshll.u32 %v3119, 16
  %v3198 = vrot.slane %v3196, 5
  %v3199 = vsel %vm126, %v3194, %v3198
  %v3201 = vshrl.u32 %v3120, 16
  %v3203 = vrot.slane %v3201, 4
  %v3204 = vshll.u32 %v3120, 16
  %v3206 = vrot.slane %v3204, 5
  %v3207 = vor.u32 %v3203, %v3206
  %v3208 = vrot.slane %v3207, 4
  %v3210 = vshll.u32 %v3121, 16
  %v3212 = vrot.slane %v3210, 5
  %v3213 = vsel %vm126, %v3208, %v3212
  %v3215 = vshrl.u32 %v3122, 16
  %v3217 = vrot.slane %v3215, 4
  %v3218 = vshll.u32 %v3122, 16
  %v3220 = vrot.slane %v3218, 5
  %v3221 = vor.u32 %v3217, %v3220
  %v3222 = vrot.slane %v3221, 4
  %v3224 = vshll.u32 %v3123, 16
  %v3226 = vrot.slane %v3224, 5
  %v3227 = vsel %vm126, %v3222, %v3226
  %v3229 = vshrl.u32 %v3124, 16
  %v3231 = vrot.slane %v3229, 4
  %v3232 = vshll.u32 %v3124, 16
  %v3234 = vrot.slane %v3232, 5
  %v3235 = vor.u32 %v3231, %v3234
  %v3236 = vrot.slane %v3235, 4
  %v3238 = vshll.u32 %v3125, 16
  %v3240 = vrot.slane %v3238, 5
  %v3241 = vsel %vm126, %v3236, %v3240
  %v3243 = vshrl.u32 %v3126, 16
  %v3245 = vrot.slane %v3243, 4
  %v3246 = vshll.u32 %v3126, 16
  %v3248 = vrot.slane %v3246, 5
  %v3249 = vor.u32 %v3245, %v3248
  %v3250 = vrot.slane %v3249, 4
  %v3252 = vshll.u32 %v3127, 16
  %v3254 = vrot.slane %v3252, 5
  %v3255 = vsel %vm126, %v3250, %v3254
  %v3257 = vshrl.u32 %v3128, 16
  %v3259 = vrot.slane %v3257, 4
  %v3260 = vshll.u32 %v3128, 16
  %v3262 = vrot.slane %v3260, 5
  %v3263 = vor.u32 %v3259, %v3262
  %v3264 = vrot.slane %v3263, 4
  %v3266 = vshll.u32 %v3129, 16
  %v3268 = vrot.slane %v3266, 5
  %v3269 = vsel %vm126, %v3264, %v3268
  %v3271 = vshrl.u32 %v3130, 16
  %v3273 = vrot.slane %v3271, 4
  %v3274 = vshll.u32 %v3130, 16
  %v3276 = vrot.slane %v3274, 5
  %v3277 = vor.u32 %v3273, %v3276
  %v3278 = vrot.slane %v3277, 4
  %v3280 = vshll.u32 %v3131, 16
  %v3282 = vrot.slane %v3280, 5
  %v3283 = vsel %vm126, %v3278, %v3282
  %v3285 = vshrl.u32 %v3132, 16
  %v3287 = vrot.slane %v3285, 4
  %v3288 = vshll.u32 %v3132, 16
  %v3290 = vrot.slane %v3288, 5
  %v3291 = vor.u32 %v3287, %v3290
  %v3292 = vrot.slane %v3291, 4
  %v3294 = vshll.u32 %v3133, 16
  %v3296 = vrot.slane %v3294, 5
  %v3297 = vsel %vm126, %v3292, %v3296
  %v3299 = vshrl.u32 %v3134, 16
  %v3301 = vrot.slane %v3299, 4
  %v3302 = vshll.u32 %v3134, 16
  %v3304 = vrot.slane %v3302, 5
  %v3305 = vor.u32 %v3301, %v3304
  %v3306 = vrot.slane %v3305, 4
  %v3308 = vshll.u32 %v3135, 16
  %v3310 = vrot.slane %v3308, 5
  %v3311 = vsel %vm126, %v3306, %v3310
  %v3313 = vshrl.u32 %v3136, 16
  %v3315 = vrot.slane %v3313, 4
  %v3316 = vshll.u32 %v3136, 16
  %v3318 = vrot.slane %v3316, 5
  %v3319 = vor.u32 %v3315, %v3318
  %v3320 = vrot.slane %v3319, 4
  %v3322 = vshll.u32 %v3137, 16
  %v3324 = vrot.slane %v3322, 5
  %v3325 = vsel %vm126, %v3320, %v3324
  %v3327 = vshrl.u32 %v3138, 16
  %v3329 = vrot.slane %v3327, 4
  %v3330 = vshll.u32 %v3138, 16
  %v3332 = vrot.slane %v3330, 5
  %v3333 = vor.u32 %v3329, %v3332
  %v3334 = vrot.slane %v3333, 4
  %v3336 = vshll.u32 %v3139, 16
  %v3338 = vrot.slane %v3336, 5
  %v3339 = vsel %vm126, %v3334, %v3338
  %v3341 = vshrl.u32 %v3140, 16
  %v3343 = vrot.slane %v3341, 4
  %v3344 = vshll.u32 %v3140, 16
  %v3346 = vrot.slane %v3344, 5
  %v3347 = vor.u32 %v3343, %v3346
  %v3348 = vrot.slane %v3347, 4
  %v3350 = vshll.u32 %v3141, 16
  %v3352 = vrot.slane %v3350, 5
  %v3353 = vsel %vm126, %v3348, %v3352
  %v3355 = vshrl.u32 %v3142, 16
  %v3357 = vrot.slane %v3355, 4
  %v3358 = vshll.u32 %v3142, 16
  %v3360 = vrot.slane %v3358, 5
  %v3361 = vor.u32 %v3357, %v3360
  %v3362 = vrot.slane %v3361, 4
  %v3364 = vshll.u32 %v3143, 16
  %v3366 = vrot.slane %v3364, 5
  %v3367 = vsel %vm126, %v3362, %v3366
  %3384 = vst [vmem:[#allocation4 + $0x4] sm:$0xf] %v3157
  %3385 = vst [vmem:[#allocation4 + $0x28] sm:$0xf] %v3171
  %3386 = vst [vmem:[#allocation4 + $0x4c] sm:$0xf] %v3185
  %3387 = vst [vmem:[#allocation4 + $0x70] sm:$0xf] %v3199
  %3388 = vst [vmem:[#allocation4 + $0x94] sm:$0xf] %v3213
  %3389 = vst [vmem:[#allocation4 + $0xb8] sm:$0xf] %v3227
  %3390 = vst [vmem:[#allocation4 + $0xdc] sm:$0xf] %v3241
  %3391 = vst [vmem:[#allocation4 + $0x100] sm:$0xf] %v3255
  %3392 = vst [vmem:[#allocation4 + $0x124] sm:$0xf] %v3269
  %3393 = vst [vmem:[#allocation4 + $0x148] sm:$0xf] %v3283
  %3394 = vst [vmem:[#allocation4 + $0x16c] sm:$0xf] %v3297
  %3395 = vst [vmem:[#allocation4 + $0x190] sm:$0xf] %v3311
  %3396 = vst [vmem:[#allocation4 + $0x1b4] sm:$0xf] %v3325
  %3397 = vst [vmem:[#allocation4 + $0x1d8] sm:$0xf] %v3339
  %3398 = vst [vmem:[#allocation4 + $0x1fc] sm:$0xf] %v3353
  %3399 = vst [vmem:[#allocation4 + $0x220] sm:$0xf] %v3367
  %v3400 = vld [vmem:[#allocation2] sm:$0xe]
  %v3401 = vld [vmem:[#allocation2 + $0x4] sm:$0x1]
  %v3402 = vld [vmem:[#allocation2 + $0x8] sm:$0xe]
  %v3403 = vld [vmem:[#allocation2 + $0xc] sm:$0x1]
  %v3404 = vld [vmem:[#allocation2 + $0x10] sm:$0xe]
  %v3405 = vld [vmem:[#allocation2 + $0x14] sm:$0x1]
  %v3406 = vld [vmem:[#allocation2 + $0x18] sm:$0xe]
  %v3407 = vld [vmem:[#allocation2 + $0x1c] sm:$0x1]
  %v3408 = vld [vmem:[#allocation2 + $0x20] sm:$0xe]
  %v3409 = vld [vmem:[#allocation2 + $0x24] sm:$0x1]
  %v3410 = vld [vmem:[#allocation2 + $0x28] sm:$0xe]
  %v3411 = vld [vmem:[#allocation2 + $0x2c] sm:$0x1]
  %v3412 = vld [vmem:[#allocation2 + $0x30] sm:$0xe]
  %v3413 = vld [vmem:[#allocation2 + $0x34] sm:$0x1]
  %v3414 = vld [vmem:[#allocation2 + $0x38] sm:$0xe]
  %v3415 = vld [vmem:[#allocation2 + $0x3c] sm:$0x1]
  %v3416 = vld [vmem:[#allocation2 + $0x50] sm:$0xe]
  %v3417 = vld [vmem:[#allocation2 + $0x54] sm:$0x1]
  %v3418 = vld [vmem:[#allocation2 + $0x58] sm:$0xe]
  %v3419 = vld [vmem:[#allocation2 + $0x5c] sm:$0x1]
  %v3420 = vld [vmem:[#allocation2 + $0x60] sm:$0xe]
  %v3421 = vld [vmem:[#allocation2 + $0x64] sm:$0x1]
  %v3422 = vld [vmem:[#allocation2 + $0x68] sm:$0xe]
  %v3423 = vld [vmem:[#allocation2 + $0x6c] sm:$0x1]
  %v3424 = vld [vmem:[#allocation2 + $0x70] sm:$0xe]
  %v3425 = vld [vmem:[#allocation2 + $0x74] sm:$0x1]
  %v3426 = vld [vmem:[#allocation2 + $0x78] sm:$0xe]
  %v3427 = vld [vmem:[#allocation2 + $0x7c] sm:$0x1]
  %v3428 = vld [vmem:[#allocation2 + $0x80] sm:$0xe]
  %v3429 = vld [vmem:[#allocation2 + $0x84] sm:$0x1]
  %v3430 = vld [vmem:[#allocation2 + $0x88] sm:$0xe]
  %v3431 = vld [vmem:[#allocation2 + $0x8c] sm:$0x1]
  %vm3464 = vcmask 1042432
  %vm3465 = vcmask 1046532
  %vm3466 = vmor %vm3464, %vm3465
  %v3467 = vrot.slane %v3400, 5
  %v3468 = vrot.slane %v3467, 4
  %v3469 = vrot.slane %v3401, 5
  %v3470 = vsel %vm3466, %v3468, %v3469
  %v3471 = vrot.slane %v3402, 5
  %v3472 = vrot.slane %v3471, 4
  %v3473 = vrot.slane %v3403, 5
  %v3474 = vsel %vm3466, %v3472, %v3473
  %v3475 = vrot.slane %v3404, 5
  %v3476 = vrot.slane %v3475, 4
  %v3477 = vrot.slane %v3405, 5
  %v3478 = vsel %vm3466, %v3476, %v3477
  %v3479 = vrot.slane %v3406, 5
  %v3480 = vrot.slane %v3479, 4
  %v3481 = vrot.slane %v3407, 5
  %v3482 = vsel %vm3466, %v3480, %v3481
  %v3483 = vrot.slane %v3408, 5
  %v3484 = vrot.slane %v3483, 4
  %v3485 = vrot.slane %v3409, 5
  %v3486 = vsel %vm3466, %v3484, %v3485
  %v3487 = vrot.slane %v3410, 5
  %v3488 = vrot.slane %v3487, 4
  %v3489 = vrot.slane %v3411, 5
  %v3490 = vsel %vm3466, %v3488, %v3489
  %v3491 = vrot.slane %v3412, 5
  %v3492 = vrot.slane %v3491, 4
  %v3493 = vrot.slane %v3413, 5
  %v3494 = vsel %vm3466, %v3492, %v3493
  %v3495 = vrot.slane %v3414, 5
  %v3496 = vrot.slane %v3495, 4
  %v3497 = vrot.slane %v3415, 5
  %v3498 = vsel %vm3466, %v3496, %v3497
  %v3499 = vrot.slane %v3416, 5
  %v3500 = vrot.slane %v3499, 4
  %v3501 = vrot.slane %v3417, 5
  %v3502 = vsel %vm3466, %v3500, %v3501
  %v3503 = vrot.slane %v3418, 5
  %v3504 = vrot.slane %v3503, 4
  %v3505 = vrot.slane %v3419, 5
  %v3506 = vsel %vm3466, %v3504, %v3505
  %v3507 = vrot.slane %v3420, 5
  %v3508 = vrot.slane %v3507, 4
  %v3509 = vrot.slane %v3421, 5
  %v3510 = vsel %vm3466, %v3508, %v3509
  %v3511 = vrot.slane %v3422, 5
  %v3512 = vrot.slane %v3511, 4
  %v3513 = vrot.slane %v3423, 5
  %v3514 = vsel %vm3466, %v3512, %v3513
  %v3515 = vrot.slane %v3424, 5
  %v3516 = vrot.slane %v3515, 4
  %v3517 = vrot.slane %v3425, 5
  %v3518 = vsel %vm3466, %v3516, %v3517
  %v3519 = vrot.slane %v3426, 5
  %v3520 = vrot.slane %v3519, 4
  %v3521 = vrot.slane %v3427, 5
  %v3522 = vsel %vm3466, %v3520, %v3521
  %v3523 = vrot.slane %v3428, 5
  %v3524 = vrot.slane %v3523, 4
  %v3525 = vrot.slane %v3429, 5
  %v3526 = vsel %vm3466, %v3524, %v3525
  %v3527 = vrot.slane %v3430, 5
  %v3528 = vrot.slane %v3527, 4
  %v3529 = vrot.slane %v3431, 5
  %v3530 = vsel %vm3466, %v3528, %v3529
  %3547 = vst [vmem:[#allocation4 + $0x8] sm:$0xf] %v3470
  %3548 = vst [vmem:[#allocation4 + $0x2c] sm:$0xf] %v3474
  %3549 = vst [vmem:[#allocation4 + $0x50] sm:$0xf] %v3478
  %3550 = vst [vmem:[#allocation4 + $0x74] sm:$0xf] %v3482
  %3551 = vst [vmem:[#allocation4 + $0x98] sm:$0xf] %v3486
  %3552 = vst [vmem:[#allocation4 + $0xbc] sm:$0xf] %v3490
  %3553 = vst [vmem:[#allocation4 + $0xe0] sm:$0xf] %v3494
  %3554 = vst [vmem:[#allocation4 + $0x104] sm:$0xf] %v3498
  %3555 = vst [vmem:[#allocation4 + $0x128] sm:$0xf] %v3502
  %3556 = vst [vmem:[#allocation4 + $0x14c] sm:$0xf] %v3506
  %3557 = vst [vmem:[#allocation4 + $0x170] sm:$0xf] %v3510
  %3558 = vst [vmem:[#allocation4 + $0x194] sm:$0xf] %v3514
  %3559 = vst [vmem:[#allocation4 + $0x1b8] sm:$0xf] %v3518
  %3560 = vst [vmem:[#allocation4 + $0x1dc] sm:$0xf] %v3522
  %3561 = vst [vmem:[#allocation4 + $0x200] sm:$0xf] %v3526
  %3562 = vst [vmem:[#allocation4 + $0x224] sm:$0xf] %v3530
  %v3563 = vld [vmem:[%s2981] sm:$0xf]
  %v3564 = vld [vmem:[%s2981 + $0x8] sm:$0xf]
  %v3565 = vld [vmem:[%s2981 + $0x10] sm:$0xf]
  %v3566 = vld [vmem:[%s2981 + $0x18] sm:$0xf]
  %v3567 = vld [vmem:[%s2981 + $0x20] sm:$0xf]
  %v3568 = vld [vmem:[%s2981 + $0x28] sm:$0xf]
  %v3569 = vld [vmem:[%s2981 + $0x30] sm:$0xf]
  %v3570 = vld [vmem:[%s2981 + $0x38] sm:$0xf]
  %v3571 = vld [vmem:[%s2981 + $0x50] sm:$0xf]
  %v3572 = vld [vmem:[%s2981 + $0x58] sm:$0xf]
  %v3573 = vld [vmem:[%s2981 + $0x60] sm:$0xf]
  %v3574 = vld [vmem:[%s2981 + $0x68] sm:$0xf]
  %v3575 = vld [vmem:[%s2981 + $0x70] sm:$0xf]
  %v3576 = vld [vmem:[%s2981 + $0x78] sm:$0xf]
  %v3577 = vld [vmem:[%s2981 + $0x80] sm:$0xf]
  %v3578 = vld [vmem:[%s2981 + $0x88] sm:$0xf]
  %3579 = vst [vmem:[#allocation4 + $0xc] sm:$0xf] %v3563
  %3580 = vst [vmem:[#allocation4 + $0x30] sm:$0xf] %v3564
  %3581 = vst [vmem:[#allocation4 + $0x54] sm:$0xf] %v3565
  %3582 = vst [vmem:[#allocation4 + $0x78] sm:$0xf] %v3566
  %3583 = vst [vmem:[#allocation4 + $0x9c] sm:$0xf] %v3567
  %3584 = vst [vmem:[#allocation4 + $0xc0] sm:$0xf] %v3568
  %3585 = vst [vmem:[#allocation4 + $0xe4] sm:$0xf] %v3569
  %3586 = vst [vmem:[#allocation4 + $0x108] sm:$0xf] %v3570
  %3587 = vst [vmem:[#allocation4 + $0x12c] sm:$0xf] %v3571
  %3588 = vst [vmem:[#allocation4 + $0x150] sm:$0xf] %v3572
  %3589 = vst [vmem:[#allocation4 + $0x174] sm:$0xf] %v3573
  %3590 = vst [vmem:[#allocation4 + $0x198] sm:$0xf] %v3574
  %3591 = vst [vmem:[#allocation4 + $0x1bc] sm:$0xf] %v3575
  %3592 = vst [vmem:[#allocation4 + $0x1e0] sm:$0xf] %v3576
  %3593 = vst [vmem:[#allocation4 + $0x204] sm:$0xf] %v3577
  %3594 = vst [vmem:[#allocation4 + $0x228] sm:$0xf] %v3578
  %v3595 = vld [vmem:[%s2981] sm:$0xf]
  %v3596 = vld [vmem:[%s2981 + $0x4] sm:$0x1]
  %v3597 = vld [vmem:[%s2981 + $0x8] sm:$0xf]
  %v3598 = vld [vmem:[%s2981 + $0xc] sm:$0x1]
  %v3599 = vld [vmem:[%s2981 + $0x10] sm:$0xf]
  %v3600 = vld [vmem:[%s2981 + $0x14] sm:$0x1]
  %v3601 = vld [vmem:[%s2981 + $0x18] sm:$0xf]
  %v3602 = vld [vmem:[%s2981 + $0x1c] sm:$0x1]
  %v3603 = vld [vmem:[%s2981 + $0x20] sm:$0xf]
  %v3604 = vld [vmem:[%s2981 + $0x24] sm:$0x1]
  %v3605 = vld [vmem:[%s2981 + $0x28] sm:$0xf]
  %v3606 = vld [vmem:[%s2981 + $0x2c] sm:$0x1]
  %v3607 = vld [vmem:[%s2981 + $0x30] sm:$0xf]
  %v3608 = vld [vmem:[%s2981 + $0x34] sm:$0x1]
  %v3609 = vld [vmem:[%s2981 + $0x38] sm:$0xf]
  %v3610 = vld [vmem:[%s2981 + $0x3c] sm:$0x1]
  %v3611 = vld [vmem:[%s2981 + $0x50] sm:$0xf]
  %v3612 = vld [vmem:[%s2981 + $0x54] sm:$0x1]
  %v3613 = vld [vmem:[%s2981 + $0x58] sm:$0xf]
  %v3614 = vld [vmem:[%s2981 + $0x5c] sm:$0x1]
  %v3615 = vld [vmem:[%s2981 + $0x60] sm:$0xf]
  %v3616 = vld [vmem:[%s2981 + $0x64] sm:$0x1]
  %v3617 = vld [vmem:[%s2981 + $0x68] sm:$0xf]
  %v3618 = vld [vmem:[%s2981 + $0x6c] sm:$0x1]
  %v3619 = vld [vmem:[%s2981 + $0x70] sm:$0xf]
  %v3620 = vld [vmem:[%s2981 + $0x74] sm:$0x1]
  %v3621 = vld [vmem:[%s2981 + $0x78] sm:$0xf]
  %v3622 = vld [vmem:[%s2981 + $0x7c] sm:$0x1]
  %v3623 = vld [vmem:[%s2981 + $0x80] sm:$0xf]
  %v3624 = vld [vmem:[%s2981 + $0x84] sm:$0x1]
  %v3625 = vld [vmem:[%s2981 + $0x88] sm:$0xf]
  %v3626 = vld [vmem:[%s2981 + $0x8c] sm:$0x1]
  %v3628 = vshrl.u32 %v3595, 16
  %v3630 = vrot.slane %v3628, 4
  %v3631 = vshll.u32 %v3595, 16
  %v3633 = vrot.slane %v3631, 5
  %v3634 = vor.u32 %v3630, %v3633
  %v3635 = vrot.slane %v3634, 4
  %v3637 = vshll.u32 %v3596, 16
  %v3639 = vrot.slane %v3637, 5
  %v3640 = vsel %vm126, %v3635, %v3639
  %v3642 = vshrl.u32 %v3597, 16
  %v3644 = vrot.slane %v3642, 4
  %v3645 = vshll.u32 %v3597, 16
  %v3647 = vrot.slane %v3645, 5
  %v3648 = vor.u32 %v3644, %v3647
  %v3649 = vrot.slane %v3648, 4
  %v3651 = vshll.u32 %v3598, 16
  %v3653 = vrot.slane %v3651, 5
  %v3654 = vsel %vm126, %v3649, %v3653
  %v3656 = vshrl.u32 %v3599, 16
  %v3658 = vrot.slane %v3656, 4
  %v3659 = vshll.u32 %v3599, 16
  %v3661 = vrot.slane %v3659, 5
  %v3662 = vor.u32 %v3658, %v3661
  %v3663 = vrot.slane %v3662, 4
  %v3665 = vshll.u32 %v3600, 16
  %v3667 = vrot.slane %v3665, 5
  %v3668 = vsel %vm126, %v3663, %v3667
  %v3670 = vshrl.u32 %v3601, 16
  %v3672 = vrot.slane %v3670, 4
  %v3673 = vshll.u32 %v3601, 16
  %v3675 = vrot.slane %v3673, 5
  %v3676 = vor.u32 %v3672, %v3675
  %v3677 = vrot.slane %v3676, 4
  %v3679 = vshll.u32 %v3602, 16
  %v3681 = vrot.slane %v3679, 5
  %v3682 = vsel %vm126, %v3677, %v3681
  %v3684 = vshrl.u32 %v3603, 16
  %v3686 = vrot.slane %v3684, 4
  %v3687 = vshll.u32 %v3603, 16
  %v3689 = vrot.slane %v3687, 5
  %v3690 = vor.u32 %v3686, %v3689
  %v3691 = vrot.slane %v3690, 4
  %v3693 = vshll.u32 %v3604, 16
  %v3695 = vrot.slane %v3693, 5
  %v3696 = vsel %vm126, %v3691, %v3695
  %v3698 = vshrl.u32 %v3605, 16
  %v3700 = vrot.slane %v3698, 4
  %v3701 = vshll.u32 %v3605, 16
  %v3703 = vrot.slane %v3701, 5
  %v3704 = vor.u32 %v3700, %v3703
  %v3705 = vrot.slane %v3704, 4
  %v3707 = vshll.u32 %v3606, 16
  %v3709 = vrot.slane %v3707, 5
  %v3710 = vsel %vm126, %v3705, %v3709
  %v3712 = vshrl.u32 %v3607, 16
  %v3714 = vrot.slane %v3712, 4
  %v3715 = vshll.u32 %v3607, 16
  %v3717 = vrot.slane %v3715, 5
  %v3718 = vor.u32 %v3714, %v3717
  %v3719 = vrot.slane %v3718, 4
  %v3721 = vshll.u32 %v3608, 16
  %v3723 = vrot.slane %v3721, 5
  %v3724 = vsel %vm126, %v3719, %v3723
  %v3726 = vshrl.u32 %v3609, 16
  %v3728 = vrot.slane %v3726, 4
  %v3729 = vshll.u32 %v3609, 16
  %v3731 = vrot.slane %v3729, 5
  %v3732 = vor.u32 %v3728, %v3731
  %v3733 = vrot.slane %v3732, 4
  %v3735 = vshll.u32 %v3610, 16
  %v3737 = vrot.slane %v3735, 5
  %v3738 = vsel %vm126, %v3733, %v3737
  %v3740 = vshrl.u32 %v3611, 16
  %v3742 = vrot.slane %v3740, 4
  %v3743 = vshll.u32 %v3611, 16
  %v3745 = vrot.slane %v3743, 5
  %v3746 = vor.u32 %v3742, %v3745
  %v3747 = vrot.slane %v3746, 4
  %v3749 = vshll.u32 %v3612, 16
  %v3751 = vrot.slane %v3749, 5
  %v3752 = vsel %vm126, %v3747, %v3751
  %v3754 = vshrl.u32 %v3613, 16
  %v3756 = vrot.slane %v3754, 4
  %v3757 = vshll.u32 %v3613, 16
  %v3759 = vrot.slane %v3757, 5
  %v3760 = vor.u32 %v3756, %v3759
  %v3761 = vrot.slane %v3760, 4
  %v3763 = vshll.u32 %v3614, 16
  %v3765 = vrot.slane %v3763, 5
  %v3766 = vsel %vm126, %v3761, %v3765
  %v3768 = vshrl.u32 %v3615, 16
  %v3770 = vrot.slane %v3768, 4
  %v3771 = vshll.u32 %v3615, 16
  %v3773 = vrot.slane %v3771, 5
  %v3774 = vor.u32 %v3770, %v3773
  %v3775 = vrot.slane %v3774, 4
  %v3777 = vshll.u32 %v3616, 16
  %v3779 = vrot.slane %v3777, 5
  %v3780 = vsel %vm126, %v3775, %v3779
  %v3782 = vshrl.u32 %v3617, 16
  %v3784 = vrot.slane %v3782, 4
  %v3785 = vshll.u32 %v3617, 16
  %v3787 = vrot.slane %v3785, 5
  %v3788 = vor.u32 %v3784, %v3787
  %v3789 = vrot.slane %v3788, 4
  %v3791 = vshll.u32 %v3618, 16
  %v3793 = vrot.slane %v3791, 5
  %v3794 = vsel %vm126, %v3789, %v3793
  %v3796 = vshrl.u32 %v3619, 16
  %v3798 = vrot.slane %v3796, 4
  %v3799 = vshll.u32 %v3619, 16
  %v3801 = vrot.slane %v3799, 5
  %v3802 = vor.u32 %v3798, %v3801
  %v3803 = vrot.slane %v3802, 4
  %v3805 = vshll.u32 %v3620, 16
  %v3807 = vrot.slane %v3805, 5
  %v3808 = vsel %vm126, %v3803, %v3807
  %v3810 = vshrl.u32 %v3621, 16
  %v3812 = vrot.slane %v3810, 4
  %v3813 = vshll.u32 %v3621, 16
  %v3815 = vrot.slane %v3813, 5
  %v3816 = vor.u32 %v3812, %v3815
  %v3817 = vrot.slane %v3816, 4
  %v3819 = vshll.u32 %v3622, 16
  %v3821 = vrot.slane %v3819, 5
  %v3822 = vsel %vm126, %v3817, %v3821
  %v3824 = vshrl.u32 %v3623, 16
  %v3826 = vrot.slane %v3824, 4
  %v3827 = vshll.u32 %v3623, 16
  %v3829 = vrot.slane %v3827, 5
  %v3830 = vor.u32 %v3826, %v3829
  %v3831 = vrot.slane %v3830, 4
  %v3833 = vshll.u32 %v3624, 16
  %v3835 = vrot.slane %v3833, 5
  %v3836 = vsel %vm126, %v3831, %v3835
  %v3838 = vshrl.u32 %v3625, 16
  %v3840 = vrot.slane %v3838, 4
  %v3841 = vshll.u32 %v3625, 16
  %v3843 = vrot.slane %v3841, 5
  %v3844 = vor.u32 %v3840, %v3843
  %v3845 = vrot.slane %v3844, 4
  %v3847 = vshll.u32 %v3626, 16
  %v3849 = vrot.slane %v3847, 5
  %v3850 = vsel %vm126, %v3845, %v3849
  %3867 = vst [vmem:[#allocation4 + $0x10] sm:$0xf] %v3640
  %3868 = vst [vmem:[#allocation4 + $0x34] sm:$0xf] %v3654
  %3869 = vst [vmem:[#allocation4 + $0x58] sm:$0xf] %v3668
  %3870 = vst [vmem:[#allocation4 + $0x7c] sm:$0xf] %v3682
  %3871 = vst [vmem:[#allocation4 + $0xa0] sm:$0xf] %v3696
  %3872 = vst [vmem:[#allocation4 + $0xc4] sm:$0xf] %v3710
  %3873 = vst [vmem:[#allocation4 + $0xe8] sm:$0xf] %v3724
  %3874 = vst [vmem:[#allocation4 + $0x10c] sm:$0xf] %v3738
  %3875 = vst [vmem:[#allocation4 + $0x130] sm:$0xf] %v3752
  %3876 = vst [vmem:[#allocation4 + $0x154] sm:$0xf] %v3766
  %3877 = vst [vmem:[#allocation4 + $0x178] sm:$0xf] %v3780
  %3878 = vst [vmem:[#allocation4 + $0x19c] sm:$0xf] %v3794
  %3879 = vst [vmem:[#allocation4 + $0x1c0] sm:$0xf] %v3808
  %3880 = vst [vmem:[#allocation4 + $0x1e4] sm:$0xf] %v3822
  %3881 = vst [vmem:[#allocation4 + $0x208] sm:$0xf] %v3836
  %3882 = vst [vmem:[#allocation4 + $0x22c] sm:$0xf] %v3850
  %v3883 = vld [vmem:[%s2981] sm:$0xe]
  %v3884 = vld [vmem:[%s2981 + $0x4] sm:$0x1]
  %v3885 = vld [vmem:[%s2981 + $0x8] sm:$0xe]
  %v3886 = vld [vmem:[%s2981 + $0xc] sm:$0x1]
  %v3887 = vld [vmem:[%s2981 + $0x10] sm:$0xe]
  %v3888 = vld [vmem:[%s2981 + $0x14] sm:$0x1]
  %v3889 = vld [vmem:[%s2981 + $0x18] sm:$0xe]
  %v3890 = vld [vmem:[%s2981 + $0x1c] sm:$0x1]
  %v3891 = vld [vmem:[%s2981 + $0x20] sm:$0xe]
  %v3892 = vld [vmem:[%s2981 + $0x24] sm:$0x1]
  %v3893 = vld [vmem:[%s2981 + $0x28] sm:$0xe]
  %v3894 = vld [vmem:[%s2981 + $0x2c] sm:$0x1]
  %v3895 = vld [vmem:[%s2981 + $0x30] sm:$0xe]
  %v3896 = vld [vmem:[%s2981 + $0x34] sm:$0x1]
  %v3897 = vld [vmem:[%s2981 + $0x38] sm:$0xe]
  %v3898 = vld [vmem:[%s2981 + $0x3c] sm:$0x1]
  %v3899 = vld [vmem:[%s2981 + $0x50] sm:$0xe]
  %v3900 = vld [vmem:[%s2981 + $0x54] sm:$0x1]
  %v3901 = vld [vmem:[%s2981 + $0x58] sm:$0xe]
  %v3902 = vld [vmem:[%s2981 + $0x5c] sm:$0x1]
  %v3903 = vld [vmem:[%s2981 + $0x60] sm:$0xe]
  %v3904 = vld [vmem:[%s2981 + $0x64] sm:$0x1]
  %v3905 = vld [vmem:[%s2981 + $0x68] sm:$0xe]
  %v3906 = vld [vmem:[%s2981 + $0x6c] sm:$0x1]
  %v3907 = vld [vmem:[%s2981 + $0x70] sm:$0xe]
  %v3908 = vld [vmem:[%s2981 + $0x74] sm:$0x1]
  %v3909 = vld [vmem:[%s2981 + $0x78] sm:$0xe]
  %v3910 = vld [vmem:[%s2981 + $0x7c] sm:$0x1]
  %v3911 = vld [vmem:[%s2981 + $0x80] sm:$0xe]
  %v3912 = vld [vmem:[%s2981 + $0x84] sm:$0x1]
  %v3913 = vld [vmem:[%s2981 + $0x88] sm:$0xe]
  %v3914 = vld [vmem:[%s2981 + $0x8c] sm:$0x1]
  %v3947 = vrot.slane %v3883, 5
  %v3948 = vrot.slane %v3947, 4
  %v3949 = vrot.slane %v3884, 5
  %v3950 = vsel %vm3466, %v3948, %v3949
  %v3951 = vrot.slane %v3885, 5
  %v3952 = vrot.slane %v3951, 4
  %v3953 = vrot.slane %v3886, 5
  %v3954 = vsel %vm3466, %v3952, %v3953
  %v3955 = vrot.slane %v3887, 5
  %v3956 = vrot.slane %v3955, 4
  %v3957 = vrot.slane %v3888, 5
  %v3958 = vsel %vm3466, %v3956, %v3957
  %v3959 = vrot.slane %v3889, 5
  %v3960 = vrot.slane %v3959, 4
  %v3961 = vrot.slane %v3890, 5
  %v3962 = vsel %vm3466, %v3960, %v3961
  %v3963 = vrot.slane %v3891, 5
  %v3964 = vrot.slane %v3963, 4
  %v3965 = vrot.slane %v3892, 5
  %v3966 = vsel %vm3466, %v3964, %v3965
  %v3967 = vrot.slane %v3893, 5
  %v3968 = vrot.slane %v3967, 4
  %v3969 = vrot.slane %v3894, 5
  %v3970 = vsel %vm3466, %v3968, %v3969
  %v3971 = vrot.slane %v3895, 5
  %v3972 = vrot.slane %v3971, 4
  %v3973 = vrot.slane %v3896, 5
  %v3974 = vsel %vm3466, %v3972, %v3973
  %v3975 = vrot.slane %v3897, 5
  %v3976 = vrot.slane %v3975, 4
  %v3977 = vrot.slane %v3898, 5
  %v3978 = vsel %vm3466, %v3976, %v3977
  %v3979 = vrot.slane %v3899, 5
  %v3980 = vrot.slane %v3979, 4
  %v3981 = vrot.slane %v3900, 5
  %v3982 = vsel %vm3466, %v3980, %v3981
  %v3983 = vrot.slane %v3901, 5
  %v3984 = vrot.slane %v3983, 4
  %v3985 = vrot.slane %v3902, 5
  %v3986 = vsel %vm3466, %v3984, %v3985
  %v3987 = vrot.slane %v3903, 5
  %v3988 = vrot.slane %v3987, 4
  %v3989 = vrot.slane %v3904, 5
  %v3990 = vsel %vm3466, %v3988, %v3989
  %v3991 = vrot.slane %v3905, 5
  %v3992 = vrot.slane %v3991, 4
  %v3993 = vrot.slane %v3906, 5
  %v3994 = vsel %vm3466, %v3992, %v3993
  %v3995 = vrot.slane %v3907, 5
  %v3996 = vrot.slane %v3995, 4
  %v3997 = vrot.slane %v3908, 5
  %v3998 = vsel %vm3466, %v3996, %v3997
  %v3999 = vrot.slane %v3909, 5
  %v4000 = vrot.slane %v3999, 4
  %v4001 = vrot.slane %v3910, 5
  %v4002 = vsel %vm3466, %v4000, %v4001
  %v4003 = vrot.slane %v3911, 5
  %v4004 = vrot.slane %v4003, 4
  %v4005 = vrot.slane %v3912, 5
  %v4006 = vsel %vm3466, %v4004, %v4005
  %v4007 = vrot.slane %v3913, 5
  %v4008 = vrot.slane %v4007, 4
  %v4009 = vrot.slane %v3914, 5
  %v4010 = vsel %vm3466, %v4008, %v4009
  %4027 = vst [vmem:[#allocation4 + $0x14] sm:$0xf] %v3950
  %4028 = vst [vmem:[#allocation4 + $0x38] sm:$0xf] %v3954
  %4029 = vst [vmem:[#allocation4 + $0x5c] sm:$0xf] %v3958
  %4030 = vst [vmem:[#allocation4 + $0x80] sm:$0xf] %v3962
  %4031 = vst [vmem:[#allocation4 + $0xa4] sm:$0xf] %v3966
  %4032 = vst [vmem:[#allocation4 + $0xc8] sm:$0xf] %v3970
  %4033 = vst [vmem:[#allocation4 + $0xec] sm:$0xf] %v3974
  %4034 = vst [vmem:[#allocation4 + $0x110] sm:$0xf] %v3978
  %4035 = vst [vmem:[#allocation4 + $0x134] sm:$0xf] %v3982
  %4036 = vst [vmem:[#allocation4 + $0x158] sm:$0xf] %v3986
  %4037 = vst [vmem:[#allocation4 + $0x17c] sm:$0xf] %v3990
  %4038 = vst [vmem:[#allocation4 + $0x1a0] sm:$0xf] %v3994
  %4039 = vst [vmem:[#allocation4 + $0x1c4] sm:$0xf] %v3998
  %4040 = vst [vmem:[#allocation4 + $0x1e8] sm:$0xf] %v4002
  %4041 = vst [vmem:[#allocation4 + $0x20c] sm:$0xf] %v4006
  %4042 = vst [vmem:[#allocation4 + $0x230] sm:$0xf] %v4010
  %s4043 = scalar_lea.vmem [#allocation2], 16
  %v4044 = vld [vmem:[%s4043] sm:$0xf]
  %v4045 = vld [vmem:[%s4043 + $0x8] sm:$0xf]
  %v4046 = vld [vmem:[%s4043 + $0x10] sm:$0xf]
  %v4047 = vld [vmem:[%s4043 + $0x18] sm:$0xf]
  %v4048 = vld [vmem:[%s4043 + $0x20] sm:$0xf]
  %v4049 = vld [vmem:[%s4043 + $0x28] sm:$0xf]
  %v4050 = vld [vmem:[%s4043 + $0x30] sm:$0xf]
  %v4051 = vld [vmem:[%s4043 + $0x38] sm:$0xf]
  %v4052 = vld [vmem:[%s4043 + $0x50] sm:$0xf]
  %v4053 = vld [vmem:[%s4043 + $0x58] sm:$0xf]
  %v4054 = vld [vmem:[%s4043 + $0x60] sm:$0xf]
  %v4055 = vld [vmem:[%s4043 + $0x68] sm:$0xf]
  %v4056 = vld [vmem:[%s4043 + $0x70] sm:$0xf]
  %v4057 = vld [vmem:[%s4043 + $0x78] sm:$0xf]
  %v4058 = vld [vmem:[%s4043 + $0x80] sm:$0xf]
  %v4059 = vld [vmem:[%s4043 + $0x88] sm:$0xf]
  %4060 = vst [vmem:[#allocation4 + $0x18] sm:$0xf] %v4044
  %4061 = vst [vmem:[#allocation4 + $0x3c] sm:$0xf] %v4045
  %4062 = vst [vmem:[#allocation4 + $0x60] sm:$0xf] %v4046
  %4063 = vst [vmem:[#allocation4 + $0x84] sm:$0xf] %v4047
  %4064 = vst [vmem:[#allocation4 + $0xa8] sm:$0xf] %v4048
  %4065 = vst [vmem:[#allocation4 + $0xcc] sm:$0xf] %v4049
  %4066 = vst [vmem:[#allocation4 + $0xf0] sm:$0xf] %v4050
  %4067 = vst [vmem:[#allocation4 + $0x114] sm:$0xf] %v4051
  %4068 = vst [vmem:[#allocation4 + $0x138] sm:$0xf] %v4052
  %4069 = vst [vmem:[#allocation4 + $0x15c] sm:$0xf] %v4053
  %4070 = vst [vmem:[#allocation4 + $0x180] sm:$0xf] %v4054
  %4071 = vst [vmem:[#allocation4 + $0x1a4] sm:$0xf] %v4055
  %4072 = vst [vmem:[#allocation4 + $0x1c8] sm:$0xf] %v4056
  %4073 = vst [vmem:[#allocation4 + $0x1ec] sm:$0xf] %v4057
  %4074 = vst [vmem:[#allocation4 + $0x210] sm:$0xf] %v4058
  %4075 = vst [vmem:[#allocation4 + $0x234] sm:$0xf] %v4059
  %v4076 = vld [vmem:[%s4043] sm:$0xf]
  %v4077 = vld [vmem:[%s4043 + $0x4] sm:$0x1]
  %v4078 = vld [vmem:[%s4043 + $0x8] sm:$0xf]
  %v4079 = vld [vmem:[%s4043 + $0xc] sm:$0x1]
  %v4080 = vld [vmem:[%s4043 + $0x10] sm:$0xf]
  %v4081 = vld [vmem:[%s4043 + $0x14] sm:$0x1]
  %v4082 = vld [vmem:[%s4043 + $0x18] sm:$0xf]
  %v4083 = vld [vmem:[%s4043 + $0x1c] sm:$0x1]
  %v4084 = vld [vmem:[%s4043 + $0x20] sm:$0xf]
  %v4085 = vld [vmem:[%s4043 + $0x24] sm:$0x1]
  %v4086 = vld [vmem:[%s4043 + $0x28] sm:$0xf]
  %v4087 = vld [vmem:[%s4043 + $0x2c] sm:$0x1]
  %v4088 = vld [vmem:[%s4043 + $0x30] sm:$0xf]
  %v4089 = vld [vmem:[%s4043 + $0x34] sm:$0x1]
  %v4090 = vld [vmem:[%s4043 + $0x38] sm:$0xf]
  %v4091 = vld [vmem:[%s4043 + $0x3c] sm:$0x1]
  %v4092 = vld [vmem:[%s4043 + $0x50] sm:$0xf]
  %v4093 = vld [vmem:[%s4043 + $0x54] sm:$0x1]
  %v4094 = vld [vmem:[%s4043 + $0x58] sm:$0xf]
  %v4095 = vld [vmem:[%s4043 + $0x5c] sm:$0x1]
  %v4096 = vld [vmem:[%s4043 + $0x60] sm:$0xf]
  %v4097 = vld [vmem:[%s4043 + $0x64] sm:$0x1]
  %v4098 = vld [vmem:[%s4043 + $0x68] sm:$0xf]
  %v4099 = vld [vmem:[%s4043 + $0x6c] sm:$0x1]
  %v4100 = vld [vmem:[%s4043 + $0x70] sm:$0xf]
  %v4101 = vld [vmem:[%s4043 + $0x74] sm:$0x1]
  %v4102 = vld [vmem:[%s4043 + $0x78] sm:$0xf]
  %v4103 = vld [vmem:[%s4043 + $0x7c] sm:$0x1]
  %v4104 = vld [vmem:[%s4043 + $0x80] sm:$0xf]
  %v4105 = vld [vmem:[%s4043 + $0x84] sm:$0x1]
  %v4106 = vld [vmem:[%s4043 + $0x88] sm:$0xf]
  %v4107 = vld [vmem:[%s4043 + $0x8c] sm:$0x1]
  %v4109 = vshrl.u32 %v4076, 16
  %v4111 = vrot.slane %v4109, 4
  %v4112 = vshll.u32 %v4076, 16
  %v4114 = vrot.slane %v4112, 5
  %v4115 = vor.u32 %v4111, %v4114
  %v4116 = vrot.slane %v4115, 4
  %v4118 = vshll.u32 %v4077, 16
  %v4120 = vrot.slane %v4118, 5
  %v4121 = vsel %vm126, %v4116, %v4120
  %v4123 = vshrl.u32 %v4078, 16
  %v4125 = vrot.slane %v4123, 4
  %v4126 = vshll.u32 %v4078, 16
  %v4128 = vrot.slane %v4126, 5
  %v4129 = vor.u32 %v4125, %v4128
  %v4130 = vrot.slane %v4129, 4
  %v4132 = vshll.u32 %v4079, 16
  %v4134 = vrot.slane %v4132, 5
  %v4135 = vsel %vm126, %v4130, %v4134
  %v4137 = vshrl.u32 %v4080, 16
  %v4139 = vrot.slane %v4137, 4
  %v4140 = vshll.u32 %v4080, 16
  %v4142 = vrot.slane %v4140, 5
  %v4143 = vor.u32 %v4139, %v4142
  %v4144 = vrot.slane %v4143, 4
  %v4146 = vshll.u32 %v4081, 16
  %v4148 = vrot.slane %v4146, 5
  %v4149 = vsel %vm126, %v4144, %v4148
  %v4151 = vshrl.u32 %v4082, 16
  %v4153 = vrot.slane %v4151, 4
  %v4154 = vshll.u32 %v4082, 16
  %v4156 = vrot.slane %v4154, 5
  %v4157 = vor.u32 %v4153, %v4156
  %v4158 = vrot.slane %v4157, 4
  %v4160 = vshll.u32 %v4083, 16
  %v4162 = vrot.slane %v4160, 5
  %v4163 = vsel %vm126, %v4158, %v4162
  %v4165 = vshrl.u32 %v4084, 16
  %v4167 = vrot.slane %v4165, 4
  %v4168 = vshll.u32 %v4084, 16
  %v4170 = vrot.slane %v4168, 5
  %v4171 = vor.u32 %v4167, %v4170
  %v4172 = vrot.slane %v4171, 4
  %v4174 = vshll.u32 %v4085, 16
  %v4176 = vrot.slane %v4174, 5
  %v4177 = vsel %vm126, %v4172, %v4176
  %v4179 = vshrl.u32 %v4086, 16
  %v4181 = vrot.slane %v4179, 4
  %v4182 = vshll.u32 %v4086, 16
  %v4184 = vrot.slane %v4182, 5
  %v4185 = vor.u32 %v4181, %v4184
  %v4186 = vrot.slane %v4185, 4
  %v4188 = vshll.u32 %v4087, 16
  %v4190 = vrot.slane %v4188, 5
  %v4191 = vsel %vm126, %v4186, %v4190
  %v4193 = vshrl.u32 %v4088, 16
  %v4195 = vrot.slane %v4193, 4
  %v4196 = vshll.u32 %v4088, 16
  %v4198 = vrot.slane %v4196, 5
  %v4199 = vor.u32 %v4195, %v4198
  %v4200 = vrot.slane %v4199, 4
  %v4202 = vshll.u32 %v4089, 16
  %v4204 = vrot.slane %v4202, 5
  %v4205 = vsel %vm126, %v4200, %v4204
  %v4207 = vshrl.u32 %v4090, 16
  %v4209 = vrot.slane %v4207, 4
  %v4210 = vshll.u32 %v4090, 16
  %v4212 = vrot.slane %v4210, 5
  %v4213 = vor.u32 %v4209, %v4212
  %v4214 = vrot.slane %v4213, 4
  %v4216 = vshll.u32 %v4091, 16
  %v4218 = vrot.slane %v4216, 5
  %v4219 = vsel %vm126, %v4214, %v4218
  %v4221 = vshrl.u32 %v4092, 16
  %v4223 = vrot.slane %v4221, 4
  %v4224 = vshll.u32 %v4092, 16
  %v4226 = vrot.slane %v4224, 5
  %v4227 = vor.u32 %v4223, %v4226
  %v4228 = vrot.slane %v4227, 4
  %v4230 = vshll.u32 %v4093, 16
  %v4232 = vrot.slane %v4230, 5
  %v4233 = vsel %vm126, %v4228, %v4232
  %v4235 = vshrl.u32 %v4094, 16
  %v4237 = vrot.slane %v4235, 4
  %v4238 = vshll.u32 %v4094, 16
  %v4240 = vrot.slane %v4238, 5
  %v4241 = vor.u32 %v4237, %v4240
  %v4242 = vrot.slane %v4241, 4
  %v4244 = vshll.u32 %v4095, 16
  %v4246 = vrot.slane %v4244, 5
  %v4247 = vsel %vm126, %v4242, %v4246
  %v4249 = vshrl.u32 %v4096, 16
  %v4251 = vrot.slane %v4249, 4
  %v4252 = vshll.u32 %v4096, 16
  %v4254 = vrot.slane %v4252, 5
  %v4255 = vor.u32 %v4251, %v4254
  %v4256 = vrot.slane %v4255, 4
  %v4258 = vshll.u32 %v4097, 16
  %v4260 = vrot.slane %v4258, 5
  %v4261 = vsel %vm126, %v4256, %v4260
  %v4263 = vshrl.u32 %v4098, 16
  %v4265 = vrot.slane %v4263, 4
  %v4266 = vshll.u32 %v4098, 16
  %v4268 = vrot.slane %v4266, 5
  %v4269 = vor.u32 %v4265, %v4268
  %v4270 = vrot.slane %v4269, 4
  %v4272 = vshll.u32 %v4099, 16
  %v4274 = vrot.slane %v4272, 5
  %v4275 = vsel %vm126, %v4270, %v4274
  %v4277 = vshrl.u32 %v4100, 16
  %v4279 = vrot.slane %v4277, 4
  %v4280 = vshll.u32 %v4100, 16
  %v4282 = vrot.slane %v4280, 5
  %v4283 = vor.u32 %v4279, %v4282
  %v4284 = vrot.slane %v4283, 4
  %v4286 = vshll.u32 %v4101, 16
  %v4288 = vrot.slane %v4286, 5
  %v4289 = vsel %vm126, %v4284, %v4288
  %v4291 = vshrl.u32 %v4102, 16
  %v4293 = vrot.slane %v4291, 4
  %v4294 = vshll.u32 %v4102, 16
  %v4296 = vrot.slane %v4294, 5
  %v4297 = vor.u32 %v4293, %v4296
  %v4298 = vrot.slane %v4297, 4
  %v4300 = vshll.u32 %v4103, 16
  %v4302 = vrot.slane %v4300, 5
  %v4303 = vsel %vm126, %v4298, %v4302
  %v4305 = vshrl.u32 %v4104, 16
  %v4307 = vrot.slane %v4305, 4
  %v4308 = vshll.u32 %v4104, 16
  %v4310 = vrot.slane %v4308, 5
  %v4311 = vor.u32 %v4307, %v4310
  %v4312 = vrot.slane %v4311, 4
  %v4314 = vshll.u32 %v4105, 16
  %v4316 = vrot.slane %v4314, 5
  %v4317 = vsel %vm126, %v4312, %v4316
  %v4319 = vshrl.u32 %v4106, 16
  %v4321 = vrot.slane %v4319, 4
  %v4322 = vshll.u32 %v4106, 16
  %v4324 = vrot.slane %v4322, 5
  %v4325 = vor.u32 %v4321, %v4324
  %v4326 = vrot.slane %v4325, 4
  %v4328 = vshll.u32 %v4107, 16
  %v4330 = vrot.slane %v4328, 5
  %v4331 = vsel %vm126, %v4326, %v4330
  %4348 = vst [vmem:[#allocation4 + $0x1c] sm:$0xf] %v4121
  %4349 = vst [vmem:[#allocation4 + $0x40] sm:$0xf] %v4135
  %4350 = vst [vmem:[#allocation4 + $0x64] sm:$0xf] %v4149
  %4351 = vst [vmem:[#allocation4 + $0x88] sm:$0xf] %v4163
  %4352 = vst [vmem:[#allocation4 + $0xac] sm:$0xf] %v4177
  %4353 = vst [vmem:[#allocation4 + $0xd0] sm:$0xf] %v4191
  %4354 = vst [vmem:[#allocation4 + $0xf4] sm:$0xf] %v4205
  %4355 = vst [vmem:[#allocation4 + $0x118] sm:$0xf] %v4219
  %4356 = vst [vmem:[#allocation4 + $0x13c] sm:$0xf] %v4233
  %4357 = vst [vmem:[#allocation4 + $0x160] sm:$0xf] %v4247
  %4358 = vst [vmem:[#allocation4 + $0x184] sm:$0xf] %v4261
  %4359 = vst [vmem:[#allocation4 + $0x1a8] sm:$0xf] %v4275
  %4360 = vst [vmem:[#allocation4 + $0x1cc] sm:$0xf] %v4289
  %4361 = vst [vmem:[#allocation4 + $0x1f0] sm:$0xf] %v4303
  %4362 = vst [vmem:[#allocation4 + $0x214] sm:$0xf] %v4317
  %4363 = vst [vmem:[#allocation4 + $0x238] sm:$0xf] %v4331
  %v4364 = vld [vmem:[%s4043] sm:$0xe]
  %v4365 = vld [vmem:[%s4043 + $0x4] sm:$0x1]
  %v4366 = vld [vmem:[%s4043 + $0x8] sm:$0xe]
  %v4367 = vld [vmem:[%s4043 + $0xc] sm:$0x1]
  %v4368 = vld [vmem:[%s4043 + $0x10] sm:$0xe]
  %v4369 = vld [vmem:[%s4043 + $0x14] sm:$0x1]
  %v4370 = vld [vmem:[%s4043 + $0x18] sm:$0xe]
  %v4371 = vld [vmem:[%s4043 + $0x1c] sm:$0x1]
  %v4372 = vld [vmem:[%s4043 + $0x20] sm:$0xe]
  %v4373 = vld [vmem:[%s4043 + $0x24] sm:$0x1]
  %v4374 = vld [vmem:[%s4043 + $0x28] sm:$0xe]
  %v4375 = vld [vmem:[%s4043 + $0x2c] sm:$0x1]
  %v4376 = vld [vmem:[%s4043 + $0x30] sm:$0xe]
  %v4377 = vld [vmem:[%s4043 + $0x34] sm:$0x1]
  %v4378 = vld [vmem:[%s4043 + $0x38] sm:$0xe]
  %v4379 = vld [vmem:[%s4043 + $0x3c] sm:$0x1]
  %v4380 = vld [vmem:[%s4043 + $0x50] sm:$0xe]
  %v4381 = vld [vmem:[%s4043 + $0x54] sm:$0x1]
  %v4382 = vld [vmem:[%s4043 + $0x58] sm:$0xe]
  %v4383 = vld [vmem:[%s4043 + $0x5c] sm:$0x1]
  %v4384 = vld [vmem:[%s4043 + $0x60] sm:$0xe]
  %v4385 = vld [vmem:[%s4043 + $0x64] sm:$0x1]
  %v4386 = vld [vmem:[%s4043 + $0x68] sm:$0xe]
  %v4387 = vld [vmem:[%s4043 + $0x6c] sm:$0x1]
  %v4388 = vld [vmem:[%s4043 + $0x70] sm:$0xe]
  %v4389 = vld [vmem:[%s4043 + $0x74] sm:$0x1]
  %v4390 = vld [vmem:[%s4043 + $0x78] sm:$0xe]
  %v4391 = vld [vmem:[%s4043 + $0x7c] sm:$0x1]
  %v4392 = vld [vmem:[%s4043 + $0x80] sm:$0xe]
  %v4393 = vld [vmem:[%s4043 + $0x84] sm:$0x1]
  %v4394 = vld [vmem:[%s4043 + $0x88] sm:$0xe]
  %v4395 = vld [vmem:[%s4043 + $0x8c] sm:$0x1]
  %v4428 = vrot.slane %v4364, 5
  %v4429 = vrot.slane %v4428, 4
  %v4430 = vrot.slane %v4365, 5
  %v4431 = vsel %vm3466, %v4429, %v4430
  %v4432 = vrot.slane %v4366, 5
  %v4433 = vrot.slane %v4432, 4
  %v4434 = vrot.slane %v4367, 5
  %v4435 = vsel %vm3466, %v4433, %v4434
  %v4436 = vrot.slane %v4368, 5
  %v4437 = vrot.slane %v4436, 4
  %v4438 = vrot.slane %v4369, 5
  %v4439 = vsel %vm3466, %v4437, %v4438
  %v4440 = vrot.slane %v4370, 5
  %v4441 = vrot.slane %v4440, 4
  %v4442 = vrot.slane %v4371, 5
  %v4443 = vsel %vm3466, %v4441, %v4442
  %v4444 = vrot.slane %v4372, 5
  %v4445 = vrot.slane %v4444, 4
  %v4446 = vrot.slane %v4373, 5
  %v4447 = vsel %vm3466, %v4445, %v4446
  %v4448 = vrot.slane %v4374, 5
  %v4449 = vrot.slane %v4448, 4
  %v4450 = vrot.slane %v4375, 5
  %v4451 = vsel %vm3466, %v4449, %v4450
  %v4452 = vrot.slane %v4376, 5
  %v4453 = vrot.slane %v4452, 4
  %v4454 = vrot.slane %v4377, 5
  %v4455 = vsel %vm3466, %v4453, %v4454
  %v4456 = vrot.slane %v4378, 5
  %v4457 = vrot.slane %v4456, 4
  %v4458 = vrot.slane %v4379, 5
  %v4459 = vsel %vm3466, %v4457, %v4458
  %v4460 = vrot.slane %v4380, 5
  %v4461 = vrot.slane %v4460, 4
  %v4462 = vrot.slane %v4381, 5
  %v4463 = vsel %vm3466, %v4461, %v4462
  %v4464 = vrot.slane %v4382, 5
  %v4465 = vrot.slane %v4464, 4
  %v4466 = vrot.slane %v4383, 5
  %v4467 = vsel %vm3466, %v4465, %v4466
  %v4468 = vrot.slane %v4384, 5
  %v4469 = vrot.slane %v4468, 4
  %v4470 = vrot.slane %v4385, 5
  %v4471 = vsel %vm3466, %v4469, %v4470
  %v4472 = vrot.slane %v4386, 5
  %v4473 = vrot.slane %v4472, 4
  %v4474 = vrot.slane %v4387, 5
  %v4475 = vsel %vm3466, %v4473, %v4474
  %v4476 = vrot.slane %v4388, 5
  %v4477 = vrot.slane %v4476, 4
  %v4478 = vrot.slane %v4389, 5
  %v4479 = vsel %vm3466, %v4477, %v4478
  %v4480 = vrot.slane %v4390, 5
  %v4481 = vrot.slane %v4480, 4
  %v4482 = vrot.slane %v4391, 5
  %v4483 = vsel %vm3466, %v4481, %v4482
  %v4484 = vrot.slane %v4392, 5
  %v4485 = vrot.slane %v4484, 4
  %v4486 = vrot.slane %v4393, 5
  %v4487 = vsel %vm3466, %v4485, %v4486
  %v4488 = vrot.slane %v4394, 5
  %v4489 = vrot.slane %v4488, 4
  %v4490 = vrot.slane %v4395, 5
  %v4491 = vsel %vm3466, %v4489, %v4490
  %4508 = vst [vmem:[#allocation4 + $0x20] sm:$0xf] %v4431
  %4509 = vst [vmem:[#allocation4 + $0x44] sm:$0xf] %v4435
  %4510 = vst [vmem:[#allocation4 + $0x68] sm:$0xf] %v4439
  %4511 = vst [vmem:[#allocation4 + $0x8c] sm:$0xf] %v4443
  %4512 = vst [vmem:[#allocation4 + $0xb0] sm:$0xf] %v4447
  %4513 = vst [vmem:[#allocation4 + $0xd4] sm:$0xf] %v4451
  %4514 = vst [vmem:[#allocation4 + $0xf8] sm:$0xf] %v4455
  %4515 = vst [vmem:[#allocation4 + $0x11c] sm:$0xf] %v4459
  %4516 = vst [vmem:[#allocation4 + $0x140] sm:$0xf] %v4463
  %4517 = vst [vmem:[#allocation4 + $0x164] sm:$0xf] %v4467
  %4518 = vst [vmem:[#allocation4 + $0x188] sm:$0xf] %v4471
  %4519 = vst [vmem:[#allocation4 + $0x1ac] sm:$0xf] %v4475
  %4520 = vst [vmem:[#allocation4 + $0x1d0] sm:$0xf] %v4479
  %4521 = vst [vmem:[#allocation4 + $0x1f4] sm:$0xf] %v4483
  %4522 = vst [vmem:[#allocation4 + $0x218] sm:$0xf] %v4487
  %4523 = vst [vmem:[#allocation4 + $0x23c] sm:$0xf] %v4491
  %v4524 = vld [vmem:[#allocation4] sm:$0xff]
  %v4525 = vld [vmem:[#allocation4 + $0x8] sm:$0xff]
  %v4526 = vld [vmem:[#allocation4 + $0x10] sm:$0xff]
  %v4527 = vld [vmem:[#allocation4 + $0x18] sm:$0xff]
  %v4528 = vld [vmem:[#allocation4 + $0x20] sm:$0xf]
  %v4529 = vld [vmem:[#allocation4 + $0x24] sm:$0xff]
  %v4530 = vld [vmem:[#allocation4 + $0x2c] sm:$0xff]
  %v4531 = vld [vmem:[#allocation4 + $0x34] sm:$0xff]
  %v4532 = vld [vmem:[#allocation4 + $0x3c] sm:$0xff]
  %v4533 = vld [vmem:[#allocation4 + $0x44] sm:$0xf]
  %v4534 = vld [vmem:[#allocation4 + $0x48] sm:$0xff]
  %v4535 = vld [vmem:[#allocation4 + $0x50] sm:$0xff]
  %v4536 = vld [vmem:[#allocation4 + $0x58] sm:$0xff]
  %v4537 = vld [vmem:[#allocation4 + $0x60] sm:$0xff]
  %v4538 = vld [vmem:[#allocation4 + $0x68] sm:$0xf]
  %v4539 = vld [vmem:[#allocation4 + $0x6c] sm:$0xff]
  %v4540 = vld [vmem:[#allocation4 + $0x74] sm:$0xff]
  %v4541 = vld [vmem:[#allocation4 + $0x7c] sm:$0xff]
  %v4542 = vld [vmem:[#allocation4 + $0x84] sm:$0xff]
  %v4543 = vld [vmem:[#allocation4 + $0x8c] sm:$0xf]
  %v4544 = vld [vmem:[#allocation4 + $0x90] sm:$0xff]
  %v4545 = vld [vmem:[#allocation4 + $0x98] sm:$0xff]
  %v4546 = vld [vmem:[#allocation4 + $0xa0] sm:$0xff]
  %v4547 = vld [vmem:[#allocation4 + $0xa8] sm:$0xff]
  %v4548 = vld [vmem:[#allocation4 + $0xb0] sm:$0xf]
  %v4549 = vld [vmem:[#allocation4 + $0xb4] sm:$0xff]
  %v4550 = vld [vmem:[#allocation4 + $0xbc] sm:$0xff]
  %v4551 = vld [vmem:[#allocation4 + $0xc4] sm:$0xff]
  %v4552 = vld [vmem:[#allocation4 + $0xcc] sm:$0xff]
  %v4553 = vld [vmem:[#allocation4 + $0xd4] sm:$0xf]
  %v4554 = vld [vmem:[#allocation4 + $0xd8] sm:$0xff]
  %v4555 = vld [vmem:[#allocation4 + $0xe0] sm:$0xff]
  %v4556 = vld [vmem:[#allocation4 + $0xe8] sm:$0xff]
  %v4557 = vld [vmem:[#allocation4 + $0xf0] sm:$0xff]
  %v4558 = vld [vmem:[#allocation4 + $0xf8] sm:$0xf]
  %v4559 = vld [vmem:[#allocation4 + $0xfc] sm:$0xff]
  %v4560 = vld [vmem:[#allocation4 + $0x104] sm:$0xff]
  %v4561 = vld [vmem:[#allocation4 + $0x10c] sm:$0xff]
  %v4562 = vld [vmem:[#allocation4 + $0x114] sm:$0xff]
  %v4563 = vld [vmem:[#allocation4 + $0x11c] sm:$0xf]
  %v4564 = vld [vmem:[#allocation4 + $0x120] sm:$0xff]
  %v4565 = vld [vmem:[#allocation4 + $0x128] sm:$0xff]
  %v4566 = vld [vmem:[#allocation4 + $0x130] sm:$0xff]
  %v4567 = vld [vmem:[#allocation4 + $0x138] sm:$0xff]
  %v4568 = vld [vmem:[#allocation4 + $0x140] sm:$0xf]
  %v4569 = vld [vmem:[#allocation4 + $0x144] sm:$0xff]
  %v4570 = vld [vmem:[#allocation4 + $0x14c] sm:$0xff]
  %v4571 = vld [vmem:[#allocation4 + $0x154] sm:$0xff]
  %v4572 = vld [vmem:[#allocation4 + $0x15c] sm:$0xff]
  %v4573 = vld [vmem:[#allocation4 + $0x164] sm:$0xf]
  %v4574 = vld [vmem:[#allocation4 + $0x168] sm:$0xff]
  %v4575 = vld [vmem:[#allocation4 + $0x170] sm:$0xff]
  %v4576 = vld [vmem:[#allocation4 + $0x178] sm:$0xff]
  %v4577 = vld [vmem:[#allocation4 + $0x180] sm:$0xff]
  %v4578 = vld [vmem:[#allocation4 + $0x188] sm:$0xf]
  %v4579 = vld [vmem:[#allocation4 + $0x18c] sm:$0xff]
  %v4580 = vld [vmem:[#allocation4 + $0x194] sm:$0xff]
  %v4581 = vld [vmem:[#allocation4 + $0x19c] sm:$0xff]
  %v4582 = vld [vmem:[#allocation4 + $0x1a4] sm:$0xff]
  %v4583 = vld [vmem:[#allocation4 + $0x1ac] sm:$0xf]
  %v4584 = vld [vmem:[#allocation4 + $0x1b0] sm:$0xff]
  %v4585 = vld [vmem:[#allocation4 + $0x1b8] sm:$0xff]
  %v4586 = vld [vmem:[#allocation4 + $0x1c0] sm:$0xff]
  %v4587 = vld [vmem:[#allocation4 + $0x1c8] sm:$0xff]
  %v4588 = vld [vmem:[#allocation4 + $0x1d0] sm:$0xf]
  %v4589 = vld [vmem:[#allocation4 + $0x1d4] sm:$0xff]
  %v4590 = vld [vmem:[#allocation4 + $0x1dc] sm:$0xff]
  %v4591 = vld [vmem:[#allocation4 + $0x1e4] sm:$0xff]
  %v4592 = vld [vmem:[#allocation4 + $0x1ec] sm:$0xff]
  %v4593 = vld [vmem:[#allocation4 + $0x1f4] sm:$0xf]
  %v4594 = vld [vmem:[#allocation4 + $0x1f8] sm:$0xff]
  %v4595 = vld [vmem:[#allocation4 + $0x200] sm:$0xff]
  %v4596 = vld [vmem:[#allocation4 + $0x208] sm:$0xff]
  %v4597 = vld [vmem:[#allocation4 + $0x210] sm:$0xff]
  %v4598 = vld [vmem:[#allocation4 + $0x218] sm:$0xf]
  %v4599 = vld [vmem:[#allocation4 + $0x21c] sm:$0xff]
  %v4600 = vld [vmem:[#allocation4 + $0x224] sm:$0xff]
  %v4601 = vld [vmem:[#allocation4 + $0x22c] sm:$0xff]
  %v4602 = vld [vmem:[#allocation4 + $0x234] sm:$0xff]
  %v4603 = vld [vmem:[#allocation4 + $0x23c] sm:$0xf]
  %v4604 = vld [vmem:[%s3] sm:$0xf]
  %v4605 = vld [vmem:[%s3 + $0x4] sm:$0xf]
  %v4606 = vld [vmem:[%s3 + $0x8] sm:$0xf]
  %v4607 = vld [vmem:[%s3 + $0xc] sm:$0xf]
  %v4608 = vld [vmem:[%s3 + $0x10] sm:$0xf]
  %v4609 = vld [vmem:[%s3 + $0x14] sm:$0xf]
  %v4610 = vld [vmem:[%s3 + $0x18] sm:$0xf]
  %v4611 = vld [vmem:[%s3 + $0x1c] sm:$0xf]
  %v4612 = vld [vmem:[%s3 + $0x20] sm:$0xf]
  %v4613 = vld [vmem:[%s3 + $0x24] sm:$0xf]
  %v4614 = vld [vmem:[%s3 + $0x28] sm:$0xf]
  %v4615 = vld [vmem:[%s3 + $0x2c] sm:$0xf]
  %v4616 = vld [vmem:[%s3 + $0x30] sm:$0xf]
  %v4617 = vld [vmem:[%s3 + $0x34] sm:$0xf]
  %v4618 = vld [vmem:[%s3 + $0x38] sm:$0xf]
  %v4619 = vld [vmem:[%s3 + $0x3c] sm:$0xf]
  %v4620 = vld [vmem:[%s3 + $0x40] sm:$0xf]
  %v4621 = vld [vmem:[%s3 + $0x44] sm:$0xf]
  %v4622 = vld [vmem:[%s3 + $0x48] sm:$0xf]
  %v4623 = vld [vmem:[%s3 + $0x4c] sm:$0xf]
  %v4624 = vld [vmem:[%s3 + $0x50] sm:$0xf]
  %v4625 = vld [vmem:[%s3 + $0x54] sm:$0xf]
  %v4626 = vld [vmem:[%s3 + $0x58] sm:$0xf]
  %v4627 = vld [vmem:[%s3 + $0x5c] sm:$0xf]
  %v4628 = vld [vmem:[%s3 + $0x60] sm:$0xf]
  %v4629 = vld [vmem:[%s3 + $0x64] sm:$0xf]
  %v4630 = vld [vmem:[%s3 + $0x68] sm:$0xf]
  %v4631 = vld [vmem:[%s3 + $0x6c] sm:$0xf]
  %v4632 = vld [vmem:[%s3 + $0x70] sm:$0xf]
  %v4633 = vld [vmem:[%s3 + $0x74] sm:$0xf]
  %v4634 = vld [vmem:[%s3 + $0x78] sm:$0xf]
  %v4635 = vld [vmem:[%s3 + $0x7c] sm:$0xf]
  %v4636 = vld [vmem:[%s3 + $0x80] sm:$0xf]
  %v4637 = vld [vmem:[%s3 + $0x84] sm:$0xf]
  %v4638 = vld [vmem:[%s3 + $0x88] sm:$0xf]
  %v4639 = vld [vmem:[%s3 + $0x8c] sm:$0xf]
  %v4640 = vld [vmem:[%s3 + $0x90] sm:$0xf]
  %v4641 = vld [vmem:[%s3 + $0x94] sm:$0xf]
  %v4642 = vld [vmem:[%s3 + $0x98] sm:$0xf]
  %v4643 = vld [vmem:[%s3 + $0x9c] sm:$0xf]
  %v4644 = vld [vmem:[%s3 + $0xa0] sm:$0xf]
  %v4645 = vld [vmem:[%s3 + $0xa4] sm:$0xf]
  %v4646 = vld [vmem:[%s3 + $0xa8] sm:$0xf]
  %v4647 = vld [vmem:[%s3 + $0xac] sm:$0xf]
  %v4648 = vld [vmem:[%s3 + $0xb0] sm:$0xf]
  %v4649 = vld [vmem:[%s3 + $0xb4] sm:$0xf]
  %v4650 = vld [vmem:[%s3 + $0xb8] sm:$0xf]
  %v4651 = vld [vmem:[%s3 + $0xbc] sm:$0xf]
  %v4652 = vld [vmem:[%s3 + $0xc0] sm:$0xf]
  %v4653 = vld [vmem:[%s3 + $0xc4] sm:$0xf]
  %v4654 = vld [vmem:[%s3 + $0xc8] sm:$0xf]
  %v4655 = vld [vmem:[%s3 + $0xcc] sm:$0xf]
  %v4656 = vld [vmem:[%s3 + $0xd0] sm:$0xf]
  %v4657 = vld [vmem:[%s3 + $0xd4] sm:$0xf]
  %v4658 = vld [vmem:[%s3 + $0xd8] sm:$0xf]
  %v4659 = vld [vmem:[%s3 + $0xdc] sm:$0xf]
  %v4660 = vld [vmem:[%s3 + $0xe0] sm:$0xf]
  %v4661 = vld [vmem:[%s3 + $0xe4] sm:$0xf]
  %v4662 = vld [vmem:[%s3 + $0xe8] sm:$0xf]
  %v4663 = vld [vmem:[%s3 + $0xec] sm:$0xf]
  %v4664 = vld [vmem:[%s3 + $0xf0] sm:$0xf]
  %v4665 = vld [vmem:[%s3 + $0xf4] sm:$0xf]
  %v4666 = vld [vmem:[%s3 + $0xf8] sm:$0xf]
  %v4667 = vld [vmem:[%s3 + $0xfc] sm:$0xf]
  %v4668 = vld [vmem:[%s3 + $0x100] sm:$0xf]
  %v4669 = vld [vmem:[%s3 + $0x104] sm:$0xf]
  %v4670 = vld [vmem:[%s3 + $0x108] sm:$0xf]
  %v4671 = vld [vmem:[%s3 + $0x10c] sm:$0xf]
  %v4672 = vld [vmem:[%s3 + $0x110] sm:$0xf]
  %v4673 = vld [vmem:[%s3 + $0x114] sm:$0xf]
  %v4674 = vld [vmem:[%s3 + $0x118] sm:$0xf]
  %v4675 = vld [vmem:[%s3 + $0x11c] sm:$0xf]
  %v4676 = vld [vmem:[%s3 + $0x120] sm:$0xf]
  %v4677 = vld [vmem:[%s3 + $0x124] sm:$0xf]
  %v4678 = vld [vmem:[%s3 + $0x128] sm:$0xf]
  %v4679 = vld [vmem:[%s3 + $0x12c] sm:$0xf]
  %v4680 = vld [vmem:[%s3 + $0x130] sm:$0xf]
  %v4681 = vld [vmem:[%s3 + $0x134] sm:$0xf]
  %v4682 = vld [vmem:[%s3 + $0x138] sm:$0xf]
  %v4683 = vld [vmem:[%s3 + $0x13c] sm:$0xf]
  %v4684 = vld [vmem:[%s3 + $0x140] sm:$0xf]
  %v4685 = vld [vmem:[%s3 + $0x144] sm:$0xf]
  %v4686 = vld [vmem:[%s3 + $0x148] sm:$0xf]
  %v4687 = vld [vmem:[%s3 + $0x14c] sm:$0xf]
  %v4688 = vld [vmem:[%s3 + $0x150] sm:$0xf]
  %v4689 = vld [vmem:[%s3 + $0x154] sm:$0xf]
  %v4690 = vld [vmem:[%s3 + $0x158] sm:$0xf]
  %v4691 = vld [vmem:[%s3 + $0x15c] sm:$0xf]
  %v4692 = vld [vmem:[%s3 + $0x160] sm:$0xf]
  %v4693 = vld [vmem:[%s3 + $0x164] sm:$0xf]
  %v4694 = vld [vmem:[%s3 + $0x168] sm:$0xf]
  %v4695 = vld [vmem:[%s3 + $0x16c] sm:$0xf]
  %v4696 = vld [vmem:[%s3 + $0x170] sm:$0xf]
  %v4697 = vld [vmem:[%s3 + $0x174] sm:$0xf]
  %v4698 = vld [vmem:[%s3 + $0x178] sm:$0xf]
  %v4699 = vld [vmem:[%s3 + $0x17c] sm:$0xf]
  %v4700 = vld [vmem:[%s3 + $0x180] sm:$0xf]
  %v4701 = vld [vmem:[%s3 + $0x184] sm:$0xf]
  %v4702 = vld [vmem:[%s3 + $0x188] sm:$0xf]
  %v4703 = vld [vmem:[%s3 + $0x18c] sm:$0xf]
  %v4704 = vld [vmem:[%s3 + $0x190] sm:$0xf]
  %v4705 = vld [vmem:[%s3 + $0x194] sm:$0xf]
  %v4706 = vld [vmem:[%s3 + $0x198] sm:$0xf]
  %v4707 = vld [vmem:[%s3 + $0x19c] sm:$0xf]
  %v4708 = vld [vmem:[%s3 + $0x1a0] sm:$0xf]
  %v4709 = vld [vmem:[%s3 + $0x1a4] sm:$0xf]
  %v4710 = vld [vmem:[%s3 + $0x1a8] sm:$0xf]
  %v4711 = vld [vmem:[%s3 + $0x1ac] sm:$0xf]
  %v4712 = vld [vmem:[%s3 + $0x1b0] sm:$0xf]
  %v4713 = vld [vmem:[%s3 + $0x1b4] sm:$0xf]
  %v4714 = vld [vmem:[%s3 + $0x1b8] sm:$0xf]
  %v4715 = vld [vmem:[%s3 + $0x1bc] sm:$0xf]
  %v4716 = vld [vmem:[%s3 + $0x1c0] sm:$0xf]
  %v4717 = vld [vmem:[%s3 + $0x1c4] sm:$0xf]
  %v4718 = vld [vmem:[%s3 + $0x1c8] sm:$0xf]
  %v4719 = vld [vmem:[%s3 + $0x1cc] sm:$0xf]
  %v4720 = vld [vmem:[%s3 + $0x1d0] sm:$0xf]
  %v4721 = vld [vmem:[%s3 + $0x1d4] sm:$0xf]
  %v4722 = vld [vmem:[%s3 + $0x1d8] sm:$0xf]
  %v4723 = vld [vmem:[%s3 + $0x1dc] sm:$0xf]
  %v4724 = vld [vmem:[%s3 + $0x1e0] sm:$0xf]
  %v4725 = vld [vmem:[%s3 + $0x1e4] sm:$0xf]
  %v4726 = vld [vmem:[%s3 + $0x1e8] sm:$0xf]
  %v4727 = vld [vmem:[%s3 + $0x1ec] sm:$0xf]
  %v4728 = vld [vmem:[%s3 + $0x1f0] sm:$0xf]
  %v4729 = vld [vmem:[%s3 + $0x1f4] sm:$0xf]
  %v4730 = vld [vmem:[%s3 + $0x1f8] sm:$0xf]
  %v4731 = vld [vmem:[%s3 + $0x1fc] sm:$0xf]
  %v4732 = vld [vmem:[%s3 + $0x200] sm:$0xf]
  %v4733 = vld [vmem:[%s3 + $0x204] sm:$0xf]
  %v4734 = vld [vmem:[%s3 + $0x208] sm:$0xf]
  %v4735 = vld [vmem:[%s3 + $0x20c] sm:$0xf]
  %v4736 = vld [vmem:[%s3 + $0x210] sm:$0xf]
  %v4737 = vld [vmem:[%s3 + $0x214] sm:$0xf]
  %v4738 = vld [vmem:[%s3 + $0x218] sm:$0xf]
  %v4739 = vld [vmem:[%s3 + $0x21c] sm:$0xf]
  %v4740 = vld [vmem:[%s3 + $0x220] sm:$0xf]
  %v4741 = vld [vmem:[%s3 + $0x224] sm:$0xf]
  %v4742 = vld [vmem:[%s3 + $0x228] sm:$0xf]
  %v4743 = vld [vmem:[%s3 + $0x22c] sm:$0xf]
  %v4744 = vld [vmem:[%s3 + $0x230] sm:$0xf]
  %v4745 = vld [vmem:[%s3 + $0x234] sm:$0xf]
  %v4746 = vld [vmem:[%s3 + $0x238] sm:$0xf]
  %v4747 = vld [vmem:[%s3 + $0x23c] sm:$0xf]
  %v4748 = vld [vmem:[%s4] sm:$0x1]
  %v4750 = vlaneseq
  %v4751 = vshrl.u32 %v4750, 7
  %v4752 = vsub.s32 0, %v4751
  %v4753 = vrot.slane %v4748, %v4752
  %v4835 = vunpack.c.l.b16 %v4524
  %v4836 = vunpack.c.h.b16 %v4524
  %v4837 = vunpack.c.l.b16 %v4525
  %v4838 = vunpack.c.h.b16 %v4525
  %v4839 = vunpack.c.l.b16 %v4526
  %v4840 = vunpack.c.h.b16 %v4526
  %v4841 = vunpack.c.l.b16 %v4527
  %v4842 = vunpack.c.h.b16 %v4527
  %v4843 = vunpack.c.l.b16 %v4528
  %v4844 = vunpack.c.l.b16 %v4529
  %v4845 = vunpack.c.h.b16 %v4529
  %v4846 = vunpack.c.l.b16 %v4530
  %v4847 = vunpack.c.h.b16 %v4530
  %v4848 = vunpack.c.l.b16 %v4531
  %v4849 = vunpack.c.h.b16 %v4531
  %v4850 = vunpack.c.l.b16 %v4532
  %v4851 = vunpack.c.h.b16 %v4532
  %v4852 = vunpack.c.l.b16 %v4533
  %v4853 = vunpack.c.l.b16 %v4534
  %v4854 = vunpack.c.h.b16 %v4534
  %v4855 = vunpack.c.l.b16 %v4535
  %v4856 = vunpack.c.h.b16 %v4535
  %v4857 = vunpack.c.l.b16 %v4536
  %v4858 = vunpack.c.h.b16 %v4536
  %v4859 = vunpack.c.l.b16 %v4537
  %v4860 = vunpack.c.h.b16 %v4537
  %v4861 = vunpack.c.l.b16 %v4538
  %v4862 = vunpack.c.l.b16 %v4539
  %v4863 = vunpack.c.h.b16 %v4539
  %v4864 = vunpack.c.l.b16 %v4540
  %v4865 = vunpack.c.h.b16 %v4540
  %v4866 = vunpack.c.l.b16 %v4541
  %v4867 = vunpack.c.h.b16 %v4541
  %v4868 = vunpack.c.l.b16 %v4542
  %v4869 = vunpack.c.h.b16 %v4542
  %v4870 = vunpack.c.l.b16 %v4543
  %v4871 = vunpack.c.l.b16 %v4544
  %v4872 = vunpack.c.h.b16 %v4544
  %v4873 = vunpack.c.l.b16 %v4545
  %v4874 = vunpack.c.h.b16 %v4545
  %v4875 = vunpack.c.l.b16 %v4546
  %v4876 = vunpack.c.h.b16 %v4546
  %v4877 = vunpack.c.l.b16 %v4547
  %v4878 = vunpack.c.h.b16 %v4547
  %v4879 = vunpack.c.l.b16 %v4548
  %v4880 = vunpack.c.l.b16 %v4549
  %v4881 = vunpack.c.h.b16 %v4549
  %v4882 = vunpack.c.l.b16 %v4550
  %v4883 = vunpack.c.h.b16 %v4550
  %v4884 = vunpack.c.l.b16 %v4551
  %v4885 = vunpack.c.h.b16 %v4551
  %v4886 = vunpack.c.l.b16 %v4552
  %v4887 = vunpack.c.h.b16 %v4552
  %v4888 = vunpack.c.l.b16 %v4553
  %v4889 = vunpack.c.l.b16 %v4554
  %v4890 = vunpack.c.h.b16 %v4554
  %v4891 = vunpack.c.l.b16 %v4555
  %v4892 = vunpack.c.h.b16 %v4555
  %v4893 = vunpack.c.l.b16 %v4556
  %v4894 = vunpack.c.h.b16 %v4556
  %v4895 = vunpack.c.l.b16 %v4557
  %v4896 = vunpack.c.h.b16 %v4557
  %v4897 = vunpack.c.l.b16 %v4558
  %v4898 = vunpack.c.l.b16 %v4559
  %v4899 = vunpack.c.h.b16 %v4559
  %v4900 = vunpack.c.l.b16 %v4560
  %v4901 = vunpack.c.h.b16 %v4560
  %v4902 = vunpack.c.l.b16 %v4561
  %v4903 = vunpack.c.h.b16 %v4561
  %v4904 = vunpack.c.l.b16 %v4562
  %v4905 = vunpack.c.h.b16 %v4562
  %v4906 = vunpack.c.l.b16 %v4563
  %v4907 = vunpack.c.l.b16 %v4564
  %v4908 = vunpack.c.h.b16 %v4564
  %v4909 = vunpack.c.l.b16 %v4565
  %v4910 = vunpack.c.h.b16 %v4565
  %v4911 = vunpack.c.l.b16 %v4566
  %v4912 = vunpack.c.h.b16 %v4566
  %v4913 = vunpack.c.l.b16 %v4567
  %v4914 = vunpack.c.h.b16 %v4567
  %v4915 = vunpack.c.l.b16 %v4568
  %v4916 = vunpack.c.l.b16 %v4569
  %v4917 = vunpack.c.h.b16 %v4569
  %v4918 = vunpack.c.l.b16 %v4570
  %v4919 = vunpack.c.h.b16 %v4570
  %v4920 = vunpack.c.l.b16 %v4571
  %v4921 = vunpack.c.h.b16 %v4571
  %v4922 = vunpack.c.l.b16 %v4572
  %v4923 = vunpack.c.h.b16 %v4572
  %v4924 = vunpack.c.l.b16 %v4573
  %v4925 = vunpack.c.l.b16 %v4574
  %v4926 = vunpack.c.h.b16 %v4574
  %v4927 = vunpack.c.l.b16 %v4575
  %v4928 = vunpack.c.h.b16 %v4575
  %v4929 = vunpack.c.l.b16 %v4576
  %v4930 = vunpack.c.h.b16 %v4576
  %v4931 = vunpack.c.l.b16 %v4577
  %v4932 = vunpack.c.h.b16 %v4577
  %v4933 = vunpack.c.l.b16 %v4578
  %v4934 = vunpack.c.l.b16 %v4579
  %v4935 = vunpack.c.h.b16 %v4579
  %v4936 = vunpack.c.l.b16 %v4580
  %v4937 = vunpack.c.h.b16 %v4580
  %v4938 = vunpack.c.l.b16 %v4581
  %v4939 = vunpack.c.h.b16 %v4581
  %v4940 = vunpack.c.l.b16 %v4582
  %v4941 = vunpack.c.h.b16 %v4582
  %v4942 = vunpack.c.l.b16 %v4583
  %v4943 = vunpack.c.l.b16 %v4584
  %v4944 = vunpack.c.h.b16 %v4584
  %v4945 = vunpack.c.l.b16 %v4585
  %v4946 = vunpack.c.h.b16 %v4585
  %v4947 = vunpack.c.l.b16 %v4586
  %v4948 = vunpack.c.h.b16 %v4586
  %v4949 = vunpack.c.l.b16 %v4587
  %v4950 = vunpack.c.h.b16 %v4587
  %v4951 = vunpack.c.l.b16 %v4588
  %v4952 = vunpack.c.l.b16 %v4589
  %v4953 = vunpack.c.h.b16 %v4589
  %v4954 = vunpack.c.l.b16 %v4590
  %v4955 = vunpack.c.h.b16 %v4590
  %v4956 = vunpack.c.l.b16 %v4591
  %v4957 = vunpack.c.h.b16 %v4591
  %v4958 = vunpack.c.l.b16 %v4592
  %v4959 = vunpack.c.h.b16 %v4592
  %v4960 = vunpack.c.l.b16 %v4593
  %v4961 = vunpack.c.l.b16 %v4594
  %v4962 = vunpack.c.h.b16 %v4594
  %v4963 = vunpack.c.l.b16 %v4595
  %v4964 = vunpack.c.h.b16 %v4595
  %v4965 = vunpack.c.l.b16 %v4596
  %v4966 = vunpack.c.h.b16 %v4596
  %v4967 = vunpack.c.l.b16 %v4597
  %v4968 = vunpack.c.h.b16 %v4597
  %v4969 = vunpack.c.l.b16 %v4598
  %v4970 = vunpack.c.l.b16 %v4599
  %v4971 = vunpack.c.h.b16 %v4599
  %v4972 = vunpack.c.l.b16 %v4600
  %v4973 = vunpack.c.h.b16 %v4600
  %v4974 = vunpack.c.l.b16 %v4601
  %v4975 = vunpack.c.h.b16 %v4601
  %v4976 = vunpack.c.l.b16 %v4602
  %v4977 = vunpack.c.h.b16 %v4602
  %v4978 = vunpack.c.l.b16 %v4603
  %v4979 = vpack.c.b16 %v4844, %v4835
  %v4980 = vpack.c.b16 %v4845, %v4836
  %v4981 = vpack.c.b16 %v4846, %v4837
  %v4982 = vpack.c.b16 %v4847, %v4838
  %v4983 = vpack.c.b16 %v4848, %v4839
  %v4984 = vpack.c.b16 %v4849, %v4840
  %v4985 = vpack.c.b16 %v4850, %v4841
  %v4986 = vpack.c.b16 %v4851, %v4842
  %v4987 = vpack.c.b16 %v4852, %v4843
  %v4988 = vpack.c.b16 %v4862, %v4853
  %v4989 = vpack.c.b16 %v4863, %v4854
  %v4990 = vpack.c.b16 %v4864, %v4855
  %v4991 = vpack.c.b16 %v4865, %v4856
  %v4992 = vpack.c.b16 %v4866, %v4857
  %v4993 = vpack.c.b16 %v4867, %v4858
  %v4994 = vpack.c.b16 %v4868, %v4859
  %v4995 = vpack.c.b16 %v4869, %v4860
  %v4996 = vpack.c.b16 %v4870, %v4861
  %v4997 = vpack.c.b16 %v4880, %v4871
  %v4998 = vpack.c.b16 %v4881, %v4872
  %v4999 = vpack.c.b16 %v4882, %v4873
  %v5000 = vpack.c.b16 %v4883, %v4874
  %v5001 = vpack.c.b16 %v4884, %v4875
  %v5002 = vpack.c.b16 %v4885, %v4876
  %v5003 = vpack.c.b16 %v4886, %v4877
  %v5004 = vpack.c.b16 %v4887, %v4878
  %v5005 = vpack.c.b16 %v4888, %v4879
  %v5006 = vpack.c.b16 %v4898, %v4889
  %v5007 = vpack.c.b16 %v4899, %v4890
  %v5008 = vpack.c.b16 %v4900, %v4891
  %v5009 = vpack.c.b16 %v4901, %v4892
  %v5010 = vpack.c.b16 %v4902, %v4893
  %v5011 = vpack.c.b16 %v4903, %v4894
  %v5012 = vpack.c.b16 %v4904, %v4895
  %v5013 = vpack.c.b16 %v4905, %v4896
  %v5014 = vpack.c.b16 %v4906, %v4897
  %v5015 = vpack.c.b16 %v4916, %v4907
  %v5016 = vpack.c.b16 %v4917, %v4908
  %v5017 = vpack.c.b16 %v4918, %v4909
  %v5018 = vpack.c.b16 %v4919, %v4910
  %v5019 = vpack.c.b16 %v4920, %v4911
  %v5020 = vpack.c.b16 %v4921, %v4912
  %v5021 = vpack.c.b16 %v4922, %v4913
  %v5022 = vpack.c.b16 %v4923, %v4914
  %v5023 = vpack.c.b16 %v4924, %v4915
  %v5024 = vpack.c.b16 %v4934, %v4925
  %v5025 = vpack.c.b16 %v4935, %v4926
  %v5026 = vpack.c.b16 %v4936, %v4927
  %v5027 = vpack.c.b16 %v4937, %v4928
  %v5028 = vpack.c.b16 %v4938, %v4929
  %v5029 = vpack.c.b16 %v4939, %v4930
  %v5030 = vpack.c.b16 %v4940, %v4931
  %v5031 = vpack.c.b16 %v4941, %v4932
  %v5032 = vpack.c.b16 %v4942, %v4933
  %v5033 = vpack.c.b16 %v4952, %v4943
  %v5034 = vpack.c.b16 %v4953, %v4944
  %v5035 = vpack.c.b16 %v4954, %v4945
  %v5036 = vpack.c.b16 %v4955, %v4946
  %v5037 = vpack.c.b16 %v4956, %v4947
  %v5038 = vpack.c.b16 %v4957, %v4948
  %v5039 = vpack.c.b16 %v4958, %v4949
  %v5040 = vpack.c.b16 %v4959, %v4950
  %v5041 = vpack.c.b16 %v4960, %v4951
  %v5042 = vpack.c.b16 %v4970, %v4961
  %v5043 = vpack.c.b16 %v4971, %v4962
  %v5044 = vpack.c.b16 %v4972, %v4963
  %v5045 = vpack.c.b16 %v4973, %v4964
  %v5046 = vpack.c.b16 %v4974, %v4965
  %v5047 = vpack.c.b16 %v4975, %v4966
  %v5048 = vpack.c.b16 %v4976, %v4967
  %v5049 = vpack.c.b16 %v4977, %v4968
  %v5050 = vpack.c.b16 %v4978, %v4969
  %v5267 = vunpack.c.l.b16 %v4604
  %v5268 = vunpack.c.l.b16 %v4605
  %v5269 = vunpack.c.l.b16 %v4606
  %v5270 = vunpack.c.l.b16 %v4607
  %v5271 = vunpack.c.l.b16 %v4608
  %v5272 = vunpack.c.l.b16 %v4609
  %v5273 = vunpack.c.l.b16 %v4610
  %v5274 = vunpack.c.l.b16 %v4611
  %v5275 = vunpack.c.l.b16 %v4612
  %v5276 = vunpack.c.l.b16 %v4613
  %v5277 = vunpack.c.l.b16 %v4614
  %v5278 = vunpack.c.l.b16 %v4615
  %v5279 = vunpack.c.l.b16 %v4616
  %v5280 = vunpack.c.l.b16 %v4617
  %v5281 = vunpack.c.l.b16 %v4618
  %v5282 = vunpack.c.l.b16 %v4619
  %v5283 = vunpack.c.l.b16 %v4620
  %v5284 = vunpack.c.l.b16 %v4621
  %v5285 = vunpack.c.l.b16 %v4622
  %v5286 = vunpack.c.l.b16 %v4623
  %v5287 = vunpack.c.l.b16 %v4624
  %v5288 = vunpack.c.l.b16 %v4625
  %v5289 = vunpack.c.l.b16 %v4626
  %v5290 = vunpack.c.l.b16 %v4627
  %v5291 = vunpack.c.l.b16 %v4628
  %v5292 = vunpack.c.l.b16 %v4629
  %v5293 = vunpack.c.l.b16 %v4630
  %v5294 = vunpack.c.l.b16 %v4631
  %v5295 = vunpack.c.l.b16 %v4632
  %v5296 = vunpack.c.l.b16 %v4633
  %v5297 = vunpack.c.l.b16 %v4634
  %v5298 = vunpack.c.l.b16 %v4635
  %v5299 = vunpack.c.l.b16 %v4636
  %v5300 = vunpack.c.l.b16 %v4637
  %v5301 = vunpack.c.l.b16 %v4638
  %v5302 = vunpack.c.l.b16 %v4639
  %v5303 = vunpack.c.l.b16 %v4640
  %v5304 = vunpack.c.l.b16 %v4641
  %v5305 = vunpack.c.l.b16 %v4642
  %v5306 = vunpack.c.l.b16 %v4643
  %v5307 = vunpack.c.l.b16 %v4644
  %v5308 = vunpack.c.l.b16 %v4645
  %v5309 = vunpack.c.l.b16 %v4646
  %v5310 = vunpack.c.l.b16 %v4647
  %v5311 = vunpack.c.l.b16 %v4648
  %v5312 = vunpack.c.l.b16 %v4649
  %v5313 = vunpack.c.l.b16 %v4650
  %v5314 = vunpack.c.l.b16 %v4651
  %v5315 = vunpack.c.l.b16 %v4652
  %v5316 = vunpack.c.l.b16 %v4653
  %v5317 = vunpack.c.l.b16 %v4654
  %v5318 = vunpack.c.l.b16 %v4655
  %v5319 = vunpack.c.l.b16 %v4656
  %v5320 = vunpack.c.l.b16 %v4657
  %v5321 = vunpack.c.l.b16 %v4658
  %v5322 = vunpack.c.l.b16 %v4659
  %v5323 = vunpack.c.l.b16 %v4660
  %v5324 = vunpack.c.l.b16 %v4661
  %v5325 = vunpack.c.l.b16 %v4662
  %v5326 = vunpack.c.l.b16 %v4663
  %v5327 = vunpack.c.l.b16 %v4664
  %v5328 = vunpack.c.l.b16 %v4665
  %v5329 = vunpack.c.l.b16 %v4666
  %v5330 = vunpack.c.l.b16 %v4667
  %v5331 = vunpack.c.l.b16 %v4668
  %v5332 = vunpack.c.l.b16 %v4669
  %v5333 = vunpack.c.l.b16 %v4670
  %v5334 = vunpack.c.l.b16 %v4671
  %v5335 = vunpack.c.l.b16 %v4672
  %v5336 = vunpack.c.l.b16 %v4673
  %v5337 = vunpack.c.l.b16 %v4674
  %v5338 = vunpack.c.l.b16 %v4675
  %v5339 = vunpack.c.l.b16 %v4676
  %v5340 = vunpack.c.l.b16 %v4677
  %v5341 = vunpack.c.l.b16 %v4678
  %v5342 = vunpack.c.l.b16 %v4679
  %v5343 = vunpack.c.l.b16 %v4680
  %v5344 = vunpack.c.l.b16 %v4681
  %v5345 = vunpack.c.l.b16 %v4682
  %v5346 = vunpack.c.l.b16 %v4683
  %v5347 = vunpack.c.l.b16 %v4684
  %v5348 = vunpack.c.l.b16 %v4685
  %v5349 = vunpack.c.l.b16 %v4686
  %v5350 = vunpack.c.l.b16 %v4687
  %v5351 = vunpack.c.l.b16 %v4688
  %v5352 = vunpack.c.l.b16 %v4689
  %v5353 = vunpack.c.l.b16 %v4690
  %v5354 = vunpack.c.l.b16 %v4691
  %v5355 = vunpack.c.l.b16 %v4692
  %v5356 = vunpack.c.l.b16 %v4693
  %v5357 = vunpack.c.l.b16 %v4694
  %v5358 = vunpack.c.l.b16 %v4695
  %v5359 = vunpack.c.l.b16 %v4696
  %v5360 = vunpack.c.l.b16 %v4697
  %v5361 = vunpack.c.l.b16 %v4698
  %v5362 = vunpack.c.l.b16 %v4699
  %v5363 = vunpack.c.l.b16 %v4700
  %v5364 = vunpack.c.l.b16 %v4701
  %v5365 = vunpack.c.l.b16 %v4702
  %v5366 = vunpack.c.l.b16 %v4703
  %v5367 = vunpack.c.l.b16 %v4704
  %v5368 = vunpack.c.l.b16 %v4705
  %v5369 = vunpack.c.l.b16 %v4706
  %v5370 = vunpack.c.l.b16 %v4707
  %v5371 = vunpack.c.l.b16 %v4708
  %v5372 = vunpack.c.l.b16 %v4709
  %v5373 = vunpack.c.l.b16 %v4710
  %v5374 = vunpack.c.l.b16 %v4711
  %v5375 = vunpack.c.l.b16 %v4712
  %v5376 = vunpack.c.l.b16 %v4713
  %v5377 = vunpack.c.l.b16 %v4714
  %v5378 = vunpack.c.l.b16 %v4715
  %v5379 = vunpack.c.l.b16 %v4716
  %v5380 = vunpack.c.l.b16 %v4717
  %v5381 = vunpack.c.l.b16 %v4718
  %v5382 = vunpack.c.l.b16 %v4719
  %v5383 = vunpack.c.l.b16 %v4720
  %v5384 = vunpack.c.l.b16 %v4721
  %v5385 = vunpack.c.l.b16 %v4722
  %v5386 = vunpack.c.l.b16 %v4723
  %v5387 = vunpack.c.l.b16 %v4724
  %v5388 = vunpack.c.l.b16 %v4725
  %v5389 = vunpack.c.l.b16 %v4726
  %v5390 = vunpack.c.l.b16 %v4727
  %v5391 = vunpack.c.l.b16 %v4728
  %v5392 = vunpack.c.l.b16 %v4729
  %v5393 = vunpack.c.l.b16 %v4730
  %v5394 = vunpack.c.l.b16 %v4731
  %v5395 = vunpack.c.l.b16 %v4732
  %v5396 = vunpack.c.l.b16 %v4733
  %v5397 = vunpack.c.l.b16 %v4734
  %v5398 = vunpack.c.l.b16 %v4735
  %v5399 = vunpack.c.l.b16 %v4736
  %v5400 = vunpack.c.l.b16 %v4737
  %v5401 = vunpack.c.l.b16 %v4738
  %v5402 = vunpack.c.l.b16 %v4739
  %v5403 = vunpack.c.l.b16 %v4740
  %v5404 = vunpack.c.l.b16 %v4741
  %v5405 = vunpack.c.l.b16 %v4742
  %v5406 = vunpack.c.l.b16 %v4743
  %v5407 = vunpack.c.l.b16 %v4744
  %v5408 = vunpack.c.l.b16 %v4745
  %v5409 = vunpack.c.l.b16 %v4746
  %v5410 = vunpack.c.l.b16 %v4747
  %v5411 = vpack.c.b16 %v5268, %v5267
  %v5412 = vpack.c.b16 %v5270, %v5269
  %v5413 = vpack.c.b16 %v5272, %v5271
  %v5414 = vpack.c.b16 %v5274, %v5273
  %v5415 = vpack.c.b16 %v5276, %v5275
  %v5416 = vpack.c.b16 %v5278, %v5277
  %v5417 = vpack.c.b16 %v5280, %v5279
  %v5418 = vpack.c.b16 %v5282, %v5281
  %v5419 = vpack.c.b16 %v5284, %v5283
  %v5420 = vpack.c.b16 %v5286, %v5285
  %v5421 = vpack.c.b16 %v5288, %v5287
  %v5422 = vpack.c.b16 %v5290, %v5289
  %v5423 = vpack.c.b16 %v5292, %v5291
  %v5424 = vpack.c.b16 %v5294, %v5293
  %v5425 = vpack.c.b16 %v5296, %v5295
  %v5426 = vpack.c.b16 %v5298, %v5297
  %v5427 = vpack.c.b16 %v5300, %v5299
  %v5428 = vpack.c.b16 %v5302, %v5301
  %v5429 = vpack.c.b16 %v5304, %v5303
  %v5430 = vpack.c.b16 %v5306, %v5305
  %v5431 = vpack.c.b16 %v5308, %v5307
  %v5432 = vpack.c.b16 %v5310, %v5309
  %v5433 = vpack.c.b16 %v5312, %v5311
  %v5434 = vpack.c.b16 %v5314, %v5313
  %v5435 = vpack.c.b16 %v5316, %v5315
  %v5436 = vpack.c.b16 %v5318, %v5317
  %v5437 = vpack.c.b16 %v5320, %v5319
  %v5438 = vpack.c.b16 %v5322, %v5321
  %v5439 = vpack.c.b16 %v5324, %v5323
  %v5440 = vpack.c.b16 %v5326, %v5325
  %v5441 = vpack.c.b16 %v5328, %v5327
  %v5442 = vpack.c.b16 %v5330, %v5329
  %v5443 = vpack.c.b16 %v5332, %v5331
  %v5444 = vpack.c.b16 %v5334, %v5333
  %v5445 = vpack.c.b16 %v5336, %v5335
  %v5446 = vpack.c.b16 %v5338, %v5337
  %v5447 = vpack.c.b16 %v5340, %v5339
  %v5448 = vpack.c.b16 %v5342, %v5341
  %v5449 = vpack.c.b16 %v5344, %v5343
  %v5450 = vpack.c.b16 %v5346, %v5345
  %v5451 = vpack.c.b16 %v5348, %v5347
  %v5452 = vpack.c.b16 %v5350, %v5349
  %v5453 = vpack.c.b16 %v5352, %v5351
  %v5454 = vpack.c.b16 %v5354, %v5353
  %v5455 = vpack.c.b16 %v5356, %v5355
  %v5456 = vpack.c.b16 %v5358, %v5357
  %v5457 = vpack.c.b16 %v5360, %v5359
  %v5458 = vpack.c.b16 %v5362, %v5361
  %v5459 = vpack.c.b16 %v5364, %v5363
  %v5460 = vpack.c.b16 %v5366, %v5365
  %v5461 = vpack.c.b16 %v5368, %v5367
  %v5462 = vpack.c.b16 %v5370, %v5369
  %v5463 = vpack.c.b16 %v5372, %v5371
  %v5464 = vpack.c.b16 %v5374, %v5373
  %v5465 = vpack.c.b16 %v5376, %v5375
  %v5466 = vpack.c.b16 %v5378, %v5377
  %v5467 = vpack.c.b16 %v5380, %v5379
  %v5468 = vpack.c.b16 %v5382, %v5381
  %v5469 = vpack.c.b16 %v5384, %v5383
  %v5470 = vpack.c.b16 %v5386, %v5385
  %v5471 = vpack.c.b16 %v5388, %v5387
  %v5472 = vpack.c.b16 %v5390, %v5389
  %v5473 = vpack.c.b16 %v5392, %v5391
  %v5474 = vpack.c.b16 %v5394, %v5393
  %v5475 = vpack.c.b16 %v5396, %v5395
  %v5476 = vpack.c.b16 %v5398, %v5397
  %v5477 = vpack.c.b16 %v5400, %v5399
  %v5478 = vpack.c.b16 %v5402, %v5401
  %v5479 = vpack.c.b16 %v5404, %v5403
  %v5480 = vpack.c.b16 %v5406, %v5405
  %v5481 = vpack.c.b16 %v5408, %v5407
  %v5482 = vpack.c.b16 %v5410, %v5409
  %5555 = vmatprep.subr.bf16.mxu0 0
  %5556 = vmatpush1.bf16.msra.mxu0 %v5418
  %5557 = vmatprep.subr.bf16.mxu0 0
  %5558 = vmatpush1.bf16.msra.mxu0 %v5417
  %5559 = vmatprep.subr.bf16.mxu0 0
  %5560 = vmatpush1.bf16.msra.mxu0 %v5416
  %5561 = vmatprep.subr.bf16.mxu0 0
  %5562 = vmatpush1.bf16.msra.mxu0 %v5415
  %5563 = vmatprep.subr.bf16.mxu0 0
  %5564 = vmatpush1.bf16.msra.mxu0 %v5414
  %5565 = vmatprep.subr.bf16.mxu0 0
  %5566 = vmatpush1.bf16.msra.mxu0 %v5413
  %5567 = vmatprep.subr.bf16.mxu0 0
  %5568 = vmatpush1.bf16.msra.mxu0 %v5412
  %5569 = vmatprep.subr.bf16.mxu0 0
  %5570 = vmatpush1.bf16.msra.mxu0 %v5411
  %5571 = vmatprep.subr.bf16.mxu0 0
  %5572 = vmatpush2.bf16.msra.mxu0 %v5426
  %5573 = vmatprep.subr.bf16.mxu0 0
  %5574 = vmatpush2.bf16.msra.mxu0 %v5425
  %5575 = vmatprep.subr.bf16.mxu0 0
  %5576 = vmatpush2.bf16.msra.mxu0 %v5424
  %5577 = vmatprep.subr.bf16.mxu0 0
  %5578 = vmatpush2.bf16.msra.mxu0 %v5423
  %5579 = vmatprep.subr.bf16.mxu0 0
  %5580 = vmatpush2.bf16.msra.mxu0 %v5422
  %5581 = vmatprep.subr.bf16.mxu0 0
  %5582 = vmatpush2.bf16.msra.mxu0 %v5421
  %5583 = vmatprep.subr.bf16.mxu0 0
  %5584 = vmatpush2.bf16.msra.mxu0 %v5420
  %5585 = vmatprep.subr.bf16.mxu0 0
  %5586 = vmatpush2.bf16.msra.mxu0 %v5419
  %5587 = vmatprep.mubr.bf16.mxu0 %v4980
  %5588 = vmatmul.mubr.bf16.gmra.mxu0 %v4979
  %v5589 = vpop.f32.mrf.mxu0
  %v5590 = vadd.f32 %v4753, %v5589
  %v5591 = vpop.f32.mrf.mxu0
  %v5592 = vpop.f32.mrf.mxu0
  %v5593 = vadd.f32 %v4753, %v5592
  %v5594 = vpop.f32.mrf.mxu0
  %5595 = vmatprep.mubr.bf16.mxu0 %v4989
  %5596 = vmatmul.mubr.bf16.gmra.mxu0 %v4988
  %v5597 = vpop.f32.mrf.mxu0
  %v5598 = vadd.f32 %v4753, %v5597
  %v5599 = vpop.f32.mrf.mxu0
  %v5600 = vpop.f32.mrf.mxu0
  %v5601 = vadd.f32 %v4753, %v5600
  %v5602 = vpop.f32.mrf.mxu0
  %5603 = vmatprep.mubr.bf16.mxu0 %v4998
  %5604 = vmatmul.mubr.bf16.gmra.mxu0 %v4997
  %v5605 = vpop.f32.mrf.mxu0
  %v5606 = vadd.f32 %v4753, %v5605
  %v5607 = vpop.f32.mrf.mxu0
  %v5608 = vpop.f32.mrf.mxu0
  %v5609 = vadd.f32 %v4753, %v5608
  %v5610 = vpop.f32.mrf.mxu0
  %5611 = vmatprep.mubr.bf16.mxu0 %v5007
  %5612 = vmatmul.mubr.bf16.gmra.mxu0 %v5006
  %v5613 = vpop.f32.mrf.mxu0
  %v5614 = vadd.f32 %v4753, %v5613
  %v5615 = vpop.f32.mrf.mxu0
  %v5616 = vpop.f32.mrf.mxu0
  %v5617 = vadd.f32 %v4753, %v5616
  %v5618 = vpop.f32.mrf.mxu0
  %5619 = vmatprep.mubr.bf16.mxu0 %v5016
  %5620 = vmatmul.mubr.bf16.gmra.mxu0 %v5015
  %v5621 = vpop.f32.mrf.mxu0
  %v5622 = vadd.f32 %v4753, %v5621
  %v5623 = vpop.f32.mrf.mxu0
  %v5624 = vpop.f32.mrf.mxu0
  %v5625 = vadd.f32 %v4753, %v5624
  %v5626 = vpop.f32.mrf.mxu0
  %5627 = vmatprep.mubr.bf16.mxu0 %v5025
  %5628 = vmatmul.mubr.bf16.gmra.mxu0 %v5024
  %v5629 = vpop.f32.mrf.mxu0
  %v5630 = vadd.f32 %v4753, %v5629
  %v5631 = vpop.f32.mrf.mxu0
  %v5632 = vpop.f32.mrf.mxu0
  %v5633 = vadd.f32 %v4753, %v5632
  %v5634 = vpop.f32.mrf.mxu0
  %5635 = vmatprep.mubr.bf16.mxu0 %v5034
  %5636 = vmatmul.mubr.bf16.gmra.mxu0 %v5033
  %v5637 = vpop.f32.mrf.mxu0
  %v5638 = vadd.f32 %v4753, %v5637
  %v5639 = vpop.f32.mrf.mxu0
  %v5640 = vpop.f32.mrf.mxu0
  %v5641 = vadd.f32 %v4753, %v5640
  %v5642 = vpop.f32.mrf.mxu0
  %5643 = vmatprep.mubr.bf16.mxu0 %v5043
  %5644 = vmatmul.mubr.bf16.gmra.mxu0 %v5042
  %v5645 = vpop.f32.mrf.mxu0
  %v5646 = vadd.f32 %v4753, %v5645
  %v5647 = vpop.f32.mrf.mxu0
  %v5648 = vpop.f32.mrf.mxu0
  %v5649 = vadd.f32 %v4753, %v5648
  %v5650 = vpop.f32.mrf.mxu0
  %5651 = vdwg.mxu0
  %5652 = vmatprep.subr.bf16.mxu0 0
  %5653 = vmatpush1.bf16.msra.mxu0 %v5434
  %5654 = vmatprep.subr.bf16.mxu0 0
  %5655 = vmatpush1.bf16.msra.mxu0 %v5433
  %5656 = vmatprep.subr.bf16.mxu0 0
  %5657 = vmatpush1.bf16.msra.mxu0 %v5432
  %5658 = vmatprep.subr.bf16.mxu0 0
  %5659 = vmatpush1.bf16.msra.mxu0 %v5431
  %5660 = vmatprep.subr.bf16.mxu0 0
  %5661 = vmatpush1.bf16.msra.mxu0 %v5430
  %5662 = vmatprep.subr.bf16.mxu0 0
  %5663 = vmatpush1.bf16.msra.mxu0 %v5429
  %5664 = vmatprep.subr.bf16.mxu0 0
  %5665 = vmatpush1.bf16.msra.mxu0 %v5428
  %5666 = vmatprep.subr.bf16.mxu0 0
  %5667 = vmatpush1.bf16.msra.mxu0 %v5427
  %5668 = vmatprep.subr.bf16.mxu0 0
  %5669 = vmatpush2.bf16.msra.mxu0 %v5442
  %5670 = vmatprep.subr.bf16.mxu0 0
  %5671 = vmatpush2.bf16.msra.mxu0 %v5441
  %5672 = vmatprep.subr.bf16.mxu0 0
  %5673 = vmatpush2.bf16.msra.mxu0 %v5440
  %5674 = vmatprep.subr.bf16.mxu0 0
  %5675 = vmatpush2.bf16.msra.mxu0 %v5439
  %5676 = vmatprep.subr.bf16.mxu0 0
  %5677 = vmatpush2.bf16.msra.mxu0 %v5438
  %5678 = vmatprep.subr.bf16.mxu0 0
  %5679 = vmatpush2.bf16.msra.mxu0 %v5437
  %5680 = vmatprep.subr.bf16.mxu0 0
  %5681 = vmatpush2.bf16.msra.mxu0 %v5436
  %5682 = vmatprep.subr.bf16.mxu0 0
  %5683 = vmatpush2.bf16.msra.mxu0 %v5435
  %5684 = vmatprep.mubr.bf16.mxu0 %v4982
  %5685 = vmatmul.mubr.bf16.gmra.mxu0 %v4981
  %v5686 = vpop.f32.mrf.mxu0
  %v5687 = vadd.f32 %v5590, %v5686
  %v5688 = vpop.f32.mrf.mxu0
  %v5689 = vpop.f32.mrf.mxu0
  %v5690 = vadd.f32 %v5593, %v5689
  %v5691 = vpop.f32.mrf.mxu0
  %5692 = vmatprep.mubr.bf16.mxu0 %v4991
  %5693 = vmatmul.mubr.bf16.gmra.mxu0 %v4990
  %v5694 = vpop.f32.mrf.mxu0
  %v5695 = vadd.f32 %v5598, %v5694
  %v5696 = vpop.f32.mrf.mxu0
  %v5697 = vpop.f32.mrf.mxu0
  %v5698 = vadd.f32 %v5601, %v5697
  %v5699 = vpop.f32.mrf.mxu0
  %5700 = vmatprep.mubr.bf16.mxu0 %v5000
  %5701 = vmatmul.mubr.bf16.gmra.mxu0 %v4999
  %v5702 = vpop.f32.mrf.mxu0
  %v5703 = vadd.f32 %v5606, %v5702
  %v5704 = vpop.f32.mrf.mxu0
  %v5705 = vpop.f32.mrf.mxu0
  %v5706 = vadd.f32 %v5609, %v5705
  %v5707 = vpop.f32.mrf.mxu0
  %5708 = vmatprep.mubr.bf16.mxu0 %v5009
  %5709 = vmatmul.mubr.bf16.gmra.mxu0 %v5008
  %v5710 = vpop.f32.mrf.mxu0
  %v5711 = vadd.f32 %v5614, %v5710
  %v5712 = vpop.f32.mrf.mxu0
  %v5713 = vpop.f32.mrf.mxu0
  %v5714 = vadd.f32 %v5617, %v5713
  %v5715 = vpop.f32.mrf.mxu0
  %5716 = vmatprep.mubr.bf16.mxu0 %v5018
  %5717 = vmatmul.mubr.bf16.gmra.mxu0 %v5017
  %v5718 = vpop.f32.mrf.mxu0
  %v5719 = vadd.f32 %v5622, %v5718
  %v5720 = vpop.f32.mrf.mxu0
  %v5721 = vpop.f32.mrf.mxu0
  %v5722 = vadd.f32 %v5625, %v5721
  %v5723 = vpop.f32.mrf.mxu0
  %5724 = vmatprep.mubr.bf16.mxu0 %v5027
  %5725 = vmatmul.mubr.bf16.gmra.mxu0 %v5026
  %v5726 = vpop.f32.mrf.mxu0
  %v5727 = vadd.f32 %v5630, %v5726
  %v5728 = vpop.f32.mrf.mxu0
  %v5729 = vpop.f32.mrf.mxu0
  %v5730 = vadd.f32 %v5633, %v5729
  %v5731 = vpop.f32.mrf.mxu0
  %5732 = vmatprep.mubr.bf16.mxu0 %v5036
  %5733 = vmatmul.mubr.bf16.gmra.mxu0 %v5035
  %v5734 = vpop.f32.mrf.mxu0
  %v5735 = vadd.f32 %v5638, %v5734
  %v5736 = vpop.f32.mrf.mxu0
  %v5737 = vpop.f32.mrf.mxu0
  %v5738 = vadd.f32 %v5641, %v5737
  %v5739 = vpop.f32.mrf.mxu0
  %5740 = vmatprep.mubr.bf16.mxu0 %v5045
  %5741 = vmatmul.mubr.bf16.gmra.mxu0 %v5044
  %v5742 = vpop.f32.mrf.mxu0
  %v5743 = vadd.f32 %v5646, %v5742
  %v5744 = vpop.f32.mrf.mxu0
  %v5745 = vpop.f32.mrf.mxu0
  %v5746 = vadd.f32 %v5649, %v5745
  %v5747 = vpop.f32.mrf.mxu0
  %5748 = vdwg.mxu0
  %5749 = vmatprep.subr.bf16.mxu0 0
  %5750 = vmatpush1.bf16.msra.mxu0 %v5450
  %5751 = vmatprep.subr.bf16.mxu0 0
  %5752 = vmatpush1.bf16.msra.mxu0 %v5449
  %5753 = vmatprep.subr.bf16.mxu0 0
  %5754 = vmatpush1.bf16.msra.mxu0 %v5448
  %5755 = vmatprep.subr.bf16.mxu0 0
  %5756 = vmatpush1.bf16.msra.mxu0 %v5447
  %5757 = vmatprep.subr.bf16.mxu0 0
  %5758 = vmatpush1.bf16.msra.mxu0 %v5446
  %5759 = vmatprep.subr.bf16.mxu0 0
  %5760 = vmatpush1.bf16.msra.mxu0 %v5445
  %5761 = vmatprep.subr.bf16.mxu0 0
  %5762 = vmatpush1.bf16.msra.mxu0 %v5444
  %5763 = vmatprep.subr.bf16.mxu0 0
  %5764 = vmatpush1.bf16.msra.mxu0 %v5443
  %5765 = vmatprep.subr.bf16.mxu0 0
  %5766 = vmatpush2.bf16.msra.mxu0 %v5458
  %5767 = vmatprep.subr.bf16.mxu0 0
  %5768 = vmatpush2.bf16.msra.mxu0 %v5457
  %5769 = vmatprep.subr.bf16.mxu0 0
  %5770 = vmatpush2.bf16.msra.mxu0 %v5456
  %5771 = vmatprep.subr.bf16.mxu0 0
  %5772 = vmatpush2.bf16.msra.mxu0 %v5455
  %5773 = vmatprep.subr.bf16.mxu0 0
  %5774 = vmatpush2.bf16.msra.mxu0 %v5454
  %5775 = vmatprep.subr.bf16.mxu0 0
  %5776 = vmatpush2.bf16.msra.mxu0 %v5453
  %5777 = vmatprep.subr.bf16.mxu0 0
  %5778 = vmatpush2.bf16.msra.mxu0 %v5452
  %5779 = vmatprep.subr.bf16.mxu0 0
  %5780 = vmatpush2.bf16.msra.mxu0 %v5451
  %5781 = vmatprep.mubr.bf16.mxu0 %v4984
  %5782 = vmatmul.mubr.bf16.gmra.mxu0 %v4983
  %v5783 = vpop.f32.mrf.mxu0
  %v5784 = vadd.f32 %v5687, %v5783
  %v5785 = vpop.f32.mrf.mxu0
  %v5786 = vpop.f32.mrf.mxu0
  %v5787 = vadd.f32 %v5690, %v5786
  %v5788 = vpop.f32.mrf.mxu0
  %5789 = vmatprep.mubr.bf16.mxu0 %v4993
  %5790 = vmatmul.mubr.bf16.gmra.mxu0 %v4992
  %v5791 = vpop.f32.mrf.mxu0
  %v5792 = vadd.f32 %v5695, %v5791
  %v5793 = vpop.f32.mrf.mxu0
  %v5794 = vpop.f32.mrf.mxu0
  %v5795 = vadd.f32 %v5698, %v5794
  %v5796 = vpop.f32.mrf.mxu0
  %5797 = vmatprep.mubr.bf16.mxu0 %v5002
  %5798 = vmatmul.mubr.bf16.gmra.mxu0 %v5001
  %v5799 = vpop.f32.mrf.mxu0
  %v5800 = vadd.f32 %v5703, %v5799
  %v5801 = vpop.f32.mrf.mxu0
  %v5802 = vpop.f32.mrf.mxu0
  %v5803 = vadd.f32 %v5706, %v5802
  %v5804 = vpop.f32.mrf.mxu0
  %5805 = vmatprep.mubr.bf16.mxu0 %v5011
  %5806 = vmatmul.mubr.bf16.gmra.mxu0 %v5010
  %v5807 = vpop.f32.mrf.mxu0
  %v5808 = vadd.f32 %v5711, %v5807
  %v5809 = vpop.f32.mrf.mxu0
  %v5810 = vpop.f32.mrf.mxu0
  %v5811 = vadd.f32 %v5714, %v5810
  %v5812 = vpop.f32.mrf.mxu0
  %5813 = vmatprep.mubr.bf16.mxu0 %v5020
  %5814 = vmatmul.mubr.bf16.gmra.mxu0 %v5019
  %v5815 = vpop.f32.mrf.mxu0
  %v5816 = vadd.f32 %v5719, %v5815
  %v5817 = vpop.f32.mrf.mxu0
  %v5818 = vpop.f32.mrf.mxu0
  %v5819 = vadd.f32 %v5722, %v5818
  %v5820 = vpop.f32.mrf.mxu0
  %5821 = vmatprep.mubr.bf16.mxu0 %v5029
  %5822 = vmatmul.mubr.bf16.gmra.mxu0 %v5028
  %v5823 = vpop.f32.mrf.mxu0
  %v5824 = vadd.f32 %v5727, %v5823
  %v5825 = vpop.f32.mrf.mxu0
  %v5826 = vpop.f32.mrf.mxu0
  %v5827 = vadd.f32 %v5730, %v5826
  %v5828 = vpop.f32.mrf.mxu0
  %5829 = vmatprep.mubr.bf16.mxu0 %v5038
  %5830 = vmatmul.mubr.bf16.gmra.mxu0 %v5037
  %v5831 = vpop.f32.mrf.mxu0
  %v5832 = vadd.f32 %v5735, %v5831
  %v5833 = vpop.f32.mrf.mxu0
  %v5834 = vpop.f32.mrf.mxu0
  %v5835 = vadd.f32 %v5738, %v5834
  %v5836 = vpop.f32.mrf.mxu0
  %5837 = vmatprep.mubr.bf16.mxu0 %v5047
  %5838 = vmatmul.mubr.bf16.gmra.mxu0 %v5046
  %v5839 = vpop.f32.mrf.mxu0
  %v5840 = vadd.f32 %v5743, %v5839
  %v5841 = vpop.f32.mrf.mxu0
  %v5842 = vpop.f32.mrf.mxu0
  %v5843 = vadd.f32 %v5746, %v5842
  %v5844 = vpop.f32.mrf.mxu0
  %5845 = vdwg.mxu0
  %5846 = vmatprep.subr.bf16.mxu0 0
  %5847 = vmatpush1.bf16.msra.mxu0 %v5466
  %5848 = vmatprep.subr.bf16.mxu0 0
  %5849 = vmatpush1.bf16.msra.mxu0 %v5465
  %5850 = vmatprep.subr.bf16.mxu0 0
  %5851 = vmatpush1.bf16.msra.mxu0 %v5464
  %5852 = vmatprep.subr.bf16.mxu0 0
  %5853 = vmatpush1.bf16.msra.mxu0 %v5463
  %5854 = vmatprep.subr.bf16.mxu0 0
  %5855 = vmatpush1.bf16.msra.mxu0 %v5462
  %5856 = vmatprep.subr.bf16.mxu0 0
  %5857 = vmatpush1.bf16.msra.mxu0 %v5461
  %5858 = vmatprep.subr.bf16.mxu0 0
  %5859 = vmatpush1.bf16.msra.mxu0 %v5460
  %5860 = vmatprep.subr.bf16.mxu0 0
  %5861 = vmatpush1.bf16.msra.mxu0 %v5459
  %5862 = vmatprep.subr.bf16.mxu0 0
  %5863 = vmatpush2.bf16.msra.mxu0 %v5474
  %5864 = vmatprep.subr.bf16.mxu0 0
  %5865 = vmatpush2.bf16.msra.mxu0 %v5473
  %5866 = vmatprep.subr.bf16.mxu0 0
  %5867 = vmatpush2.bf16.msra.mxu0 %v5472
  %5868 = vmatprep.subr.bf16.mxu0 0
  %5869 = vmatpush2.bf16.msra.mxu0 %v5471
  %5870 = vmatprep.subr.bf16.mxu0 0
  %5871 = vmatpush2.bf16.msra.mxu0 %v5470
  %5872 = vmatprep.subr.bf16.mxu0 0
  %5873 = vmatpush2.bf16.msra.mxu0 %v5469
  %5874 = vmatprep.subr.bf16.mxu0 0
  %5875 = vmatpush2.bf16.msra.mxu0 %v5468
  %5876 = vmatprep.subr.bf16.mxu0 0
  %5877 = vmatpush2.bf16.msra.mxu0 %v5467
  %5878 = vmatprep.mubr.bf16.mxu0 %v4986
  %5879 = vmatmul.mubr.bf16.gmra.mxu0 %v4985
  %v5880 = vpop.f32.mrf.mxu0
  %v5881 = vadd.f32 %v5784, %v5880
  %v5882 = vpop.f32.mrf.mxu0
  %v5883 = vpop.f32.mrf.mxu0
  %v5884 = vadd.f32 %v5787, %v5883
  %v5885 = vpop.f32.mrf.mxu0
  %5886 = vmatprep.mubr.bf16.mxu0 %v4995
  %5887 = vmatmul.mubr.bf16.gmra.mxu0 %v4994
  %v5888 = vpop.f32.mrf.mxu0
  %v5889 = vadd.f32 %v5792, %v5888
  %v5890 = vpop.f32.mrf.mxu0
  %v5891 = vpop.f32.mrf.mxu0
  %v5892 = vadd.f32 %v5795, %v5891
  %v5893 = vpop.f32.mrf.mxu0
  %5894 = vmatprep.mubr.bf16.mxu0 %v5004
  %5895 = vmatmul.mubr.bf16.gmra.mxu0 %v5003
  %v5896 = vpop.f32.mrf.mxu0
  %v5897 = vadd.f32 %v5800, %v5896
  %v5898 = vpop.f32.mrf.mxu0
  %v5899 = vpop.f32.mrf.mxu0
  %v5900 = vadd.f32 %v5803, %v5899
  %v5901 = vpop.f32.mrf.mxu0
  %5902 = vmatprep.mubr.bf16.mxu0 %v5013
  %5903 = vmatmul.mubr.bf16.gmra.mxu0 %v5012
  %v5904 = vpop.f32.mrf.mxu0
  %v5905 = vadd.f32 %v5808, %v5904
  %v5906 = vpop.f32.mrf.mxu0
  %v5907 = vpop.f32.mrf.mxu0
  %v5908 = vadd.f32 %v5811, %v5907
  %v5909 = vpop.f32.mrf.mxu0
  %5910 = vmatprep.mubr.bf16.mxu0 %v5022
  %5911 = vmatmul.mubr.bf16.gmra.mxu0 %v5021
  %v5912 = vpop.f32.mrf.mxu0
  %v5913 = vadd.f32 %v5816, %v5912
  %v5914 = vpop.f32.mrf.mxu0
  %v5915 = vpop.f32.mrf.mxu0
  %v5916 = vadd.f32 %v5819, %v5915
  %v5917 = vpop.f32.mrf.mxu0
  %5918 = vmatprep.mubr.bf16.mxu0 %v5031
  %5919 = vmatmul.mubr.bf16.gmra.mxu0 %v5030
  %v5920 = vpop.f32.mrf.mxu0
  %v5921 = vadd.f32 %v5824, %v5920
  %v5922 = vpop.f32.mrf.mxu0
  %v5923 = vpop.f32.mrf.mxu0
  %v5924 = vadd.f32 %v5827, %v5923
  %v5925 = vpop.f32.mrf.mxu0
  %5926 = vmatprep.mubr.bf16.mxu0 %v5040
  %5927 = vmatmul.mubr.bf16.gmra.mxu0 %v5039
  %v5928 = vpop.f32.mrf.mxu0
  %v5929 = vadd.f32 %v5832, %v5928
  %v5930 = vpop.f32.mrf.mxu0
  %v5931 = vpop.f32.mrf.mxu0
  %v5932 = vadd.f32 %v5835, %v5931
  %v5933 = vpop.f32.mrf.mxu0
  %5934 = vmatprep.mubr.bf16.mxu0 %v5049
  %5935 = vmatmul.mubr.bf16.gmra.mxu0 %v5048
  %v5936 = vpop.f32.mrf.mxu0
  %v5937 = vadd.f32 %v5840, %v5936
  %v5938 = vpop.f32.mrf.mxu0
  %v5939 = vpop.f32.mrf.mxu0
  %v5940 = vadd.f32 %v5843, %v5939
  %v5941 = vpop.f32.mrf.mxu0
  %5942 = vdwg.mxu0
  %5943 = vmatprep.subr.bf16.mxu0 0
  %5944 = vmatpush1.bf16.msra.mxu0 %v5482
  %5945 = vmatprep.subr.bf16.mxu0 0
  %5946 = vmatpush1.bf16.msra.mxu0 %v5481
  %5947 = vmatprep.subr.bf16.mxu0 0
  %5948 = vmatpush1.bf16.msra.mxu0 %v5480
  %5949 = vmatprep.subr.bf16.mxu0 0
  %5950 = vmatpush1.bf16.msra.mxu0 %v5479
  %5951 = vmatprep.subr.bf16.mxu0 0
  %5952 = vmatpush1.bf16.msra.mxu0 %v5478
  %5953 = vmatprep.subr.bf16.mxu0 0
  %5954 = vmatpush1.bf16.msra.mxu0 %v5477
  %5955 = vmatprep.subr.bf16.mxu0 0
  %5956 = vmatpush1.bf16.msra.mxu0 %v5476
  %5957 = vmatprep.subr.bf16.mxu0 0
  %5958 = vmatpush1.bf16.msra.mxu0 %v5475
  %5959 = vmatprep.subr.bf16.mxu0 0
  %5960 = vmatpush2.bf16.msra.mxu0 0
  %5961 = vmatprep.subr.bf16.mxu0 0
  %5962 = vmatpush2.bf16.msra.mxu0 0
  %5963 = vmatprep.subr.bf16.mxu0 0
  %5964 = vmatpush2.bf16.msra.mxu0 0
  %5965 = vmatprep.subr.bf16.mxu0 0
  %5966 = vmatpush2.bf16.msra.mxu0 0
  %5967 = vmatprep.subr.bf16.mxu0 0
  %5968 = vmatpush2.bf16.msra.mxu0 0
  %5969 = vmatprep.subr.bf16.mxu0 0
  %5970 = vmatpush2.bf16.msra.mxu0 0
  %5971 = vmatprep.subr.bf16.mxu0 0
  %5972 = vmatpush2.bf16.msra.mxu0 0
  %5973 = vmatprep.subr.bf16.mxu0 0
  %5974 = vmatpush2.bf16.msra.mxu0 0
  %5975 = vmatprep.mubr.bf16.mxu0 0
  %5976 = vmatmul.mubr.bf16.gmra.mxu0 %v4987
  %v5977 = vpop.f32.mrf.mxu0
  %v5978 = vadd.f32 %v5881, %v5977
  %v5979 = vpop.f32.mrf.mxu0
  %v5980 = vpop.f32.mrf.mxu0
  %v5981 = vadd.f32 %v5884, %v5980
  %v5982 = vpop.f32.mrf.mxu0
  %5983 = vmatprep.mubr.bf16.mxu0 0
  %5984 = vmatmul.mubr.bf16.gmra.mxu0 %v4996
  %v5985 = vpop.f32.mrf.mxu0
  %v5986 = vadd.f32 %v5889, %v5985
  %v5987 = vpop.f32.mrf.mxu0
  %v5988 = vpop.f32.mrf.mxu0
  %v5989 = vadd.f32 %v5892, %v5988
  %v5990 = vpop.f32.mrf.mxu0
  %5991 = vmatprep.mubr.bf16.mxu0 0
  %5992 = vmatmul.mubr.bf16.gmra.mxu0 %v5005
  %v5993 = vpop.f32.mrf.mxu0
  %v5994 = vadd.f32 %v5897, %v5993
  %v5995 = vpop.f32.mrf.mxu0
  %v5996 = vpop.f32.mrf.mxu0
  %v5997 = vadd.f32 %v5900, %v5996
  %v5998 = vpop.f32.mrf.mxu0
  %5999 = vmatprep.mubr.bf16.mxu0 0
  %6000 = vmatmul.mubr.bf16.gmra.mxu0 %v5014
  %v6001 = vpop.f32.mrf.mxu0
  %v6002 = vadd.f32 %v5905, %v6001
  %v6003 = vpop.f32.mrf.mxu0
  %v6004 = vpop.f32.mrf.mxu0
  %v6005 = vadd.f32 %v5908, %v6004
  %v6006 = vpop.f32.mrf.mxu0
  %6007 = vmatprep.mubr.bf16.mxu0 0
  %6008 = vmatmul.mubr.bf16.gmra.mxu0 %v5023
  %v6009 = vpop.f32.mrf.mxu0
  %v6010 = vadd.f32 %v5913, %v6009
  %v6011 = vpop.f32.mrf.mxu0
  %v6012 = vpop.f32.mrf.mxu0
  %v6013 = vadd.f32 %v5916, %v6012
  %v6014 = vpop.f32.mrf.mxu0
  %6015 = vmatprep.mubr.bf16.mxu0 0
  %6016 = vmatmul.mubr.bf16.gmra.mxu0 %v5032
  %v6017 = vpop.f32.mrf.mxu0
  %v6018 = vadd.f32 %v5921, %v6017
  %v6019 = vpop.f32.mrf.mxu0
  %v6020 = vpop.f32.mrf.mxu0
  %v6021 = vadd.f32 %v5924, %v6020
  %v6022 = vpop.f32.mrf.mxu0
  %6023 = vmatprep.mubr.bf16.mxu0 0
  %6024 = vmatmul.mubr.bf16.gmra.mxu0 %v5041
  %v6025 = vpop.f32.mrf.mxu0
  %v6026 = vadd.f32 %v5929, %v6025
  %v6027 = vpop.f32.mrf.mxu0
  %v6028 = vpop.f32.mrf.mxu0
  %v6029 = vadd.f32 %v5932, %v6028
  %v6030 = vpop.f32.mrf.mxu0
  %6031 = vmatprep.mubr.bf16.mxu0 0
  %6032 = vmatmul.mubr.bf16.gmra.mxu0 %v5050
  %v6033 = vpop.f32.mrf.mxu0
  %v6034 = vadd.f32 %v5937, %v6033
  %v6035 = vpop.f32.mrf.mxu0
  %v6036 = vpop.f32.mrf.mxu0
  %v6037 = vadd.f32 %v5940, %v6036
  %v6038 = vpop.f32.mrf.mxu0
  %6039 = vdwg.mxu0
  %v6040 = vld [vmem:[%s416] sm:$0xf]
  %v6041 = vld [vmem:[%s416 + $0x8] sm:$0xf]
  %v6042 = vld [vmem:[%s416 + $0x10] sm:$0xf]
  %v6043 = vld [vmem:[%s416 + $0x18] sm:$0xf]
  %v6044 = vld [vmem:[%s416 + $0x20] sm:$0xf]
  %v6045 = vld [vmem:[%s416 + $0x28] sm:$0xf]
  %v6046 = vld [vmem:[%s416 + $0x30] sm:$0xf]
  %v6047 = vld [vmem:[%s416 + $0x38] sm:$0xf]
  %v6048 = vld [vmem:[%s416 + $0x120] sm:$0xf]
  %v6049 = vld [vmem:[%s416 + $0x128] sm:$0xf]
  %v6050 = vld [vmem:[%s416 + $0x130] sm:$0xf]
  %v6051 = vld [vmem:[%s416 + $0x138] sm:$0xf]
  %v6052 = vld [vmem:[%s416 + $0x140] sm:$0xf]
  %v6053 = vld [vmem:[%s416 + $0x148] sm:$0xf]
  %v6054 = vld [vmem:[%s416 + $0x150] sm:$0xf]
  %v6055 = vld [vmem:[%s416 + $0x158] sm:$0xf]
  %v6056 = vld [vmem:[%s5] sm:$0xf]
  %v6057 = vld [vmem:[%s5 + $0x4] sm:$0xf]
  %v6058 = vld [vmem:[%s5 + $0x8] sm:$0xf]
  %v6059 = vld [vmem:[%s5 + $0xc] sm:$0xf]
  %v6060 = vld [vmem:[%s5 + $0x10] sm:$0xf]
  %v6061 = vld [vmem:[%s5 + $0x14] sm:$0xf]
  %v6062 = vld [vmem:[%s5 + $0x18] sm:$0xf]
  %v6063 = vld [vmem:[%s5 + $0x1c] sm:$0xf]
  %v6064 = vld [vmem:[%s5 + $0x20] sm:$0xf]
  %v6065 = vld [vmem:[%s5 + $0x24] sm:$0xf]
  %v6066 = vld [vmem:[%s5 + $0x28] sm:$0xf]
  %v6067 = vld [vmem:[%s5 + $0x2c] sm:$0xf]
  %v6068 = vld [vmem:[%s5 + $0x30] sm:$0xf]
  %v6069 = vld [vmem:[%s5 + $0x34] sm:$0xf]
  %v6070 = vld [vmem:[%s5 + $0x38] sm:$0xf]
  %v6071 = vld [vmem:[%s5 + $0x3c] sm:$0xf]
  %v6072 = vld [vmem:[%s6] sm:$0x1]
  %v6074 = vlaneseq
  %v6075 = vshrl.u32 %v6074, 7
  %v6076 = vsub.s32 0, %v6075
  %v6077 = vrot.slane %v6072, %v6076
  %v6095 = vunpack.c.l.b16 %v6040
  %v6096 = vunpack.c.l.b16 %v6041
  %v6097 = vunpack.c.l.b16 %v6042
  %v6098 = vunpack.c.l.b16 %v6043
  %v6099 = vunpack.c.l.b16 %v6044
  %v6100 = vunpack.c.l.b16 %v6045
  %v6101 = vunpack.c.l.b16 %v6046
  %v6102 = vunpack.c.l.b16 %v6047
  %v6103 = vunpack.c.l.b16 %v6048
  %v6104 = vunpack.c.l.b16 %v6049
  %v6105 = vunpack.c.l.b16 %v6050
  %v6106 = vunpack.c.l.b16 %v6051
  %v6107 = vunpack.c.l.b16 %v6052
  %v6108 = vunpack.c.l.b16 %v6053
  %v6109 = vunpack.c.l.b16 %v6054
  %v6110 = vunpack.c.l.b16 %v6055
  %v6111 = vpack.c.b16 %v6096, %v6095
  %v6112 = vpack.c.b16 %v6098, %v6097
  %v6113 = vpack.c.b16 %v6100, %v6099
  %v6114 = vpack.c.b16 %v6102, %v6101
  %v6115 = vpack.c.b16 %v6104, %v6103
  %v6116 = vpack.c.b16 %v6106, %v6105
  %v6117 = vpack.c.b16 %v6108, %v6107
  %v6118 = vpack.c.b16 %v6110, %v6109
  %v6143 = vunpack.c.l.b16 %v6056
  %v6144 = vunpack.c.l.b16 %v6057
  %v6145 = vunpack.c.l.b16 %v6058
  %v6146 = vunpack.c.l.b16 %v6059
  %v6147 = vunpack.c.l.b16 %v6060
  %v6148 = vunpack.c.l.b16 %v6061
  %v6149 = vunpack.c.l.b16 %v6062
  %v6150 = vunpack.c.l.b16 %v6063
  %v6151 = vunpack.c.l.b16 %v6064
  %v6152 = vunpack.c.l.b16 %v6065
  %v6153 = vunpack.c.l.b16 %v6066
  %v6154 = vunpack.c.l.b16 %v6067
  %v6155 = vunpack.c.l.b16 %v6068
  %v6156 = vunpack.c.l.b16 %v6069
  %v6157 = vunpack.c.l.b16 %v6070
  %v6158 = vunpack.c.l.b16 %v6071
  %v6159 = vpack.c.b16 %v6144, %v6143
  %v6160 = vpack.c.b16 %v6146, %v6145
  %v6161 = vpack.c.b16 %v6148, %v6147
  %v6162 = vpack.c.b16 %v6150, %v6149
  %v6163 = vpack.c.b16 %v6152, %v6151
  %v6164 = vpack.c.b16 %v6154, %v6153
  %v6165 = vpack.c.b16 %v6156, %v6155
  %v6166 = vpack.c.b16 %v6158, %v6157
  %6175 = vmatprep.subr.bf16.mxu0 0
  %6176 = vmatpush1.bf16.msra.mxu0 %v6166
  %6177 = vmatprep.subr.bf16.mxu0 0
  %6178 = vmatpush1.bf16.msra.mxu0 %v6165
  %6179 = vmatprep.subr.bf16.mxu0 0
  %6180 = vmatpush1.bf16.msra.mxu0 %v6164
  %6181 = vmatprep.subr.bf16.mxu0 0
  %6182 = vmatpush1.bf16.msra.mxu0 %v6163
  %6183 = vmatprep.subr.bf16.mxu0 0
  %6184 = vmatpush1.bf16.msra.mxu0 %v6162
  %6185 = vmatprep.subr.bf16.mxu0 0
  %6186 = vmatpush1.bf16.msra.mxu0 %v6161
  %6187 = vmatprep.subr.bf16.mxu0 0
  %6188 = vmatpush1.bf16.msra.mxu0 %v6160
  %6189 = vmatprep.subr.bf16.mxu0 0
  %6190 = vmatpush1.bf16.msra.mxu0 %v6159
  %6191 = vmatprep.subr.bf16.mxu0 0
  %6192 = vmatpush2.bf16.msra.mxu0 0
  %6193 = vmatprep.subr.bf16.mxu0 0
  %6194 = vmatpush2.bf16.msra.mxu0 0
  %6195 = vmatprep.subr.bf16.mxu0 0
  %6196 = vmatpush2.bf16.msra.mxu0 0
  %6197 = vmatprep.subr.bf16.mxu0 0
  %6198 = vmatpush2.bf16.msra.mxu0 0
  %6199 = vmatprep.subr.bf16.mxu0 0
  %6200 = vmatpush2.bf16.msra.mxu0 0
  %6201 = vmatprep.subr.bf16.mxu0 0
  %6202 = vmatpush2.bf16.msra.mxu0 0
  %6203 = vmatprep.subr.bf16.mxu0 0
  %6204 = vmatpush2.bf16.msra.mxu0 0
  %6205 = vmatprep.subr.bf16.mxu0 0
  %6206 = vmatpush2.bf16.msra.mxu0 0
  %6207 = vmatprep.mubr.bf16.mxu0 0
  %6208 = vmatmul.mubr.bf16.gmra.mxu0 %v6111
  %v6209 = vpop.f32.mrf.mxu0
  %v6210 = vadd.f32 %v6077, %v6209
  %v6211 = vpop.f32.mrf.mxu0
  %v6212 = vpop.f32.mrf.mxu0
  %v6213 = vadd.f32 %v6077, %v6212
  %v6214 = vpop.f32.mrf.mxu0
  %6215 = vmatprep.mubr.bf16.mxu0 0
  %6216 = vmatmul.mubr.bf16.gmra.mxu0 %v6112
  %v6217 = vpop.f32.mrf.mxu0
  %v6218 = vadd.f32 %v6077, %v6217
  %v6219 = vpop.f32.mrf.mxu0
  %v6220 = vpop.f32.mrf.mxu0
  %v6221 = vadd.f32 %v6077, %v6220
  %v6222 = vpop.f32.mrf.mxu0
  %6223 = vmatprep.mubr.bf16.mxu0 0
  %6224 = vmatmul.mubr.bf16.gmra.mxu0 %v6113
  %v6225 = vpop.f32.mrf.mxu0
  %v6226 = vadd.f32 %v6077, %v6225
  %v6227 = vpop.f32.mrf.mxu0
  %v6228 = vpop.f32.mrf.mxu0
  %v6229 = vadd.f32 %v6077, %v6228
  %v6230 = vpop.f32.mrf.mxu0
  %6231 = vmatprep.mubr.bf16.mxu0 0
  %6232 = vmatmul.mubr.bf16.gmra.mxu0 %v6114
  %v6233 = vpop.f32.mrf.mxu0
  %v6234 = vadd.f32 %v6077, %v6233
  %v6235 = vpop.f32.mrf.mxu0
  %v6236 = vpop.f32.mrf.mxu0
  %v6237 = vadd.f32 %v6077, %v6236
  %v6238 = vpop.f32.mrf.mxu0
  %6239 = vmatprep.mubr.bf16.mxu0 0
  %6240 = vmatmul.mubr.bf16.gmra.mxu0 %v6115
  %v6241 = vpop.f32.mrf.mxu0
  %v6242 = vadd.f32 %v6077, %v6241
  %v6243 = vpop.f32.mrf.mxu0
  %v6244 = vpop.f32.mrf.mxu0
  %v6245 = vadd.f32 %v6077, %v6244
  %v6246 = vpop.f32.mrf.mxu0
  %6247 = vmatprep.mubr.bf16.mxu0 0
  %6248 = vmatmul.mubr.bf16.gmra.mxu0 %v6116
  %v6249 = vpop.f32.mrf.mxu0
  %v6250 = vadd.f32 %v6077, %v6249
  %v6251 = vpop.f32.mrf.mxu0
  %v6252 = vpop.f32.mrf.mxu0
  %v6253 = vadd.f32 %v6077, %v6252
  %v6254 = vpop.f32.mrf.mxu0
  %6255 = vmatprep.mubr.bf16.mxu0 0
  %6256 = vmatmul.mubr.bf16.gmra.mxu0 %v6117
  %v6257 = vpop.f32.mrf.mxu0
  %v6258 = vadd.f32 %v6077, %v6257
  %v6259 = vpop.f32.mrf.mxu0
  %v6260 = vpop.f32.mrf.mxu0
  %v6261 = vadd.f32 %v6077, %v6260
  %v6262 = vpop.f32.mrf.mxu0
  %6263 = vmatprep.mubr.bf16.mxu0 0
  %6264 = vmatmul.mubr.bf16.gmra.mxu0 %v6118
  %v6265 = vpop.f32.mrf.mxu0
  %v6266 = vadd.f32 %v6077, %v6265
  %v6267 = vpop.f32.mrf.mxu0
  %v6268 = vpop.f32.mrf.mxu0
  %v6269 = vadd.f32 %v6077, %v6268
  %v6270 = vpop.f32.mrf.mxu0
  %6271 = vdwg.mxu0
  %v6272 = vadd.f32 %v5978, %v6210
  %v6273 = vadd.f32 %v5981, %v6213
  %v6274 = vadd.f32 %v5986, %v6218
  %v6275 = vadd.f32 %v5989, %v6221
  %v6276 = vadd.f32 %v5994, %v6226
  %v6277 = vadd.f32 %v5997, %v6229
  %v6278 = vadd.f32 %v6002, %v6234
  %v6279 = vadd.f32 %v6005, %v6237
  %v6280 = vadd.f32 %v6010, %v6242
  %v6281 = vadd.f32 %v6013, %v6245
  %v6282 = vadd.f32 %v6018, %v6250
  %v6283 = vadd.f32 %v6021, %v6253
  %v6284 = vadd.f32 %v6026, %v6258
  %v6285 = vadd.f32 %v6029, %v6261
  %v6286 = vadd.f32 %v6034, %v6266
  %v6287 = vadd.f32 %v6037, %v6269
  %v6288 = vmax.f32 %v6272, 0.0
  %v6289 = vmax.f32 %v6273, 0.0
  %v6290 = vmax.f32 %v6274, 0.0
  %v6291 = vmax.f32 %v6275, 0.0
  %v6292 = vmax.f32 %v6276, 0.0
  %v6293 = vmax.f32 %v6277, 0.0
  %v6294 = vmax.f32 %v6278, 0.0
  %v6295 = vmax.f32 %v6279, 0.0
  %v6296 = vmax.f32 %v6280, 0.0
  %v6297 = vmax.f32 %v6281, 0.0
  %v6298 = vmax.f32 %v6282, 0.0
  %v6299 = vmax.f32 %v6283, 0.0
  %v6300 = vmax.f32 %v6284, 0.0
  %v6301 = vmax.f32 %v6285, 0.0
  %v6302 = vmax.f32 %v6286, 0.0
  %v6303 = vmax.f32 %v6287, 0.0
  %6304 = vst [vmem:[%s7] sm:$0xff] %v6288
  %6305 = vst [vmem:[%s7 + $0x8] sm:$0xff] %v6289
  %6306 = vst [vmem:[%s7 + $0x10] sm:$0xff] %v6290
  %6307 = vst [vmem:[%s7 + $0x18] sm:$0xff] %v6291
  %6308 = vst [vmem:[%s7 + $0x20] sm:$0xff] %v6292
  %6309 = vst [vmem:[%s7 + $0x28] sm:$0xff] %v6293
  %6310 = vst [vmem:[%s7 + $0x30] sm:$0xff] %v6294
  %6311 = vst [vmem:[%s7 + $0x38] sm:$0xff] %v6295
  %6312 = vst [vmem:[%s7 + $0x40] sm:$0xff] %v6296
  %6313 = vst [vmem:[%s7 + $0x48] sm:$0xff] %v6297
  %6314 = vst [vmem:[%s7 + $0x50] sm:$0xff] %v6298
  %6315 = vst [vmem:[%s7 + $0x58] sm:$0xff] %v6299
  %6316 = vst [vmem:[%s7 + $0x60] sm:$0xff] %v6300
  %6317 = vst [vmem:[%s7 + $0x68] sm:$0xff] %v6301
  %6318 = vst [vmem:[%s7 + $0x70] sm:$0xff] %v6302
  %6319 = vst [vmem:[%s7 + $0x78] sm:$0xff] %v6303
  // Predicated region
  $region30: #{basic_block_forward.1} parent=0 // pred_check
    _
  $region31: #{basic_block_forward.1} parent=0 // pred_check_branch
    %6321 = sbr.rel (0) target = $region33
  $region32: #{basic_block_forward.1} parent=0 // pred_region
    _
  $region33: #{basic_block_forward.1} parent=0 // pred_fallthru
    _
  // Predicated region
  $region34: #{basic_block_forward.1} parent=0 // pred_check
    _
  $region35: #{basic_block_forward.1} parent=0 // pred_check_branch
    %6323 = sbr.rel (0) target = $region37
  $region36: #{basic_block_forward.1} parent=0 // pred_region
    _
  $region37: #{basic_block_forward.1} parent=0 // pred_fallthru
    _

</llo_original>
